<compile_context>
chip_gen: v7x
topology: tpu7x:2x2x1
jax: 0.10.0
libtpu: 0.0.40
codegen_flags: <defaults>
</compile_context>

<pallas_src>
import functools

import numpy as np
import jax
import jax.numpy as jnp
from jax.experimental import pallas as pl
from jax.experimental.pallas import tpu as pltpu

kReluCoef = 0.1


def get_padding(kernel_size, dilation=1):
    return int((kernel_size * dilation - dilation) / 2)


def _ceil_to(x, m):
    return ((x + m - 1) // m) * m


# ------------------------------ Pallas kernel ------------------------------ #
def _fused_period_disc_kernel(*refs, n_layers, q_mins, pad, h_base, lane_blk):
    """All conv layers fused in one program.  Activation layout (per lane block):
    rows = stride-folded channels, cols = (j, lane) flattened (lane minor, j major);
    each layer = sum over taps q of W_q @ (j-shifted slice), accumulated in f32."""
    x_ref = refs[0]
    w_refs = refs[1:1 + n_layers]
    b_refs = refs[1 + n_layers:1 + 2 * n_layers]
    o_refs = refs[1 + 2 * n_layers:1 + 3 * n_layers]
    act_a = refs[1 + 3 * n_layers]
    act_b = refs[2 + 3 * n_layers]

    # Zero both ping-pong buffers: the j-halo columns must read as the conv's zero
    # padding, and rows never overwritten stay finite (they hit zero weight columns).
    act_a[...] = jnp.zeros_like(act_a)
    act_b[...] = jnp.zeros_like(act_b)

    n_cols = h_base * lane_blk
    c0 = pad * lane_blk                       # first valid flattened column
    src = x_ref                               # layer 0 reads the (pre-folded) input block
    bufs = (act_a, act_b)
    for i in range(n_layers):
        n_taps, rows_out, rows_in = w_refs[i].shape
        acc = None
        for t in range(n_taps):
            q = q_mins[i] + t
            start = (pad + q) * lane_blk      # static, multiple of lane_blk (>=128)
            a_sl = src[0:rows_in, start:start + n_cols]                 # bf16
            part = jnp.dot(w_refs[i][t], a_sl, preferred_element_type=jnp.float32)
            acc = part if acc is None else acc + part
        y = acc + b_refs[i][...]              # (rows_out, 1) bias, VPU broadcast-add
        if i < n_layers - 1:                  # post conv has no LeakyReLU
            y = jnp.where(y >= 0.0, y, kReluCoef * y)
        o_refs[i][...] = y.astype(o_refs[i].dtype)                      # lane-dense store
        if i < n_layers - 1:
            dst = bufs[i % 2]
            dst[0:rows_out, c0:c0 + n_cols] = y.astype(dst.dtype)       # bf16 scratch
            src = dst


# --------------------------------- JAX glue -------------------------------- #
def _fold_conv(w, b, stride, padding, r_in):
    """Re-express a (K,1)-kernel Conv2d (stride/zero-pad along H) as a stride-1 conv over
    the stride-folded domain: per tap q a dense (Cout*Rout, Cin*Rin) matrix.  Weight size
    is O(Cout*Cin*K*R) — independent of the audio length.  Trace-time layout glue."""
    cout, cin, K = w.shape
    r_out = r_in // stride
    q_min = (-padding) // r_in
    q_max = ((r_out - 1) * stride + K - 1 - padding) // r_in
    qs = np.arange(q_min, q_max + 1)
    ra = np.arange(r_out)
    rb = np.arange(r_in)
    ks = np.arange(K)
    # k needed for (tap q, out-phase a, in-phase b); outside [0,K) -> zero weight.
    k_need = (r_in * qs[:, None, None] + rb[None, None, :]
              - stride * ra[None, :, None] + padding)
    sel = (k_need[..., None] == ks).astype(np.float32)        # (q, r_out, r_in, K)
    wf = jnp.einsum("oik,qabk->qoaib", w, jnp.asarray(sel))
    wf = wf.reshape(len(qs), cout * r_out, cin * r_in)

    rows_in_pad = _ceil_to(cin * r_in, 16)                    # bf16 sublane packing
    rows_out_pad = _ceil_to(cout * r_out, 8)
    wf = jnp.pad(wf, ((0, 0), (0, rows_out_pad - cout * r_out),
                      (0, rows_in_pad - cin * r_in)))
    bf = jnp.pad(jnp.repeat(b, r_out), (0, rows_out_pad - cout * r_out))
    bf = bf.reshape(rows_out_pad, 1).astype(jnp.float32)
    return wf.astype(jnp.bfloat16), bf, q_min, q_max, r_out


def _vmem_limit_bytes():
    # Leave headroom below physical per-core VMEM (64 MiB on v7x, 128 MiB on v5e/v6e).
    try:
        cap = int(pltpu.get_tpu_info().vmem_capacity_bytes)
        if cap >= 32 * 1024 * 1024:
            return cap * 3 // 4
    except Exception:
        pass
    return 32 * 1024 * 1024


def period_discriminator_forward(x, period, params, cfgs, states, lane_blk=256):
    """Mirrors PeriodDiscriminator.forward(x, states).
    params[i] = (w, b), w: (Cout, Cin, K) (width-1 kernel dim squeezed);
    cfgs[i] = (stride, padding) along the t//period axis."""
    bs, c, t = x.shape
    if t % period != 0:
        padn = period - (t % period)
        x = jnp.pad(x, ((0, 0), (0, 0), (0, padn)), mode="reflect")
        t = t + padn
    h0, w0 = t // period, period

    strides = [s for (s, _) in cfgs]
    s_prod = int(np.prod(strides))
    if h0 % s_prod != 0:
        # TODO(synk): general t//period needs per-layer tail masking of the folded
        # activations; not required for the configs exercised here.
        raise NotImplementedError("t // period must be divisible by the stride product")
    hb = h0 // s_prod

    # Trace-time: fold each layer's weight_norm'd conv into stride-1 tap matrices.
    wfs, bfs, q_mins, metas = [], [], [], []
    r = s_prod
    pad_j = 0
    for (w, b), (s, p) in zip(params, cfgs):
        wf, bf, q_min, q_max, r_out = _fold_conv(w, b, s, p, r)
        wfs.append(wf); bfs.append(bf); q_mins.append(q_min)
        metas.append((w.shape[0], r_out))
        pad_j = max(pad_j, -q_min, q_max)
        r = r_out
    n_layers = len(params)
    rows0_pad = wfs[0].shape[2]
    j_tot = hb + 2 * pad_j

    # Trace-time layout plumbing: fold input by the stride product, pad, block the lanes.
    lanes = bs * w0
    nb = max(1, (lanes + lane_blk - 1) // lane_blk)
    lanes_pad = nb * lane_blk
    a0 = jnp.transpose(x.reshape(bs, c, h0, w0), (1, 2, 0, 3)).reshape(c, h0, lanes)
    if lanes_pad != lanes:
        a0 = jnp.pad(a0, ((0, 0), (0, 0), (0, lanes_pad - lanes)))
    a0 = a0.reshape(c, hb, s_prod, lanes_pad).transpose(0, 2, 1, 3)
    a0 = a0.reshape(c * s_prod, hb, lanes_pad)
    a0 = jnp.pad(a0, ((0, rows0_pad - c * s_prod), (pad_j, pad_j), (0, 0)))
    a0 = (a0.reshape(rows0_pad, j_tot, nb, lane_blk).transpose(2, 0, 1, 3)
             .reshape(nb, rows0_pad, j_tot * lane_blk).astype(jnp.bfloat16))

    rows_out = [wf.shape[1] for wf in wfs]
    n_cols = hb * lane_blk
    max_rows = _ceil_to(max(max(wf.shape[1], wf.shape[2]) for wf in wfs), 8)

    flops = int(2 * sum(wf.shape[0] * wf.shape[1] * wf.shape[2] for wf in wfs)
                * hb * lanes_pad)
    bytes_accessed = int(a0.size * 2 + sum(wf.size * 2 for wf in wfs)
                         + sum(bf.size * 4 for bf in bfs)
                         + nb * sum(ro * n_cols * 4 for ro in rows_out))

    kernel = functools.partial(
        _fused_period_disc_kernel, n_layers=n_layers, q_mins=tuple(q_mins),
        pad=pad_j, h_base=hb, lane_blk=lane_blk)

    outs = pl.pallas_call(
        kernel,
        out_shape=tuple(jax.ShapeDtypeStruct((nb, ro, n_cols), jnp.float32)
                        for ro in rows_out),
        grid=(nb,),
        in_specs=([pl.BlockSpec((None, rows0_pad, j_tot * lane_blk),
                                lambda li: (li, 0, 0))]
                  + [pl.BlockSpec(memory_space=pltpu.MemorySpace.VMEM)] * (2 * n_layers)),
        out_specs=tuple(pl.BlockSpec((None, ro, n_cols), lambda li: (li, 0, 0))
                        for ro in rows_out),
        scratch_shapes=[pltpu.VMEM((max_rows, j_tot * lane_blk), jnp.bfloat16),
                        pltpu.VMEM((max_rows, j_tot * lane_blk), jnp.bfloat16)],
        compiler_params=pltpu.CompilerParams(
            dimension_semantics=("parallel",),
            vmem_limit_bytes=_vmem_limit_bytes()),
        cost_estimate=pl.CostEstimate(flops=flops, transcendentals=0,
                                      bytes_accessed=bytes_accessed),
        # TODO(synk): at production audio lengths add a second ("parallel") grid axis over
        # j-tiles (halo = pad_j) to bound VMEM; for small MPD periods (2,3,5,7,11) pack
        # several sequences into the lane axis so it stays >=256 dense.
    )(a0, *wfs, *bfs)

    tmp = []
    for o, (cout, r_out) in zip(outs, metas):
        h_true = hb * r_out
        y = o[:, :cout * r_out, :].reshape(nb, cout, r_out, hb, lane_blk)
        y = y.transpose(1, 3, 2, 0, 4).reshape(cout, h_true, lanes_pad)[:, :, :lanes]
        y = y.reshape(cout, h_true, bs, w0).transpose(2, 0, 1, 3)       # (N, C, H, W)
        tmp.append(y)
    states.append(tmp)
    return tmp[-1]


# --------------------------- pure-JAX reference ----------------------------- #
def _ref_forward(x, period, params, cfgs, states):
    """Reference mirroring PeriodDiscriminator.forward under the same bf16-input /
    f32-accumulate precision policy used by the kernel."""
    bs, c, t = x.shape
    if t % period != 0:
        pad = period - (t % period)
        x = jnp.pad(x, ((0, 0), (0, 0), (0, pad)), mode="reflect")
        t = t + pad
    a = x.reshape(bs, c, t // period, period)
    tmp = []
    n = len(params)
    for i, ((w, b), (s, p)) in enumerate(zip(params, cfgs)):
        aq = a.astype(jnp.bfloat16).astype(jnp.float32)
        wq = w.astype(jnp.bfloat16).astype(jnp.float32)[:, :, :, None]   # (O, I, K, 1)
        y = jax.lax.conv_general_dilated(
            aq, wq, window_strides=(s, 1), padding=[(p, p), (0, 0)],
            dimension_numbers=("NCHW", "OIHW", "NCHW"),
        ) + b[None, :, None, None]
        if i < n - 1:
            y = jnp.where(y >= 0.0, y, kReluCoef * y)
        tmp.append(y)
        a = y
    states.append(tmp)
    return tmp[-1]


# ------------------------------ module "init" ------------------------------- #
def build_layer_configs(channels, kernel_size, stride):
    """(stride, padding) per conv, exactly as PeriodDiscriminator.__init__ builds them."""
    cfgs = [(stride, get_padding(kernel_size, 1)) for _ in range(len(channels) - 1)]
    cfgs.append((1, 2))   # extra conv: stride 1, hard-coded padding (2, 0)
    cfgs.append((1, 1))   # post: kernel (3, 1), stride 1, padding (1, 0)
    return cfgs


def init_params(key, channels, kernel_size):
    """weight_norm'd Conv2d params (width-1 kernel dim squeezed): w = g * v / ||v||."""
    shapes = [(channels[i + 1], channels[i], kernel_size) for i in range(len(channels) - 1)]
    shapes.append((channels[-1], channels[-2], kernel_size))   # extra conv
    shapes.append((1, channels[-1], 3))                        # post conv
    params = []
    for (cout, cin, k) in shapes:
        key, kv, kg, kb = jax.random.split(key, 4)
        v = jax.random.normal(kv, (cout, cin, k), jnp.float32)
        g = jax.random.uniform(kg, (cout, 1, 1), jnp.float32, minval=0.5, maxval=1.5)
        w = g * v / jnp.sqrt(jnp.sum(v * v, axis=(1, 2), keepdims=True) + 1e-12)
        b = jax.random.normal(kb, (cout,), jnp.float32) * 0.05
        params.append((w, b))
    return params


# ----------------------------------- main ----------------------------------- #
if __name__ == "__main__":
    period = 128
    kernel_size = 5
    stride = 2
    channels = [1, 4, 8, 8]   # module wiring requires channels[-2] == channels[-1]
    bs, c, t = 4, 1, 4096     # t % period == 0, (t//period) % prod(strides) == 0
    # lanes = bs*period = 512 -> lane grid of 2 blocks of 256 (>=256-wide MXU N per step)

    key = jax.random.PRNGKey(0)
    kx, kp = jax.random.split(key)
    x = jax.random.normal(kx, (bs, c, t), jnp.float32)
    params = init_params(kp, channels, kernel_size)
    cfgs = build_layer_configs(channels, kernel_size, stride)

    states = []
    y = period_discriminator_forward(x, period, params, cfgs, states)
    y = jax.block_until_ready(y)

    states_ref = []
    y_ref = _ref_forward(x, period, params, cfgs, states_ref)

    # Both chains round intermediate activations to bf16 independently; 1e-2 covers the
    # occasional single-ulp bf16 flip propagated through the remaining layers.
    atol = rtol = 1e-2
    ok = (y.shape == y_ref.shape) and bool(jnp.allclose(y, y_ref, atol=atol, rtol=rtol))
    ok = ok and (len(states[0]) == len(states_ref[0]))
    for a_k, a_r in zip(states[0], states_ref[0]):
        ok = ok and (a_k.shape == a_r.shape)
        ok = ok and bool(jnp.allclose(a_k, a_r, atol=atol, rtol=rtol))

    print("KERNEL_OK" if ok else "MISMATCH")
</pallas_src>

<mosaic_0001>
module attributes {stable_mosaic.version = 11 : i64} {
  func.func @_fused_period_disc_kernel(%arg0: i32, %arg1: memref<1x16x2048xbf16, #tpu.memory_space<vmem>>, %arg2: memref<3x16x16xbf16, #tpu.memory_space<vmem>>, %arg3: memref<3x16x16xbf16, #tpu.memory_space<vmem>>, %arg4: memref<3x8x16xbf16, #tpu.memory_space<vmem>>, %arg5: memref<5x8x16xbf16, #tpu.memory_space<vmem>>, %arg6: memref<3x8x16xbf16, #tpu.memory_space<vmem>>, %arg7: memref<16x1xf32, #tpu.memory_space<vmem>>, %arg8: memref<16x1xf32, #tpu.memory_space<vmem>>, %arg9: memref<8x1xf32, #tpu.memory_space<vmem>>, %arg10: memref<8x1xf32, #tpu.memory_space<vmem>>, %arg11: memref<8x1xf32, #tpu.memory_space<vmem>>, %arg12: memref<1x16x1024xf32, #tpu.memory_space<vmem>>, %arg13: memref<1x16x1024xf32, #tpu.memory_space<vmem>>, %arg14: memref<1x8x1024xf32, #tpu.memory_space<vmem>>, %arg15: memref<1x8x1024xf32, #tpu.memory_space<vmem>>, %arg16: memref<1x8x1024xf32, #tpu.memory_space<vmem>>, %arg17: memref<16x2048xbf16, #tpu.memory_space<vmem>>, %arg18: memref<16x2048xbf16, #tpu.memory_space<vmem>>) attributes {dimension_semantics = [#tpu.dimension_semantics<parallel>], iteration_bounds = array<i64: 2>, scalar_prefetch = 0 : i64, scratch_operands = 2 : i64, tpu.core_type = #tpu.core_type<tc>, window_params = [{transform_indices = @transform_0, window_bounds = array<i64: 1, 16, 2048>}, {pipeline_mode = #tpu.pipeline_mode<synchronous>, transform_indices = @transform_1, window_bounds = array<i64: 3, 16, 16>}, {pipeline_mode = #tpu.pipeline_mode<synchronous>, transform_indices = @transform_2, window_bounds = array<i64: 3, 16, 16>}, {pipeline_mode = #tpu.pipeline_mode<synchronous>, transform_indices = @transform_3, window_bounds = array<i64: 3, 8, 16>}, {pipeline_mode = #tpu.pipeline_mode<synchronous>, transform_indices = @transform_4, window_bounds = array<i64: 5, 8, 16>}, {pipeline_mode = #tpu.pipeline_mode<synchronous>, transform_indices = @transform_5, window_bounds = array<i64: 3, 8, 16>}, {pipeline_mode = #tpu.pipeline_mode<synchronous>, transform_indices = @transform_6, window_bounds = array<i64: 16, 1>}, {pipeline_mode = #tpu.pipeline_mode<synchronous>, transform_indices = @transform_7, window_bounds = array<i64: 16, 1>}, {pipeline_mode = #tpu.pipeline_mode<synchronous>, transform_indices = @transform_8, window_bounds = array<i64: 8, 1>}, {pipeline_mode = #tpu.pipeline_mode<synchronous>, transform_indices = @transform_9, window_bounds = array<i64: 8, 1>}, {pipeline_mode = #tpu.pipeline_mode<synchronous>, transform_indices = @transform_10, window_bounds = array<i64: 8, 1>}, {transform_indices = @transform_11, window_bounds = array<i64: 1, 16, 1024>}, {transform_indices = @transform_12, window_bounds = array<i64: 1, 16, 1024>}, {transform_indices = @transform_13, window_bounds = array<i64: 1, 8, 1024>}, {transform_indices = @transform_14, window_bounds = array<i64: 1, 8, 1024>}, {transform_indices = @transform_15, window_bounds = array<i64: 1, 8, 1024>}]} {
    %cst = arith.constant 0.000000e+00 : bf16
    %0 = vector.broadcast %cst : bf16 to vector<16x2048xbf16>
    %c0 = arith.constant 0 : index
    %c0_0 = arith.constant 0 : index
    %1 = vector.load %arg17[%c0, %c0_0] : memref<16x2048xbf16, #tpu.memory_space<vmem>>, vector<16x2048xbf16>
    tpu.vector_store %arg17[%c0, %c0_0], %0 {strides = array<i32>} : memref<16x2048xbf16, #tpu.memory_space<vmem>>, vector<16x2048xbf16>,
    %cst_1 = arith.constant 0.000000e+00 : bf16
    %2 = vector.broadcast %cst_1 : bf16 to vector<16x2048xbf16>
    %c0_2 = arith.constant 0 : index
    %c0_3 = arith.constant 0 : index
    %3 = vector.load %arg18[%c0_2, %c0_3] : memref<16x2048xbf16, #tpu.memory_space<vmem>>, vector<16x2048xbf16>
    tpu.vector_store %arg18[%c0_2, %c0_3], %2 {strides = array<i32>} : memref<16x2048xbf16, #tpu.memory_space<vmem>>, vector<16x2048xbf16>,
    %c0_4 = arith.constant 0 : index
    %c0_5 = arith.constant 0 : index
    %c256 = arith.constant 256 : index
    %4 = vector.load %arg1[%c0_4, %c0_5, %c256] : memref<1x16x2048xbf16, #tpu.memory_space<vmem>>, vector<1x16x1024xbf16>
    %5 = vector.shape_cast %4 : vector<1x16x1024xbf16> to vector<16x1024xbf16>
    %c0_6 = arith.constant 0 : index
    %c0_7 = arith.constant 0 : index
    %c0_8 = arith.constant 0 : index
    %6 = vector.load %arg2[%c0_6, %c0_7, %c0_8] : memref<3x16x16xbf16, #tpu.memory_space<vmem>>, vector<1x16x16xbf16>
    %7 = vector.shape_cast %6 : vector<1x16x16xbf16> to vector<16x16xbf16>
    %cst_9 = arith.constant dense<0.000000e+00> : vector<16x1024xf32>
    %8 = tpu.matmul %7, %5, %cst_9 {dimension_numbers = #tpu.dot_dimension_numbers<[1], [0], [0], [1], [0, 0, 1, 1], [], []>} : vector<16x16xbf16>, vector<16x1024xbf16>, vector<16x1024xf32> -> vector<16x1024xf32>
    %c0_10 = arith.constant 0 : index
    %c0_11 = arith.constant 0 : index
    %c512 = arith.constant 512 : index
    %9 = vector.load %arg1[%c0_10, %c0_11, %c512] : memref<1x16x2048xbf16, #tpu.memory_space<vmem>>, vector<1x16x1024xbf16>
    %10 = vector.shape_cast %9 : vector<1x16x1024xbf16> to vector<16x1024xbf16>
    %c1 = arith.constant 1 : index
    %c0_12 = arith.constant 0 : index
    %c0_13 = arith.constant 0 : index
    %11 = vector.load %arg2[%c1, %c0_12, %c0_13] : memref<3x16x16xbf16, #tpu.memory_space<vmem>>, vector<1x16x16xbf16>
    %12 = vector.shape_cast %11 : vector<1x16x16xbf16> to vector<16x16xbf16>
    %cst_14 = arith.constant dense<0.000000e+00> : vector<16x1024xf32>
    %13 = tpu.matmul %12, %10, %cst_14 {dimension_numbers = #tpu.dot_dimension_numbers<[1], [0], [0], [1], [0, 0, 1, 1], [], []>} : vector<16x16xbf16>, vector<16x1024xbf16>, vector<16x1024xf32> -> vector<16x1024xf32>
    %14 = arith.addf %8, %13 : vector<16x1024xf32>
    %c0_15 = arith.constant 0 : index
    %c0_16 = arith.constant 0 : index
    %c768 = arith.constant 768 : index
    %15 = vector.load %arg1[%c0_15, %c0_16, %c768] : memref<1x16x2048xbf16, #tpu.memory_space<vmem>>, vector<1x16x1024xbf16>
    %16 = vector.shape_cast %15 : vector<1x16x1024xbf16> to vector<16x1024xbf16>
    %c2 = arith.constant 2 : index
    %c0_17 = arith.constant 0 : index
    %c0_18 = arith.constant 0 : index
    %17 = vector.load %arg2[%c2, %c0_17, %c0_18] : memref<3x16x16xbf16, #tpu.memory_space<vmem>>, vector<1x16x16xbf16>
    %18 = vector.shape_cast %17 : vector<1x16x16xbf16> to vector<16x16xbf16>
    %cst_19 = arith.constant dense<0.000000e+00> : vector<16x1024xf32>
    %19 = tpu.matmul %18, %16, %cst_19 {dimension_numbers = #tpu.dot_dimension_numbers<[1], [0], [0], [1], [0, 0, 1, 1], [], []>} : vector<16x16xbf16>, vector<16x1024xbf16>, vector<16x1024xf32> -> vector<16x1024xf32>
    %20 = arith.addf %14, %19 : vector<16x1024xf32>
    %c0_20 = arith.constant 0 : index
    %c0_21 = arith.constant 0 : index
    %21 = vector.load %arg7[%c0_20, %c0_21] : memref<16x1xf32, #tpu.memory_space<vmem>>, vector<16x1xf32>
    %22 = vector.broadcast %21 : vector<16x1xf32> to vector<16x1024xf32>
    %23 = arith.addf %20, %22 : vector<16x1024xf32>
    %cst_22 = arith.constant 0.000000e+00 : f32
    %24 = vector.broadcast %cst_22 : f32 to vector<16x1024xf32>
    %25 = arith.cmpf oge, %23, %24 : vector<16x1024xf32>
    %cst_23 = arith.constant 1.000000e-01 : f32
    %26 = vector.broadcast %cst_23 : f32 to vector<16x1024xf32>
    %27 = arith.mulf %26, %23 : vector<16x1024xf32>
    %28 = arith.select %25, %23, %27 : vector<16x1024xi1>, vector<16x1024xf32>
    %c0_24 = arith.constant 0 : index
    %c0_25 = arith.constant 0 : index
    %c0_26 = arith.constant 0 : index
    %29 = vector.load %arg12[%c0_24, %c0_25, %c0_26] : memref<1x16x1024xf32, #tpu.memory_space<vmem>>, vector<1x16x1024xf32>
    %30 = vector.shape_cast %29 : vector<1x16x1024xf32> to vector<16x1024xf32>
    %31 = vector.shape_cast %28 : vector<16x1024xf32> to vector<1x16x1024xf32>
    tpu.vector_store %arg12[%c0_24, %c0_25, %c0_26], %31 {strides = array<i32>} : memref<1x16x1024xf32, #tpu.memory_space<vmem>>, vector<1x16x1024xf32>,
    %32 = arith.truncf %28 : vector<16x1024xf32> to vector<16x1024xbf16>
    %c0_27 = arith.constant 0 : index
    %c512_28 = arith.constant 512 : index
    %33 = vector.load %arg17[%c0_27, %c512_28] : memref<16x2048xbf16, #tpu.memory_space<vmem>>, vector<16x1024xbf16>
    tpu.vector_store %arg17[%c0_27, %c512_28], %32 {strides = array<i32>} : memref<16x2048xbf16, #tpu.memory_space<vmem>>, vector<16x1024xbf16>,
    %c0_29 = arith.constant 0 : index
    %c256_30 = arith.constant 256 : index
    %34 = vector.load %arg17[%c0_29, %c256_30] : memref<16x2048xbf16, #tpu.memory_space<vmem>>, vector<16x1024xbf16>
    %c0_31 = arith.constant 0 : index
    %c0_32 = arith.constant 0 : index
    %c0_33 = arith.constant 0 : index
    %35 = vector.load %arg3[%c0_31, %c0_32, %c0_33] : memref<3x16x16xbf16, #tpu.memory_space<vmem>>, vector<1x16x16xbf16>
    %36 = vector.shape_cast %35 : vector<1x16x16xbf16> to vector<16x16xbf16>
    %cst_34 = arith.constant dense<0.000000e+00> : vector<16x1024xf32>
    %37 = tpu.matmul %36, %34, %cst_34 {dimension_numbers = #tpu.dot_dimension_numbers<[1], [0], [0], [1], [0, 0, 1, 1], [], []>} : vector<16x16xbf16>, vector<16x1024xbf16>, vector<16x1024xf32> -> vector<16x1024xf32>
    %c0_35 = arith.constant 0 : index
    %c512_36 = arith.constant 512 : index
    %38 = vector.load %arg17[%c0_35, %c512_36] : memref<16x2048xbf16, #tpu.memory_space<vmem>>, vector<16x1024xbf16>
    %c1_37 = arith.constant 1 : index
    %c0_38 = arith.constant 0 : index
    %c0_39 = arith.constant 0 : index
    %39 = vector.load %arg3[%c1_37, %c0_38, %c0_39] : memref<3x16x16xbf16, #tpu.memory_space<vmem>>, vector<1x16x16xbf16>
    %40 = vector.shape_cast %39 : vector<1x16x16xbf16> to vector<16x16xbf16>
    %cst_40 = arith.constant dense<0.000000e+00> : vector<16x1024xf32>
    %41 = tpu.matmul %40, %38, %cst_40 {dimension_numbers = #tpu.dot_dimension_numbers<[1], [0], [0], [1], [0, 0, 1, 1], [], []>} : vector<16x16xbf16>, vector<16x1024xbf16>, vector<16x1024xf32> -> vector<16x1024xf32>
    %42 = arith.addf %37, %41 : vector<16x1024xf32>
    %c0_41 = arith.constant 0 : index
    %c768_42 = arith.constant 768 : index
    %43 = vector.load %arg17[%c0_41, %c768_42] : memref<16x2048xbf16, #tpu.memory_space<vmem>>, vector<16x1024xbf16>
    %c2_43 = arith.constant 2 : index
    %c0_44 = arith.constant 0 : index
    %c0_45 = arith.constant 0 : index
    %44 = vector.load %arg3[%c2_43, %c0_44, %c0_45] : memref<3x16x16xbf16, #tpu.memory_space<vmem>>, vector<1x16x16xbf16>
    %45 = vector.shape_cast %44 : vector<1x16x16xbf16> to vector<16x16xbf16>
    %cst_46 = arith.constant dense<0.000000e+00> : vector<16x1024xf32>
    %46 = tpu.matmul %45, %43, %cst_46 {dimension_numbers = #tpu.dot_dimension_numbers<[1], [0], [0], [1], [0, 0, 1, 1], [], []>} : vector<16x16xbf16>, vector<16x1024xbf16>, vector<16x1024xf32> -> vector<16x1024xf32>
    %47 = arith.addf %42, %46 : vector<16x1024xf32>
    %c0_47 = arith.constant 0 : index
    %c0_48 = arith.constant 0 : index
    %48 = vector.load %arg8[%c0_47, %c0_48] : memref<16x1xf32, #tpu.memory_space<vmem>>, vector<16x1xf32>
    %49 = vector.broadcast %48 : vector<16x1xf32> to vector<16x1024xf32>
    %50 = arith.addf %47, %49 : vector<16x1024xf32>
    %cst_49 = arith.constant 0.000000e+00 : f32
    %51 = vector.broadcast %cst_49 : f32 to vector<16x1024xf32>
    %52 = arith.cmpf oge, %50, %51 : vector<16x1024xf32>
    %cst_50 = arith.constant 1.000000e-01 : f32
    %53 = vector.broadcast %cst_50 : f32 to vector<16x1024xf32>
    %54 = arith.mulf %53, %50 : vector<16x1024xf32>
    %55 = arith.select %52, %50, %54 : vector<16x1024xi1>, vector<16x1024xf32>
    %c0_51 = arith.constant 0 : index
    %c0_52 = arith.constant 0 : index
    %c0_53 = arith.constant 0 : index
    %56 = vector.load %arg13[%c0_51, %c0_52, %c0_53] : memref<1x16x1024xf32, #tpu.memory_space<vmem>>, vector<1x16x1024xf32>
    %57 = vector.shape_cast %56 : vector<1x16x1024xf32> to vector<16x1024xf32>
    %58 = vector.shape_cast %55 : vector<16x1024xf32> to vector<1x16x1024xf32>
    tpu.vector_store %arg13[%c0_51, %c0_52, %c0_53], %58 {strides = array<i32>} : memref<1x16x1024xf32, #tpu.memory_space<vmem>>, vector<1x16x1024xf32>,
    %59 = arith.truncf %55 : vector<16x1024xf32> to vector<16x1024xbf16>
    %c0_54 = arith.constant 0 : index
    %c512_55 = arith.constant 512 : index
    %60 = vector.load %arg18[%c0_54, %c512_55] : memref<16x2048xbf16, #tpu.memory_space<vmem>>, vector<16x1024xbf16>
    tpu.vector_store %arg18[%c0_54, %c512_55], %59 {strides = array<i32>} : memref<16x2048xbf16, #tpu.memory_space<vmem>>, vector<16x1024xbf16>,
    %c0_56 = arith.constant 0 : index
    %c256_57 = arith.constant 256 : index
    %61 = vector.load %arg18[%c0_56, %c256_57] : memref<16x2048xbf16, #tpu.memory_space<vmem>>, vector<16x1024xbf16>
    %c0_58 = arith.constant 0 : index
    %c0_59 = arith.constant 0 : index
    %c0_60 = arith.constant 0 : index
    %62 = vector.load %arg4[%c0_58, %c0_59, %c0_60] : memref<3x8x16xbf16, #tpu.memory_space<vmem>>, vector<1x8x16xbf16>
    %63 = vector.shape_cast %62 : vector<1x8x16xbf16> to vector<8x16xbf16>
    %cst_61 = arith.constant dense<0.000000e+00> : vector<8x1024xf32>
    %64 = tpu.matmul %63, %61, %cst_61 {dimension_numbers = #tpu.dot_dimension_numbers<[1], [0], [0], [1], [0, 0, 1, 1], [], []>} : vector<8x16xbf16>, vector<16x1024xbf16>, vector<8x1024xf32> -> vector<8x1024xf32>
    %c0_62 = arith.constant 0 : index
    %c512_63 = arith.constant 512 : index
    %65 = vector.load %arg18[%c0_62, %c512_63] : memref<16x2048xbf16, #tpu.memory_space<vmem>>, vector<16x1024xbf16>
    %c1_64 = arith.constant 1 : index
    %c0_65 = arith.constant 0 : index
    %c0_66 = arith.constant 0 : index
    %66 = vector.load %arg4[%c1_64, %c0_65, %c0_66] : memref<3x8x16xbf16, #tpu.memory_space<vmem>>, vector<1x8x16xbf16>
    %67 = vector.shape_cast %66 : vector<1x8x16xbf16> to vector<8x16xbf16>
    %cst_67 = arith.constant dense<0.000000e+00> : vector<8x1024xf32>
    %68 = tpu.matmul %67, %65, %cst_67 {dimension_numbers = #tpu.dot_dimension_numbers<[1], [0], [0], [1], [0, 0, 1, 1], [], []>} : vector<8x16xbf16>, vector<16x1024xbf16>, vector<8x1024xf32> -> vector<8x1024xf32>
    %69 = arith.addf %64, %68 : vector<8x1024xf32>
    %c0_68 = arith.constant 0 : index
    %c768_69 = arith.constant 768 : index
    %70 = vector.load %arg18[%c0_68, %c768_69] : memref<16x2048xbf16, #tpu.memory_space<vmem>>, vector<16x1024xbf16>
    %c2_70 = arith.constant 2 : index
    %c0_71 = arith.constant 0 : index
    %c0_72 = arith.constant 0 : index
    %71 = vector.load %arg4[%c2_70, %c0_71, %c0_72] : memref<3x8x16xbf16, #tpu.memory_space<vmem>>, vector<1x8x16xbf16>
    %72 = vector.shape_cast %71 : vector<1x8x16xbf16> to vector<8x16xbf16>
    %cst_73 = arith.constant dense<0.000000e+00> : vector<8x1024xf32>
    %73 = tpu.matmul %72, %70, %cst_73 {dimension_numbers = #tpu.dot_dimension_numbers<[1], [0], [0], [1], [0, 0, 1, 1], [], []>} : vector<8x16xbf16>, vector<16x1024xbf16>, vector<8x1024xf32> -> vector<8x1024xf32>
    %74 = arith.addf %69, %73 : vector<8x1024xf32>
    %c0_74 = arith.constant 0 : index
    %c0_75 = arith.constant 0 : index
    %75 = vector.load %arg9[%c0_74, %c0_75] : memref<8x1xf32, #tpu.memory_space<vmem>>, vector<8x1xf32>
    %76 = vector.broadcast %75 : vector<8x1xf32> to vector<8x1024xf32>
    %77 = arith.addf %74, %76 : vector<8x1024xf32>
    %cst_76 = arith.constant 0.000000e+00 : f32
    %78 = vector.broadcast %cst_76 : f32 to vector<8x1024xf32>
    %79 = arith.cmpf oge, %77, %78 : vector<8x1024xf32>
    %cst_77 = arith.constant 1.000000e-01 : f32
    %80 = vector.broadcast %cst_77 : f32 to vector<8x1024xf32>
    %81 = arith.mulf %80, %77 : vector<8x1024xf32>
    %82 = arith.select %79, %77, %81 : vector<8x1024xi1>, vector<8x1024xf32>
    %c0_78 = arith.constant 0 : index
    %c0_79 = arith.constant 0 : index
    %c0_80 = arith.constant 0 : index
    %83 = vector.load %arg14[%c0_78, %c0_79, %c0_80] : memref<1x8x1024xf32, #tpu.memory_space<vmem>>, vector<1x8x1024xf32>
    %84 = vector.shape_cast %83 : vector<1x8x1024xf32> to vector<8x1024xf32>
    %85 = vector.shape_cast %82 : vector<8x1024xf32> to vector<1x8x1024xf32>
    tpu.vector_store %arg14[%c0_78, %c0_79, %c0_80], %85 {strides = array<i32>} : memref<1x8x1024xf32, #tpu.memory_space<vmem>>, vector<1x8x1024xf32>,
    %86 = arith.truncf %82 : vector<8x1024xf32> to vector<8x1024xbf16>
    %c0_81 = arith.constant 0 : index
    %c512_82 = arith.constant 512 : index
    %87 = vector.load %arg17[%c0_81, %c512_82] : memref<16x2048xbf16, #tpu.memory_space<vmem>>, vector<8x1024xbf16>
    tpu.vector_store %arg17[%c0_81, %c512_82], %86 {strides = array<i32>} : memref<16x2048xbf16, #tpu.memory_space<vmem>>, vector<8x1024xbf16>,
    %c0_83 = arith.constant 0 : index
    %c0_84 = arith.constant 0 : index
    %88 = vector.load %arg17[%c0_83, %c0_84] : memref<16x2048xbf16, #tpu.memory_space<vmem>>, vector<16x1024xbf16>
    %c0_85 = arith.constant 0 : index
    %c0_86 = arith.constant 0 : index
    %c0_87 = arith.constant 0 : index
    %89 = vector.load %arg5[%c0_85, %c0_86, %c0_87] : memref<5x8x16xbf16, #tpu.memory_space<vmem>>, vector<1x8x16xbf16>
    %90 = vector.shape_cast %89 : vector<1x8x16xbf16> to vector<8x16xbf16>
    %cst_88 = arith.constant dense<0.000000e+00> : vector<8x1024xf32>
    %91 = tpu.matmul %90, %88, %cst_88 {dimension_numbers = #tpu.dot_dimension_numbers<[1], [0], [0], [1], [0, 0, 1, 1], [], []>} : vector<8x16xbf16>, vector<16x1024xbf16>, vector<8x1024xf32> -> vector<8x1024xf32>
    %c0_89 = arith.constant 0 : index
    %c256_90 = arith.constant 256 : index
    %92 = vector.load %arg17[%c0_89, %c256_90] : memref<16x2048xbf16, #tpu.memory_space<vmem>>, vector<16x1024xbf16>
    %c1_91 = arith.constant 1 : index
    %c0_92 = arith.constant 0 : index
    %c0_93 = arith.constant 0 : index
    %93 = vector.load %arg5[%c1_91, %c0_92, %c0_93] : memref<5x8x16xbf16, #tpu.memory_space<vmem>>, vector<1x8x16xbf16>
    %94 = vector.shape_cast %93 : vector<1x8x16xbf16> to vector<8x16xbf16>
    %cst_94 = arith.constant dense<0.000000e+00> : vector<8x1024xf32>
    %95 = tpu.matmul %94, %92, %cst_94 {dimension_numbers = #tpu.dot_dimension_numbers<[1], [0], [0], [1], [0, 0, 1, 1], [], []>} : vector<8x16xbf16>, vector<16x1024xbf16>, vector<8x1024xf32> -> vector<8x1024xf32>
    %96 = arith.addf %91, %95 : vector<8x1024xf32>
    %c0_95 = arith.constant 0 : index
    %c512_96 = arith.constant 512 : index
    %97 = vector.load %arg17[%c0_95, %c512_96] : memref<16x2048xbf16, #tpu.memory_space<vmem>>, vector<16x1024xbf16>
    %c2_97 = arith.constant 2 : index
    %c0_98 = arith.constant 0 : index
    %c0_99 = arith.constant 0 : index
    %98 = vector.load %arg5[%c2_97, %c0_98, %c0_99] : memref<5x8x16xbf16, #tpu.memory_space<vmem>>, vector<1x8x16xbf16>
    %99 = vector.shape_cast %98 : vector<1x8x16xbf16> to vector<8x16xbf16>
    %cst_100 = arith.constant dense<0.000000e+00> : vector<8x1024xf32>
    %100 = tpu.matmul %99, %97, %cst_100 {dimension_numbers = #tpu.dot_dimension_numbers<[1], [0], [0], [1], [0, 0, 1, 1], [], []>} : vector<8x16xbf16>, vector<16x1024xbf16>, vector<8x1024xf32> -> vector<8x1024xf32>
    %101 = arith.addf %96, %100 : vector<8x1024xf32>
    %c0_101 = arith.constant 0 : index
    %c768_102 = arith.constant 768 : index
    %102 = vector.load %arg17[%c0_101, %c768_102] : memref<16x2048xbf16, #tpu.memory_space<vmem>>, vector<16x1024xbf16>
    %c3 = arith.constant 3 : index
    %c0_103 = arith.constant 0 : index
    %c0_104 = arith.constant 0 : index
    %103 = vector.load %arg5[%c3, %c0_103, %c0_104] : memref<5x8x16xbf16, #tpu.memory_space<vmem>>, vector<1x8x16xbf16>
    %104 = vector.shape_cast %103 : vector<1x8x16xbf16> to vector<8x16xbf16>
    %cst_105 = arith.constant dense<0.000000e+00> : vector<8x1024xf32>
    %105 = tpu.matmul %104, %102, %cst_105 {dimension_numbers = #tpu.dot_dimension_numbers<[1], [0], [0], [1], [0, 0, 1, 1], [], []>} : vector<8x16xbf16>, vector<16x1024xbf16>, vector<8x1024xf32> -> vector<8x1024xf32>
    %106 = arith.addf %101, %105 : vector<8x1024xf32>
    %c0_106 = arith.constant 0 : index
    %c1024 = arith.constant 1024 : index
    %107 = vector.load %arg17[%c0_106, %c1024] : memref<16x2048xbf16, #tpu.memory_space<vmem>>, vector<16x1024xbf16>
    %c4 = arith.constant 4 : index
    %c0_107 = arith.constant 0 : index
    %c0_108 = arith.constant 0 : index
    %108 = vector.load %arg5[%c4, %c0_107, %c0_108] : memref<5x8x16xbf16, #tpu.memory_space<vmem>>, vector<1x8x16xbf16>
    %109 = vector.shape_cast %108 : vector<1x8x16xbf16> to vector<8x16xbf16>
    %cst_109 = arith.constant dense<0.000000e+00> : vector<8x1024xf32>
    %110 = tpu.matmul %109, %107, %cst_109 {dimension_numbers = #tpu.dot_dimension_numbers<[1], [0], [0], [1], [0, 0, 1, 1], [], []>} : vector<8x16xbf16>, vector<16x1024xbf16>, vector<8x1024xf32> -> vector<8x1024xf32>
    %111 = arith.addf %106, %110 : vector<8x1024xf32>
    %c0_110 = arith.constant 0 : index
    %c0_111 = arith.constant 0 : index
    %112 = vector.load %arg10[%c0_110, %c0_111] : memref<8x1xf32, #tpu.memory_space<vmem>>, vector<8x1xf32>
    %113 = vector.broadcast %112 : vector<8x1xf32> to vector<8x1024xf32>
    %114 = arith.addf %111, %113 : vector<8x1024xf32>
    %cst_112 = arith.constant 0.000000e+00 : f32
    %115 = vector.broadcast %cst_112 : f32 to vector<8x1024xf32>
    %116 = arith.cmpf oge, %114, %115 : vector<8x1024xf32>
    %cst_113 = arith.constant 1.000000e-01 : f32
    %117 = vector.broadcast %cst_113 : f32 to vector<8x1024xf32>
    %118 = arith.mulf %117, %114 : vector<8x1024xf32>
    %119 = arith.select %116, %114, %118 : vector<8x1024xi1>, vector<8x1024xf32>
    %c0_114 = arith.constant 0 : index
    %c0_115 = arith.constant 0 : index
    %c0_116 = arith.constant 0 : index
    %120 = vector.load %arg15[%c0_114, %c0_115, %c0_116] : memref<1x8x1024xf32, #tpu.memory_space<vmem>>, vector<1x8x1024xf32>
    %121 = vector.shape_cast %120 : vector<1x8x1024xf32> to vector<8x1024xf32>
    %122 = vector.shape_cast %119 : vector<8x1024xf32> to vector<1x8x1024xf32>
    tpu.vector_store %arg15[%c0_114, %c0_115, %c0_116], %122 {strides = array<i32>} : memref<1x8x1024xf32, #tpu.memory_space<vmem>>, vector<1x8x1024xf32>,
    %123 = arith.truncf %119 : vector<8x1024xf32> to vector<8x1024xbf16>
    %c0_117 = arith.constant 0 : index
    %c512_118 = arith.constant 512 : index
    %124 = vector.load %arg18[%c0_117, %c512_118] : memref<16x2048xbf16, #tpu.memory_space<vmem>>, vector<8x1024xbf16>
    tpu.vector_store %arg18[%c0_117, %c512_118], %123 {strides = array<i32>} : memref<16x2048xbf16, #tpu.memory_space<vmem>>, vector<8x1024xbf16>,
    %c0_119 = arith.constant 0 : index
    %c256_120 = arith.constant 256 : index
    %125 = vector.load %arg18[%c0_119, %c256_120] : memref<16x2048xbf16, #tpu.memory_space<vmem>>, vector<16x1024xbf16>
    %c0_121 = arith.constant 0 : index
    %c0_122 = arith.constant 0 : index
    %c0_123 = arith.constant 0 : index
    %126 = vector.load %arg6[%c0_121, %c0_122, %c0_123] : memref<3x8x16xbf16, #tpu.memory_space<vmem>>, vector<1x8x16xbf16>
    %127 = vector.shape_cast %126 : vector<1x8x16xbf16> to vector<8x16xbf16>
    %cst_124 = arith.constant dense<0.000000e+00> : vector<8x1024xf32>
    %128 = tpu.matmul %127, %125, %cst_124 {dimension_numbers = #tpu.dot_dimension_numbers<[1], [0], [0], [1], [0, 0, 1, 1], [], []>} : vector<8x16xbf16>, vector<16x1024xbf16>, vector<8x1024xf32> -> vector<8x1024xf32>
    %c0_125 = arith.constant 0 : index
    %c512_126 = arith.constant 512 : index
    %129 = vector.load %arg18[%c0_125, %c512_126] : memref<16x2048xbf16, #tpu.memory_space<vmem>>, vector<16x1024xbf16>
    %c1_127 = arith.constant 1 : index
    %c0_128 = arith.constant 0 : index
    %c0_129 = arith.constant 0 : index
    %130 = vector.load %arg6[%c1_127, %c0_128, %c0_129] : memref<3x8x16xbf16, #tpu.memory_space<vmem>>, vector<1x8x16xbf16>
    %131 = vector.shape_cast %130 : vector<1x8x16xbf16> to vector<8x16xbf16>
    %cst_130 = arith.constant dense<0.000000e+00> : vector<8x1024xf32>
    %132 = tpu.matmul %131, %129, %cst_130 {dimension_numbers = #tpu.dot_dimension_numbers<[1], [0], [0], [1], [0, 0, 1, 1], [], []>} : vector<8x16xbf16>, vector<16x1024xbf16>, vector<8x1024xf32> -> vector<8x1024xf32>
    %133 = arith.addf %128, %132 : vector<8x1024xf32>
    %c0_131 = arith.constant 0 : index
    %c768_132 = arith.constant 768 : index
    %134 = vector.load %arg18[%c0_131, %c768_132] : memref<16x2048xbf16, #tpu.memory_space<vmem>>, vector<16x1024xbf16>
    %c2_133 = arith.constant 2 : index
    %c0_134 = arith.constant 0 : index
    %c0_135 = arith.constant 0 : index
    %135 = vector.load %arg6[%c2_133, %c0_134, %c0_135] : memref<3x8x16xbf16, #tpu.memory_space<vmem>>, vector<1x8x16xbf16>
    %136 = vector.shape_cast %135 : vector<1x8x16xbf16> to vector<8x16xbf16>
    %cst_136 = arith.constant dense<0.000000e+00> : vector<8x1024xf32>
    %137 = tpu.matmul %136, %134, %cst_136 {dimension_numbers = #tpu.dot_dimension_numbers<[1], [0], [0], [1], [0, 0, 1, 1], [], []>} : vector<8x16xbf16>, vector<16x1024xbf16>, vector<8x1024xf32> -> vector<8x1024xf32>
    %138 = arith.addf %133, %137 : vector<8x1024xf32>
    %c0_137 = arith.constant 0 : index
    %c0_138 = arith.constant 0 : index
    %139 = vector.load %arg11[%c0_137, %c0_138] : memref<8x1xf32, #tpu.memory_space<vmem>>, vector<8x1xf32>
    %140 = vector.broadcast %139 : vector<8x1xf32> to vector<8x1024xf32>
    %141 = arith.addf %138, %140 : vector<8x1024xf32>
    %c0_139 = arith.constant 0 : index
    %c0_140 = arith.constant 0 : index
    %c0_141 = arith.constant 0 : index
    %142 = vector.load %arg16[%c0_139, %c0_140, %c0_141] : memref<1x8x1024xf32, #tpu.memory_space<vmem>>, vector<1x8x1024xf32>
    %143 = vector.shape_cast %142 : vector<1x8x1024xf32> to vector<8x1024xf32>
    %144 = vector.shape_cast %141 : vector<8x1024xf32> to vector<1x8x1024xf32>
    tpu.vector_store %arg16[%c0_139, %c0_140, %c0_141], %144 {strides = array<i32>} : memref<1x8x1024xf32, #tpu.memory_space<vmem>>, vector<1x8x1024xf32>,
    return
  }
  func.func @transform_0(%arg0: i32) -> (i32, i32, i32) {
    %c0_i32 = arith.constant 0 : i32
    %c0_i32_0 = arith.constant 0 : i32
    %c0_i32_1 = arith.constant 0 : i32
    return %arg0, %c0_i32, %c0_i32_0 : i32, i32, i32
  }
  func.func @transform_1(%arg0: i32) -> (i32, i32, i32) {
    %c0_i32 = arith.constant 0 : i32
    %c0_i32_0 = arith.constant 0 : i32
    %c0_i32_1 = arith.constant 0 : i32
    %c0_i32_2 = arith.constant 0 : i32
    return %c0_i32, %c0_i32_0, %c0_i32_1 : i32, i32, i32
  }
  func.func @transform_2(%arg0: i32) -> (i32, i32, i32) {
    %c0_i32 = arith.constant 0 : i32
    %c0_i32_0 = arith.constant 0 : i32
    %c0_i32_1 = arith.constant 0 : i32
    %c0_i32_2 = arith.constant 0 : i32
    return %c0_i32, %c0_i32_0, %c0_i32_1 : i32, i32, i32
  }
  func.func @transform_3(%arg0: i32) -> (i32, i32, i32) {
    %c0_i32 = arith.constant 0 : i32
    %c0_i32_0 = arith.constant 0 : i32
    %c0_i32_1 = arith.constant 0 : i32
    %c0_i32_2 = arith.constant 0 : i32
    return %c0_i32, %c0_i32_0, %c0_i32_1 : i32, i32, i32
  }
  func.func @transform_4(%arg0: i32) -> (i32, i32, i32) {
    %c0_i32 = arith.constant 0 : i32
    %c0_i32_0 = arith.constant 0 : i32
    %c0_i32_1 = arith.constant 0 : i32
    %c0_i32_2 = arith.constant 0 : i32
    return %c0_i32, %c0_i32_0, %c0_i32_1 : i32, i32, i32
  }
  func.func @transform_5(%arg0: i32) -> (i32, i32, i32) {
    %c0_i32 = arith.constant 0 : i32
    %c0_i32_0 = arith.constant 0 : i32
    %c0_i32_1 = arith.constant 0 : i32
    %c0_i32_2 = arith.constant 0 : i32
    return %c0_i32, %c0_i32_0, %c0_i32_1 : i32, i32, i32
  }
  func.func @transform_6(%arg0: i32) -> (i32, i32) {
    %c0_i32 = arith.constant 0 : i32
    %c0_i32_0 = arith.constant 0 : i32
    %c0_i32_1 = arith.constant 0 : i32
    return %c0_i32, %c0_i32_0 : i32, i32
  }
  func.func @transform_7(%arg0: i32) -> (i32, i32) {
    %c0_i32 = arith.constant 0 : i32
    %c0_i32_0 = arith.constant 0 : i32
    %c0_i32_1 = arith.constant 0 : i32
    return %c0_i32, %c0_i32_0 : i32, i32
  }
  func.func @transform_8(%arg0: i32) -> (i32, i32) {
    %c0_i32 = arith.constant 0 : i32
    %c0_i32_0 = arith.constant 0 : i32
    %c0_i32_1 = arith.constant 0 : i32
    return %c0_i32, %c0_i32_0 : i32, i32
  }
  func.func @transform_9(%arg0: i32) -> (i32, i32) {
    %c0_i32 = arith.constant 0 : i32
    %c0_i32_0 = arith.constant 0 : i32
    %c0_i32_1 = arith.constant 0 : i32
    return %c0_i32, %c0_i32_0 : i32, i32
  }
  func.func @transform_10(%arg0: i32) -> (i32, i32) {
    %c0_i32 = arith.constant 0 : i32
    %c0_i32_0 = arith.constant 0 : i32
    %c0_i32_1 = arith.constant 0 : i32
    return %c0_i32, %c0_i32_0 : i32, i32
  }
  func.func @transform_11(%arg0: i32) -> (i32, i32, i32) {
    %c0_i32 = arith.constant 0 : i32
    %c0_i32_0 = arith.constant 0 : i32
    %c0_i32_1 = arith.constant 0 : i32
    return %arg0, %c0_i32, %c0_i32_0 : i32, i32, i32
  }
  func.func @transform_12(%arg0: i32) -> (i32, i32, i32) {
    %c0_i32 = arith.constant 0 : i32
    %c0_i32_0 = arith.constant 0 : i32
    %c0_i32_1 = arith.constant 0 : i32
    return %arg0, %c0_i32, %c0_i32_0 : i32, i32, i32
  }
  func.func @transform_13(%arg0: i32) -> (i32, i32, i32) {
    %c0_i32 = arith.constant 0 : i32
    %c0_i32_0 = arith.constant 0 : i32
    %c0_i32_1 = arith.constant 0 : i32
    return %arg0, %c0_i32, %c0_i32_0 : i32, i32, i32
  }
  func.func @transform_14(%arg0: i32) -> (i32, i32, i32) {
    %c0_i32 = arith.constant 0 : i32
    %c0_i32_0 = arith.constant 0 : i32
    %c0_i32_1 = arith.constant 0 : i32
    return %arg0, %c0_i32, %c0_i32_0 : i32, i32, i32
  }
  func.func @transform_15(%arg0: i32) -> (i32, i32, i32) {
    %c0_i32 = arith.constant 0 : i32
    %c0_i32_0 = arith.constant 0 : i32
    %c0_i32_1 = arith.constant 0 : i32
    return %arg0, %c0_i32, %c0_i32_0 : i32, i32, i32
  }
}

</mosaic_0001>

<llo_original>
// kernel: tpu_custom_call.1
$region0: #{tpu_custom_call.1}
  #allocation0 [shape = 'u32[]', space=smem, size = 0x4, offset = 0x4, fixed_abs, tag = 'smem constant byte address 0x4 - core index']
  #allocation1 [shape = 'u32[144,128]{1,0:T(1,128)}', space=vmem, size = 0x12000, scoped, tag = 'internal scratch']
  #allocation2 [shape = 'bf16[16,2048]{1,0:T(16,128)(2,1)}', space=vmem, size = 0x10000, scoped, tag = 'scratch operand']
  #allocation3 [shape = 'bf16[16,2048]{1,0:T(16,128)(2,1)}', space=vmem, size = 0x10000, scoped, tag = 'scratch operand']
  %s0 = inlined_call_operand.hbm [shape: bf16[2,16,2048], index: 0, kind: input, shape index: {}]
  %s1 = inlined_call_operand.vmem [shape: bf16[3,16,16], index: 1, kind: input, shape index: {}]
  %s2 = inlined_call_operand.vmem [shape: bf16[3,16,16], index: 2, kind: input, shape index: {}]
  %s3 = inlined_call_operand.hbm [shape: bf16[3,8,16], index: 3, kind: input, shape index: {}]
  %s4 = inlined_call_operand.vmem [shape: bf16[5,8,16], index: 4, kind: input, shape index: {}]
  %s5 = inlined_call_operand.hbm [shape: bf16[3,8,16], index: 5, kind: input, shape index: {}]
  %s6 = inlined_call_operand.vmem [shape: f32[16,1], index: 6, kind: input, shape index: {}]
  %s7 = inlined_call_operand.vmem [shape: f32[16,1], index: 7, kind: input, shape index: {}]
  %s8 = inlined_call_operand.vmem [shape: f32[8,1], index: 8, kind: input, shape index: {}]
  %s9 = inlined_call_operand.vmem [shape: f32[8,1], index: 9, kind: input, shape index: {}]
  %s10 = inlined_call_operand.vmem [shape: f32[8,1], index: 10, kind: input, shape index: {}]
  %s11 = inlined_call_operand.hbm [shape: f32[2,16,1024], index: 11, kind: output, shape index: {0}]
  %s12 = inlined_call_operand.hbm [shape: f32[2,16,1024], index: 12, kind: output, shape index: {1}]
  %s13 = inlined_call_operand.hbm [shape: f32[2,8,1024], index: 13, kind: output, shape index: {2}]
  %s14 = inlined_call_operand.hbm [shape: f32[2,8,1024], index: 14, kind: output, shape index: {3}]
  %s15 = inlined_call_operand.hbm [shape: f32[2,8,1024], index: 15, kind: output, shape index: {4}]
  %16 = xla_tuple %s11, %s12, %s13, %s14, %s15
  %s17 = sld [smem:[#allocation0]]
  $region121: #{tpu_custom_call.1} parent=0
    _
  %s19 = ssub.s32 1, %s17
  %s20 = scalar_select 0, %s19, %s17
  $region1: #{tpu_custom_call.1} parent=0
    #allocation4 [shape = 'u8[131072]{0}', space=vmem, size = 0x20000, scoped, tag = 'input window, operand 0']
    #allocation5 [shape = 's32[2]{0}', space=sflag, size = 0x8, scoped, tag = 'scoped memory for tpu_custom_call.1']
    #allocation6 [shape = 's32[2]{0}', space=sflag, size = 0x8, scoped, tag = 'scoped memory for tpu_custom_call.1']
    #allocation7 [shape = 'u8[6144]{0}', space=vmem, size = 0x1800, scoped, tag = 'input window, operand 3, single buffered']
    #allocation8 [shape = 's32[1]{0}', space=sflag, size = 0x4, scoped, tag = 'scoped memory for tpu_custom_call.1']
    #allocation9 [shape = 'u8[6144]{0}', space=vmem, size = 0x1800, scoped, tag = 'input window, operand 5, single buffered']
    #allocation10 [shape = 'u8[131072]{0}', space=vmem, size = 0x20000, scoped, tag = 'output window, operand 0']
    #allocation11 [shape = 'u8[131072]{0}', space=vmem, size = 0x20000, scoped, tag = 'output window, operand 1']
    #allocation12 [shape = 's32[2]{0}', space=sflag, size = 0x8, scoped, tag = 'scoped memory for tpu_custom_call.1']
    #allocation13 [shape = 'u8[65536]{0}', space=vmem, size = 0x10000, scoped, tag = 'output window, operand 2']
    #allocation14 [shape = 'u8[65536]{0}', space=vmem, size = 0x10000, scoped, tag = 'output window, operand 3']
    #allocation15 [shape = 's32[2]{0}', space=sflag, size = 0x8, scoped, tag = 'scoped memory for tpu_custom_call.1']
    #allocation16 [shape = 'u8[65536]{0}', space=vmem, size = 0x10000, scoped, tag = 'output window, operand 4']
    %21 = vsyncpa [#allocation5], 0
    %s22 = scalar_lea.sflag [#allocation5], 1
    %23 = vsyncpa %s22, 0
    %24 = vsyncpa [#allocation8], 0
    %25 = vsyncpa [#allocation6], 0
    %s26 = scalar_lea.sflag [#allocation6], 1
    %27 = vsyncpa %s26, 0
    %28 = vsyncpa [#allocation12], 0
    %s29 = scalar_lea.sflag [#allocation12], 1
    %30 = vsyncpa %s29, 0
    %31 = vsyncpa [#allocation15], 0
    %s32 = scalar_lea.sflag [#allocation15], 1
    %33 = vsyncpa %s32, 0
    loop: start=0, step=1, limit=4
    $region2: #{tpu_custom_call.1} parent=1 // loop_pre_header
      _
    $region3: #{tpu_custom_call.1} parent=1 // loop_header
      %s35 = sphi 0, %s39
      %p36 = scmp.ge.s32.totalorder %s35, 4
      %s45 = sphi 0, %s47
      %s48 = sphi 0, %s45
      %s49 = sphi 0, %s48
      %s65 = sphi 0, %s49
      %s69 = sphi 0, %s69
      %s71 = sphi 0, %s69
      %s72 = sphi 0, %s71
      %s86 = sphi 0, %s72
      %s90 = sphi 0, %s90
      %s92 = sphi 0, %s90
      %s93 = sphi 0, %s92
      %s107 = sphi 0, %s93
      %s111 = sphi 0, %s111
      %s113 = sphi 0, %s111
      %s114 = sphi 0, %s113
      %s128 = sphi 0, %s114
      %s132 = sphi 0, %s132
      %s134 = sphi 0, %s132
      %s135 = sphi 0, %s134
      %s149 = sphi 0, %s135
      %s153 = sphi 0, %s153
      %s155 = sphi 0, %s153
      %s156 = sphi 0, %s155
      %s170 = sphi 0, %s156
      %s174 = sphi 0, %s174
      %s176 = sphi 0, %s174
      %s177 = sphi 0, %s176
      %s191 = sphi 0, %s177
      %s195 = sphi 0, %s195
      %s197 = sphi 0, %s195
      %s198 = sphi 0, %s197
      %s212 = sphi 0, %s198
      %s216 = sphi 0, %s216
      %s218 = sphi 0, %s216
      %s219 = sphi 0, %s218
      %s233 = sphi 0, %s219
      %s237 = sphi 0, %s237
      %s239 = sphi 0, %s237
      %s240 = sphi 0, %s239
      %s254 = sphi 0, %s240
      %s258 = sphi 0, %s258
      %s260 = sphi 0, %s258
      %s261 = sphi 0, %s260
      %s275 = sphi 0, %s261
      %s281 = sphi 0, %s283
      %s284 = sphi 0, %s281
      %s285 = sphi 0, %s284
      %s301 = sphi 0, %s285
      %s307 = sphi 0, %s309
      %s310 = sphi 0, %s307
      %s311 = sphi 0, %s310
      %s327 = sphi 0, %s311
      %s333 = sphi 0, %s335
      %s336 = sphi 0, %s333
      %s337 = sphi 0, %s336
      %s353 = sphi 0, %s337
      %s359 = sphi 0, %s361
      %s362 = sphi 0, %s359
      %s363 = sphi 0, %s362
      %s379 = sphi 0, %s363
      %s385 = sphi 0, %s387
      %s388 = sphi 0, %s385
      %s389 = sphi 0, %s388
      %s405 = sphi 0, %s389
    $region4: #{tpu_custom_call.1} parent=1 // loop_header_branch
      %38 = sbr.rel (%p36) target = $region8
    $region5: #{tpu_custom_call.1} parent=1 // loop_body
      %s40 = ssub.s32 %s35, 1
      %s41 = ssub.s32 %s35, 2
      %s42 = sadd.s32 %s35, 1
      %s43 = ssub.s32 %s35, %s42
      %p44 = scmp.eq.s32.totalorder %s43, 0
      %s46 = sadd.s32 %s45, 1
      %s47 = scalar_select %p44, %s45, %s46
      %p50 = pneg %p44
      %p51 = scmp.eq.s32.totalorder %s35, 1
      %p52 = por %p50, %p51
      %p53 = scmp.ne.s32.totalorder %s45, %s48
      %p54 = scmp.eq.s32.totalorder %s35, 0
      %p55 = por %p53, %p54
      %p56 = scmp.ne.s32.totalorder %s45, %s48
      %p57 = scmp.eq.s32.totalorder %s40, 1
      %p58 = por %p56, %p57
      %p59 = scmp.ne.s32.totalorder %s48, %s49
      %p60 = scmp.eq.s32.totalorder %s40, 0
      %p61 = por %p59, %p60
      %p62 = scmp.ne.s32.totalorder %s48, %s49
      %p63 = scmp.eq.s32.totalorder %s41, 1
      %p64 = por %p62, %p63
      %p66 = scmp.ne.s32.totalorder %s49, %s65
      %p67 = scmp.eq.s32.totalorder %s41, 0
      %p68 = por %p66, %p67
      %s70 = sadd.s32 %s69, 1
      %p73 = scmp.eq.s32.totalorder %s35, 1
      %p74 = scmp.ne.s32.totalorder %s69, %s71
      %p75 = scmp.eq.s32.totalorder %s35, 0
      %p76 = por %p74, %p75
      %p77 = scmp.ne.s32.totalorder %s69, %s71
      %p78 = scmp.eq.s32.totalorder %s40, 1
      %p79 = por %p77, %p78
      %p80 = scmp.ne.s32.totalorder %s71, %s72
      %p81 = scmp.eq.s32.totalorder %s40, 0
      %p82 = por %p80, %p81
      %p83 = scmp.ne.s32.totalorder %s71, %s72
      %p84 = scmp.eq.s32.totalorder %s41, 1
      %p85 = por %p83, %p84
      %p87 = scmp.ne.s32.totalorder %s72, %s86
      %p88 = scmp.eq.s32.totalorder %s41, 0
      %p89 = por %p87, %p88
      %s91 = sadd.s32 %s90, 1
      %p94 = scmp.eq.s32.totalorder %s35, 1
      %p95 = scmp.ne.s32.totalorder %s90, %s92
      %p96 = scmp.eq.s32.totalorder %s35, 0
      %p97 = por %p95, %p96
      %p98 = scmp.ne.s32.totalorder %s90, %s92
      %p99 = scmp.eq.s32.totalorder %s40, 1
      %p100 = por %p98, %p99
      %p101 = scmp.ne.s32.totalorder %s92, %s93
      %p102 = scmp.eq.s32.totalorder %s40, 0
      %p103 = por %p101, %p102
      %p104 = scmp.ne.s32.totalorder %s92, %s93
      %p105 = scmp.eq.s32.totalorder %s41, 1
      %p106 = por %p104, %p105
      %p108 = scmp.ne.s32.totalorder %s93, %s107
      %p109 = scmp.eq.s32.totalorder %s41, 0
      %p110 = por %p108, %p109
      %s112 = sadd.s32 %s111, 1
      %p115 = scmp.eq.s32.totalorder %s35, 1
      %p116 = scmp.ne.s32.totalorder %s111, %s113
      %p117 = scmp.eq.s32.totalorder %s35, 0
      %p118 = por %p116, %p117
      %p119 = scmp.ne.s32.totalorder %s111, %s113
      %p120 = scmp.eq.s32.totalorder %s40, 1
      %p121 = por %p119, %p120
      %p122 = scmp.ne.s32.totalorder %s113, %s114
      %p123 = scmp.eq.s32.totalorder %s40, 0
      %p124 = por %p122, %p123
      %p125 = scmp.ne.s32.totalorder %s113, %s114
      %p126 = scmp.eq.s32.totalorder %s41, 1
      %p127 = por %p125, %p126
      %p129 = scmp.ne.s32.totalorder %s114, %s128
      %p130 = scmp.eq.s32.totalorder %s41, 0
      %p131 = por %p129, %p130
      %s133 = sadd.s32 %s132, 1
      %p136 = scmp.eq.s32.totalorder %s35, 1
      %p137 = scmp.ne.s32.totalorder %s132, %s134
      %p138 = scmp.eq.s32.totalorder %s35, 0
      %p139 = por %p137, %p138
      %p140 = scmp.ne.s32.totalorder %s132, %s134
      %p141 = scmp.eq.s32.totalorder %s40, 1
      %p142 = por %p140, %p141
      %p143 = scmp.ne.s32.totalorder %s134, %s135
      %p144 = scmp.eq.s32.totalorder %s40, 0
      %p145 = por %p143, %p144
      %p146 = scmp.ne.s32.totalorder %s134, %s135
      %p147 = scmp.eq.s32.totalorder %s41, 1
      %p148 = por %p146, %p147
      %p150 = scmp.ne.s32.totalorder %s135, %s149
      %p151 = scmp.eq.s32.totalorder %s41, 0
      %p152 = por %p150, %p151
      %s154 = sadd.s32 %s153, 1
      %p157 = scmp.eq.s32.totalorder %s35, 1
      %p158 = scmp.ne.s32.totalorder %s153, %s155
      %p159 = scmp.eq.s32.totalorder %s35, 0
      %p160 = por %p158, %p159
      %p161 = scmp.ne.s32.totalorder %s153, %s155
      %p162 = scmp.eq.s32.totalorder %s40, 1
      %p163 = por %p161, %p162
      %p164 = scmp.ne.s32.totalorder %s155, %s156
      %p165 = scmp.eq.s32.totalorder %s40, 0
      %p166 = por %p164, %p165
      %p167 = scmp.ne.s32.totalorder %s155, %s156
      %p168 = scmp.eq.s32.totalorder %s41, 1
      %p169 = por %p167, %p168
      %p171 = scmp.ne.s32.totalorder %s156, %s170
      %p172 = scmp.eq.s32.totalorder %s41, 0
      %p173 = por %p171, %p172
      %s175 = sadd.s32 %s174, 1
      %p178 = scmp.eq.s32.totalorder %s35, 1
      %p179 = scmp.ne.s32.totalorder %s174, %s176
      %p180 = scmp.eq.s32.totalorder %s35, 0
      %p181 = por %p179, %p180
      %p182 = scmp.ne.s32.totalorder %s174, %s176
      %p183 = scmp.eq.s32.totalorder %s40, 1
      %p184 = por %p182, %p183
      %p185 = scmp.ne.s32.totalorder %s176, %s177
      %p186 = scmp.eq.s32.totalorder %s40, 0
      %p187 = por %p185, %p186
      %p188 = scmp.ne.s32.totalorder %s176, %s177
      %p189 = scmp.eq.s32.totalorder %s41, 1
      %p190 = por %p188, %p189
      %p192 = scmp.ne.s32.totalorder %s177, %s191
      %p193 = scmp.eq.s32.totalorder %s41, 0
      %p194 = por %p192, %p193
      %s196 = sadd.s32 %s195, 1
      %p199 = scmp.eq.s32.totalorder %s35, 1
      %p200 = scmp.ne.s32.totalorder %s195, %s197
      %p201 = scmp.eq.s32.totalorder %s35, 0
      %p202 = por %p200, %p201
      %p203 = scmp.ne.s32.totalorder %s195, %s197
      %p204 = scmp.eq.s32.totalorder %s40, 1
      %p205 = por %p203, %p204
      %p206 = scmp.ne.s32.totalorder %s197, %s198
      %p207 = scmp.eq.s32.totalorder %s40, 0
      %p208 = por %p206, %p207
      %p209 = scmp.ne.s32.totalorder %s197, %s198
      %p210 = scmp.eq.s32.totalorder %s41, 1
      %p211 = por %p209, %p210
      %p213 = scmp.ne.s32.totalorder %s198, %s212
      %p214 = scmp.eq.s32.totalorder %s41, 0
      %p215 = por %p213, %p214
      %s217 = sadd.s32 %s216, 1
      %p220 = scmp.eq.s32.totalorder %s35, 1
      %p221 = scmp.ne.s32.totalorder %s216, %s218
      %p222 = scmp.eq.s32.totalorder %s35, 0
      %p223 = por %p221, %p222
      %p224 = scmp.ne.s32.totalorder %s216, %s218
      %p225 = scmp.eq.s32.totalorder %s40, 1
      %p226 = por %p224, %p225
      %p227 = scmp.ne.s32.totalorder %s218, %s219
      %p228 = scmp.eq.s32.totalorder %s40, 0
      %p229 = por %p227, %p228
      %p230 = scmp.ne.s32.totalorder %s218, %s219
      %p231 = scmp.eq.s32.totalorder %s41, 1
      %p232 = por %p230, %p231
      %p234 = scmp.ne.s32.totalorder %s219, %s233
      %p235 = scmp.eq.s32.totalorder %s41, 0
      %p236 = por %p234, %p235
      %s238 = sadd.s32 %s237, 1
      %p241 = scmp.eq.s32.totalorder %s35, 1
      %p242 = scmp.ne.s32.totalorder %s237, %s239
      %p243 = scmp.eq.s32.totalorder %s35, 0
      %p244 = por %p242, %p243
      %p245 = scmp.ne.s32.totalorder %s237, %s239
      %p246 = scmp.eq.s32.totalorder %s40, 1
      %p247 = por %p245, %p246
      %p248 = scmp.ne.s32.totalorder %s239, %s240
      %p249 = scmp.eq.s32.totalorder %s40, 0
      %p250 = por %p248, %p249
      %p251 = scmp.ne.s32.totalorder %s239, %s240
      %p252 = scmp.eq.s32.totalorder %s41, 1
      %p253 = por %p251, %p252
      %p255 = scmp.ne.s32.totalorder %s240, %s254
      %p256 = scmp.eq.s32.totalorder %s41, 0
      %p257 = por %p255, %p256
      %s259 = sadd.s32 %s258, 1
      %p262 = scmp.eq.s32.totalorder %s35, 1
      %p263 = scmp.ne.s32.totalorder %s258, %s260
      %p264 = scmp.eq.s32.totalorder %s35, 0
      %p265 = por %p263, %p264
      %p266 = scmp.ne.s32.totalorder %s258, %s260
      %p267 = scmp.eq.s32.totalorder %s40, 1
      %p268 = por %p266, %p267
      %p269 = scmp.ne.s32.totalorder %s260, %s261
      %p270 = scmp.eq.s32.totalorder %s40, 0
      %p271 = por %p269, %p270
      %p272 = scmp.ne.s32.totalorder %s260, %s261
      %p273 = scmp.eq.s32.totalorder %s41, 1
      %p274 = por %p272, %p273
      %p276 = scmp.ne.s32.totalorder %s261, %s275
      %p277 = scmp.eq.s32.totalorder %s41, 0
      %p278 = por %p276, %p277
      %s279 = ssub.s32 %s35, %s42
      %p280 = scmp.eq.s32.totalorder %s279, 0
      %s282 = sadd.s32 %s281, 1
      %s283 = scalar_select %p280, %s281, %s282
      %p286 = pneg %p280
      %p287 = scmp.eq.s32.totalorder %s35, 1
      %p288 = por %p286, %p287
      %p289 = scmp.ne.s32.totalorder %s281, %s284
      %p290 = scmp.eq.s32.totalorder %s35, 0
      %p291 = por %p289, %p290
      %p292 = scmp.ne.s32.totalorder %s281, %s284
      %p293 = scmp.eq.s32.totalorder %s40, 1
      %p294 = por %p292, %p293
      %p295 = scmp.ne.s32.totalorder %s284, %s285
      %p296 = scmp.eq.s32.totalorder %s40, 0
      %p297 = por %p295, %p296
      %p298 = scmp.ne.s32.totalorder %s284, %s285
      %p299 = scmp.eq.s32.totalorder %s41, 1
      %p300 = por %p298, %p299
      %p302 = scmp.ne.s32.totalorder %s285, %s301
      %p303 = scmp.eq.s32.totalorder %s41, 0
      %p304 = por %p302, %p303
      %s305 = ssub.s32 %s35, %s42
      %p306 = scmp.eq.s32.totalorder %s305, 0
      %s308 = sadd.s32 %s307, 1
      %s309 = scalar_select %p306, %s307, %s308
      %p312 = pneg %p306
      %p313 = scmp.eq.s32.totalorder %s35, 1
      %p314 = por %p312, %p313
      %p315 = scmp.ne.s32.totalorder %s307, %s310
      %p316 = scmp.eq.s32.totalorder %s35, 0
      %p317 = por %p315, %p316
      %p318 = scmp.ne.s32.totalorder %s307, %s310
      %p319 = scmp.eq.s32.totalorder %s40, 1
      %p320 = por %p318, %p319
      %p321 = scmp.ne.s32.totalorder %s310, %s311
      %p322 = scmp.eq.s32.totalorder %s40, 0
      %p323 = por %p321, %p322
      %p324 = scmp.ne.s32.totalorder %s310, %s311
      %p325 = scmp.eq.s32.totalorder %s41, 1
      %p326 = por %p324, %p325
      %p328 = scmp.ne.s32.totalorder %s311, %s327
      %p329 = scmp.eq.s32.totalorder %s41, 0
      %p330 = por %p328, %p329
      %s331 = ssub.s32 %s35, %s42
      %p332 = scmp.eq.s32.totalorder %s331, 0
      %s334 = sadd.s32 %s333, 1
      %s335 = scalar_select %p332, %s333, %s334
      %p338 = pneg %p332
      %p339 = scmp.eq.s32.totalorder %s35, 1
      %p340 = por %p338, %p339
      %p341 = scmp.ne.s32.totalorder %s333, %s336
      %p342 = scmp.eq.s32.totalorder %s35, 0
      %p343 = por %p341, %p342
      %p344 = scmp.ne.s32.totalorder %s333, %s336
      %p345 = scmp.eq.s32.totalorder %s40, 1
      %p346 = por %p344, %p345
      %p347 = scmp.ne.s32.totalorder %s336, %s337
      %p348 = scmp.eq.s32.totalorder %s40, 0
      %p349 = por %p347, %p348
      %p350 = scmp.ne.s32.totalorder %s336, %s337
      %p351 = scmp.eq.s32.totalorder %s41, 1
      %p352 = por %p350, %p351
      %p354 = scmp.ne.s32.totalorder %s337, %s353
      %p355 = scmp.eq.s32.totalorder %s41, 0
      %p356 = por %p354, %p355
      %s357 = ssub.s32 %s35, %s42
      %p358 = scmp.eq.s32.totalorder %s357, 0
      %s360 = sadd.s32 %s359, 1
      %s361 = scalar_select %p358, %s359, %s360
      %p364 = pneg %p358
      %p365 = scmp.eq.s32.totalorder %s35, 1
      %p366 = por %p364, %p365
      %p367 = scmp.ne.s32.totalorder %s359, %s362
      %p368 = scmp.eq.s32.totalorder %s35, 0
      %p369 = por %p367, %p368
      %p370 = scmp.ne.s32.totalorder %s359, %s362
      %p371 = scmp.eq.s32.totalorder %s40, 1
      %p372 = por %p370, %p371
      %p373 = scmp.ne.s32.totalorder %s362, %s363
      %p374 = scmp.eq.s32.totalorder %s40, 0
      %p375 = por %p373, %p374
      %p376 = scmp.ne.s32.totalorder %s362, %s363
      %p377 = scmp.eq.s32.totalorder %s41, 1
      %p378 = por %p376, %p377
      %p380 = scmp.ne.s32.totalorder %s363, %s379
      %p381 = scmp.eq.s32.totalorder %s41, 0
      %p382 = por %p380, %p381
      %s383 = ssub.s32 %s35, %s42
      %p384 = scmp.eq.s32.totalorder %s383, 0
      %s386 = sadd.s32 %s385, 1
      %s387 = scalar_select %p384, %s385, %s386
      %p390 = pneg %p384
      %p391 = scmp.eq.s32.totalorder %s35, 1
      %p392 = por %p390, %p391
      %p393 = scmp.ne.s32.totalorder %s385, %s388
      %p394 = scmp.eq.s32.totalorder %s35, 0
      %p395 = por %p393, %p394
      %p396 = scmp.ne.s32.totalorder %s385, %s388
      %p397 = scmp.eq.s32.totalorder %s40, 1
      %p398 = por %p396, %p397
      %p399 = scmp.ne.s32.totalorder %s388, %s389
      %p400 = scmp.eq.s32.totalorder %s40, 0
      %p401 = por %p399, %p400
      %p402 = scmp.ne.s32.totalorder %s388, %s389
      %p403 = scmp.eq.s32.totalorder %s41, 1
      %p404 = por %p402, %p403
      %p406 = scmp.ne.s32.totalorder %s389, %s405
      %p407 = scmp.eq.s32.totalorder %s41, 0
      %p408 = por %p406, %p407
      %p409 = scmp.le.s32.totalorder 1, %s35
      %p410 = scmp.lt.s32.totalorder %s35, 3
      %p411 = pnand %p409, %p410
      %p412 = pneg %p411
      // Predicated region
      $region9: #{tpu_custom_call.1} parent=5 // pred_check
        _
      $region10: #{tpu_custom_call.1} parent=5 // pred_check_branch
        %414 = sbr.rel (%p411) target = $region12
      $region11: #{tpu_custom_call.1} parent=5 // pred_region
        %s415 = ssub.s32 %s35, 1
        // Predicated region
        $region13: #{tpu_custom_call.1} parent=11 // pred_check
          %p416 = pneg %p82
        $region14: #{tpu_custom_call.1} parent=11 // pred_check_branch
          %418 = sbr.rel (%p416) target = $region16
        $region15: #{tpu_custom_call.1} parent=11 // pred_region
          _
        $region16: #{tpu_custom_call.1} parent=11 // pred_fallthru
          _
        // Predicated region
        $region17: #{tpu_custom_call.1} parent=11 // pred_check
          %p419 = pneg %p103
        $region18: #{tpu_custom_call.1} parent=11 // pred_check_branch
          %421 = sbr.rel (%p419) target = $region20
        $region19: #{tpu_custom_call.1} parent=11 // pred_region
          _
        $region20: #{tpu_custom_call.1} parent=11 // pred_fallthru
          _
        // Predicated region
        $region21: #{tpu_custom_call.1} parent=11 // pred_check
          %p422 = pneg %p124
        $region22: #{tpu_custom_call.1} parent=11 // pred_check_branch
          %424 = sbr.rel (%p422) target = $region24
        $region23: #{tpu_custom_call.1} parent=11 // pred_region
          %s426 = ssub.s32 192, 192
          %427 = vsyncadd [#allocation8], %s426
          %s428 = sshll.u32 [#allocation7], 4
          %s429 = int_to_ptr.vmem [resolvable:$true] %s428
          %434 = dma.hbm_to_vmem [thread:$0]  %s3, 192, %s429, [#allocation8], 64, 64, 4
        $region24: #{tpu_custom_call.1} parent=11 // pred_fallthru
          _
        // Predicated region
        $region25: #{tpu_custom_call.1} parent=11 // pred_check
          %p435 = pneg %p145
        $region26: #{tpu_custom_call.1} parent=11 // pred_check_branch
          %437 = sbr.rel (%p435) target = $region28
        $region27: #{tpu_custom_call.1} parent=11 // pred_region
          _
        $region28: #{tpu_custom_call.1} parent=11 // pred_fallthru
          _
        // Predicated region
        $region29: #{tpu_custom_call.1} parent=11 // pred_check
          %p438 = pneg %p166
        $region30: #{tpu_custom_call.1} parent=11 // pred_check_branch
          %440 = sbr.rel (%p438) target = $region32
        $region31: #{tpu_custom_call.1} parent=11 // pred_region
          %s442 = ssub.s32 192, 192
          %443 = vsyncadd [#allocation8], %s442
          %s444 = sshll.u32 [#allocation9], 4
          %s445 = int_to_ptr.vmem [resolvable:$true] %s444
          %450 = dma.hbm_to_vmem [thread:$0]  %s5, 192, %s445, [#allocation8], 64, 64, 4
        $region32: #{tpu_custom_call.1} parent=11 // pred_fallthru
          _
        // Predicated region
        $region33: #{tpu_custom_call.1} parent=11 // pred_check
          %p451 = pneg %p187
        $region34: #{tpu_custom_call.1} parent=11 // pred_check_branch
          %453 = sbr.rel (%p451) target = $region36
        $region35: #{tpu_custom_call.1} parent=11 // pred_region
          _
        $region36: #{tpu_custom_call.1} parent=11 // pred_fallthru
          _
        // Predicated region
        $region37: #{tpu_custom_call.1} parent=11 // pred_check
          %p454 = pneg %p208
        $region38: #{tpu_custom_call.1} parent=11 // pred_check_branch
          %456 = sbr.rel (%p454) target = $region40
        $region39: #{tpu_custom_call.1} parent=11 // pred_region
          _
        $region40: #{tpu_custom_call.1} parent=11 // pred_fallthru
          _
        // Predicated region
        $region41: #{tpu_custom_call.1} parent=11 // pred_check
          %p457 = pneg %p229
        $region42: #{tpu_custom_call.1} parent=11 // pred_check_branch
          %459 = sbr.rel (%p457) target = $region44
        $region43: #{tpu_custom_call.1} parent=11 // pred_region
          _
        $region44: #{tpu_custom_call.1} parent=11 // pred_fallthru
          _
        // Predicated region
        $region45: #{tpu_custom_call.1} parent=11 // pred_check
          %p460 = pneg %p250
        $region46: #{tpu_custom_call.1} parent=11 // pred_check_branch
          %462 = sbr.rel (%p460) target = $region48
        $region47: #{tpu_custom_call.1} parent=11 // pred_region
          _
        $region48: #{tpu_custom_call.1} parent=11 // pred_fallthru
          _
        // Predicated region
        $region49: #{tpu_custom_call.1} parent=11 // pred_check
          %p463 = pneg %p271
        $region50: #{tpu_custom_call.1} parent=11 // pred_check_branch
          %465 = sbr.rel (%p463) target = $region52
        $region51: #{tpu_custom_call.1} parent=11 // pred_region
          _
        $region52: #{tpu_custom_call.1} parent=11 // pred_fallthru
          _
      $region12: #{tpu_custom_call.1} parent=5 // pred_fallthru
        _
      %p466 = scmp.lt.s32.totalorder %s35, 2
      // Predicated region
      $region53: #{tpu_custom_call.1} parent=5 // pred_check
        %p467 = pneg %p466
      $region54: #{tpu_custom_call.1} parent=5 // pred_check_branch
        %469 = sbr.rel (%p467) target = $region56
      $region55: #{tpu_custom_call.1} parent=5 // pred_region
        // Predicated region
        $region57: #{tpu_custom_call.1} parent=55 // pred_check
          %p470 = pneg %p55
        $region58: #{tpu_custom_call.1} parent=55 // pred_check_branch
          %472 = sbr.rel (%p470) target = $region60
        $region59: #{tpu_custom_call.1} parent=55 // pred_region
          %s473 = sand.u32 %s45, 1
          %s474 = scalar_lea.sflag [#allocation5], %s473
          %s475 = sand.u32 %s45, 1
          %s476 = smul.addr %s475, 128
          %s477 = scalar_lea.vmem [#allocation4], %s476
          %s479 = ssub.s32 2048, 2048
          %480 = vsyncadd %s474, %s479
          %s481 = smul.addr %s35, 32
          %s482 = smul.addr %s481, 64
          %s483 = scalar_lea.hbm %s0, %s482
          %s484 = sshll.u32 %s477, 4
          %s485 = int_to_ptr.vmem [resolvable:$true] %s484
          %490 = dma.hbm_to_vmem [thread:$0]  %s483, 2048, %s485, %s474, 1024, 1024, 64
        $region60: #{tpu_custom_call.1} parent=55 // pred_fallthru
          _
      $region56: #{tpu_custom_call.1} parent=5 // pred_fallthru
        _
      %p491 = scmp.le.s32.totalorder 1, %s35
      %p492 = scmp.lt.s32.totalorder %s35, 3
      %p493 = pnand %p491, %p492
      %p494 = pneg %p493
      // Predicated region
      $region61: #{tpu_custom_call.1} parent=5 // pred_check
        _
      $region62: #{tpu_custom_call.1} parent=5 // pred_check_branch
        %496 = sbr.rel (%p493) target = $region64
      $region63: #{tpu_custom_call.1} parent=5 // pred_region
        %s497 = ssub.s32 %s35, 1
        %s498 = sand.u32 %s48, 1
        %s499 = scalar_lea.sflag [#allocation5], %s498
        %s500 = sand.u32 %s48, 1
        %s501 = smul.addr %s500, 128
        %s502 = scalar_lea.vmem [#allocation4], %s501
        // Predicated region
        $region65: #{tpu_custom_call.1} parent=63 // pred_check
          %p503 = pneg %p61
        $region66: #{tpu_custom_call.1} parent=63 // pred_check_branch
          %505 = sbr.rel (%p503) target = $region68
        $region67: #{tpu_custom_call.1} parent=63 // pred_region
          %506 = dma.done %s499, 2048
        $region68: #{tpu_custom_call.1} parent=63 // pred_fallthru
          _
        // Predicated region
        $region69: #{tpu_custom_call.1} parent=63 // pred_check
          %p507 = pneg %p124
        $region70: #{tpu_custom_call.1} parent=63 // pred_check_branch
          %509 = sbr.rel (%p507) target = $region72
        $region71: #{tpu_custom_call.1} parent=63 // pred_region
          %510 = dma.done [#allocation8], 192
        $region72: #{tpu_custom_call.1} parent=63 // pred_fallthru
          _
        // Predicated region
        $region73: #{tpu_custom_call.1} parent=63 // pred_check
          %p511 = pneg %p166
        $region74: #{tpu_custom_call.1} parent=63 // pred_check_branch
          %513 = sbr.rel (%p511) target = $region76
        $region75: #{tpu_custom_call.1} parent=63 // pred_region
          %514 = dma.done [#allocation8], 192
        $region76: #{tpu_custom_call.1} parent=63 // pred_fallthru
          _
        %s515 = sand.u32 %s48, 1
        %s516 = scalar_lea.sflag [#allocation5], %s515
        %s517 = sand.u32 %s48, 1
        %s518 = smul.addr %s517, 128
        %s519 = scalar_lea.vmem [#allocation4], %s518
        %p520 = pneg %p61
        %p521 = pneg %p58
        %p522 = pneg %p82
        %p523 = pneg %p79
        %p524 = pneg %p103
        %p525 = pneg %p100
        %p526 = pneg %p124
        %p527 = pneg %p121
        %p528 = pneg %p145
        %p529 = pneg %p142
        %p530 = pneg %p166
        %p531 = pneg %p163
        %p532 = pneg %p187
        %p533 = pneg %p184
        %p534 = pneg %p208
        %p535 = pneg %p205
        %p536 = pneg %p229
        %p537 = pneg %p226
        %p538 = pneg %p250
        %p539 = pneg %p247
        %p540 = pneg %p271
        %p541 = pneg %p268
        %p542 = pneg %p297
        %p543 = pneg %p294
        %s544 = sand.u32 %s284, 1
        %s545 = scalar_lea.sflag [#allocation6], %s544
        %s546 = sand.u32 %s284, 1
        %s547 = smul.addr %s546, 128
        %s548 = scalar_lea.vmem [#allocation10], %s547
        %p549 = pneg %p323
        %p550 = pneg %p320
        %s551 = sand.u32 %s40, 1
        %s552 = scalar_lea.sflag [#allocation12], %s551
        %s553 = sand.u32 %s310, 1
        %s554 = smul.addr %s553, 128
        %s555 = scalar_lea.vmem [#allocation11], %s554
        %p556 = pneg %p349
        %p557 = pneg %p346
        %s558 = sand.u32 %s40, 1
        %s559 = scalar_lea.sflag [#allocation12], %s558
        %s560 = sand.u32 %s336, 1
        %s561 = smul.addr %s560, 64
        %s562 = scalar_lea.vmem [#allocation13], %s561
        %p563 = pneg %p375
        %p564 = pneg %p372
        %s565 = sand.u32 %s40, 1
        %s566 = scalar_lea.sflag [#allocation15], %s565
        %s567 = sand.u32 %s362, 1
        %s568 = smul.addr %s567, 64
        %s569 = scalar_lea.vmem [#allocation14], %s568
        %p570 = pneg %p401
        %p571 = pneg %p398
        %s572 = sand.u32 %s40, 1
        %s573 = scalar_lea.sflag [#allocation15], %s572
        %s574 = sand.u32 %s388, 1
        %s575 = smul.addr %s574, 64
        %s576 = scalar_lea.vmem [#allocation16], %s575
        %578 = vst [vmem:[#allocation2] sm:$0xff] 0
        %579 = vst [vmem:[#allocation2 + $0x8] sm:$0xff] 0
        %580 = vst [vmem:[#allocation2 + $0x10] sm:$0xff] 0
        %581 = vst [vmem:[#allocation2 + $0x18] sm:$0xff] 0
        %582 = vst [vmem:[#allocation2 + $0x20] sm:$0xff] 0
        %583 = vst [vmem:[#allocation2 + $0x28] sm:$0xff] 0
        %584 = vst [vmem:[#allocation2 + $0x30] sm:$0xff] 0
        %585 = vst [vmem:[#allocation2 + $0x38] sm:$0xff] 0
        %586 = vst [vmem:[#allocation2 + $0x40] sm:$0xff] 0
        %587 = vst [vmem:[#allocation2 + $0x48] sm:$0xff] 0
        %588 = vst [vmem:[#allocation2 + $0x50] sm:$0xff] 0
        %589 = vst [vmem:[#allocation2 + $0x58] sm:$0xff] 0
        %590 = vst [vmem:[#allocation2 + $0x60] sm:$0xff] 0
        %591 = vst [vmem:[#allocation2 + $0x68] sm:$0xff] 0
        %592 = vst [vmem:[#allocation2 + $0x70] sm:$0xff] 0
        %593 = vst [vmem:[#allocation2 + $0x78] sm:$0xff] 0
        %594 = vst [vmem:[#allocation3] sm:$0xff] 0
        %595 = vst [vmem:[#allocation3 + $0x8] sm:$0xff] 0
        %596 = vst [vmem:[#allocation3 + $0x10] sm:$0xff] 0
        %597 = vst [vmem:[#allocation3 + $0x18] sm:$0xff] 0
        %598 = vst [vmem:[#allocation3 + $0x20] sm:$0xff] 0
        %599 = vst [vmem:[#allocation3 + $0x28] sm:$0xff] 0
        %600 = vst [vmem:[#allocation3 + $0x30] sm:$0xff] 0
        %601 = vst [vmem:[#allocation3 + $0x38] sm:$0xff] 0
        %602 = vst [vmem:[#allocation3 + $0x40] sm:$0xff] 0
        %603 = vst [vmem:[#allocation3 + $0x48] sm:$0xff] 0
        %604 = vst [vmem:[#allocation3 + $0x50] sm:$0xff] 0
        %605 = vst [vmem:[#allocation3 + $0x58] sm:$0xff] 0
        %606 = vst [vmem:[#allocation3 + $0x60] sm:$0xff] 0
        %607 = vst [vmem:[#allocation3 + $0x68] sm:$0xff] 0
        %608 = vst [vmem:[#allocation3 + $0x70] sm:$0xff] 0
        %609 = vst [vmem:[#allocation3 + $0x78] sm:$0xff] 0
        %v610 = vld [vmem:[%s502 + $0x8] sm:$0xff]
        %v611 = vld [vmem:[%s502 + $0x10] sm:$0xff]
        %v612 = vld [vmem:[%s502 + $0x18] sm:$0xff]
        %v613 = vld [vmem:[%s502 + $0x20] sm:$0xff]
        %v614 = vld [vmem:[%s502 + $0x48] sm:$0xff]
        %v615 = vld [vmem:[%s502 + $0x50] sm:$0xff]
        %v616 = vld [vmem:[%s502 + $0x58] sm:$0xff]
        %v617 = vld [vmem:[%s502 + $0x60] sm:$0xff]
        %v618 = vld [vmem:[%s1] sm:$0xf]
        %v619 = vld [vmem:[%s1 + $0x4] sm:$0xf]
        %v620 = vld [vmem:[%s502 + $0x28] sm:$0xff]
        %v621 = vld [vmem:[%s502 + $0x68] sm:$0xff]
        %s622 = scalar_lea.vmem %s1, 8
        %v623 = vld [vmem:[%s622] sm:$0xf]
        %v624 = vld [vmem:[%s622 + $0x4] sm:$0xf]
        %v627 = vunpack.c.l.b16 %v623
        %v628 = vunpack.c.l.b16 %v624
        %v629 = vpack.c.b16 %v628, %v627
        %v638 = vunpack.c.l.b16 %v611
        %v639 = vunpack.c.h.b16 %v611
        %v640 = vunpack.c.l.b16 %v612
        %v641 = vunpack.c.h.b16 %v612
        %v642 = vunpack.c.l.b16 %v613
        %v643 = vunpack.c.h.b16 %v613
        %v644 = vunpack.c.l.b16 %v620
        %v645 = vunpack.c.h.b16 %v620
        %v646 = vunpack.c.l.b16 %v615
        %v647 = vunpack.c.h.b16 %v615
        %v648 = vunpack.c.l.b16 %v616
        %v649 = vunpack.c.h.b16 %v616
        %v650 = vunpack.c.l.b16 %v617
        %v651 = vunpack.c.h.b16 %v617
        %v652 = vunpack.c.l.b16 %v621
        %v653 = vunpack.c.h.b16 %v621
        %v654 = vpack.c.b16 %v646, %v638
        %v655 = vpack.c.b16 %v647, %v639
        %v656 = vpack.c.b16 %v648, %v640
        %v657 = vpack.c.b16 %v649, %v641
        %v658 = vpack.c.b16 %v650, %v642
        %v659 = vpack.c.b16 %v651, %v643
        %v660 = vpack.c.b16 %v652, %v644
        %v661 = vpack.c.b16 %v653, %v645
        %vm670 = vcmask 130048
        %v672 = vsel %vm670, %v629, 0
        %674 = vmatprep.subr.bf16.mxu0 %v655
        %675 = vmatpush1.bf16.msra.mxu0 %v654
        %676 = vmatprep.subr.bf16.mxu0 0
        %677 = vmatpush1.bf16.msra.mxu0 0
        %678 = vmatprep.subr.bf16.mxu0 0
        %679 = vmatpush1.bf16.msra.mxu0 0
        %680 = vmatprep.subr.bf16.mxu0 0
        %681 = vmatpush1.bf16.msra.mxu0 0
        %682 = vmatprep.subr.bf16.mxu0 0
        %683 = vmatpush1.bf16.msra.mxu0 0
        %684 = vmatprep.subr.bf16.mxu0 0
        %685 = vmatpush1.bf16.msra.mxu0 0
        %686 = vmatprep.subr.bf16.mxu0 0
        %687 = vmatpush1.bf16.msra.mxu0 0
        %688 = vmatprep.subr.bf16.mxu0 0
        %689 = vmatpush1.bf16.msra.mxu0 0
        %690 = vmatprep.subr.bf16.mxu0 0
        %691 = vmatpush1.bf16.msra.mxu0 0
        %692 = vmatprep.subr.bf16.mxu0 0
        %693 = vmatpush1.bf16.msra.mxu0 0
        %694 = vmatprep.subr.bf16.mxu0 0
        %695 = vmatpush1.bf16.msra.mxu0 0
        %696 = vmatprep.subr.bf16.mxu0 0
        %697 = vmatpush1.bf16.msra.mxu0 0
        %698 = vmatprep.subr.bf16.mxu0 0
        %699 = vmatpush1.bf16.msra.mxu0 0
        %700 = vmatprep.subr.bf16.mxu0 0
        %701 = vmatpush1.bf16.msra.mxu0 0
        %702 = vmatprep.subr.bf16.mxu0 0
        %703 = vmatpush1.bf16.msra.mxu0 0
        %704 = vmatprep.subr.bf16.mxu0 0
        %705 = vmatpush1.bf16.msra.mxu0 0
        %706 = vmatprep.mubr.bf16.mxu0 0
        %707 = vmatmul.mubr.bf16.gmra.mrb[0].mxu0 %v672
        %v708 = vpop.f32.mrb[0].mxu0
        %v709 = vadd.f32 0.0, %v708
        %v710 = vpop.f32.mrb[0].mxu0
        %v711 = vadd.f32 0.0, %v710
        %v712 = vpop.f32.mrb[0].mxu0
        %v713 = vadd.f32 0.0, %v712
        %v714 = vpop.f32.mrb[0].mxu0
        %v715 = vadd.f32 0.0, %v714
        %716 = vdwg.mxu0
        %717 = vmatprep.subr.bf16.mxu0 %v657
        %718 = vmatpush1.bf16.msra.mxu0 %v656
        %719 = vmatprep.subr.bf16.mxu0 0
        %720 = vmatpush1.bf16.msra.mxu0 0
        %721 = vmatprep.subr.bf16.mxu0 0
        %722 = vmatpush1.bf16.msra.mxu0 0
        %723 = vmatprep.subr.bf16.mxu0 0
        %724 = vmatpush1.bf16.msra.mxu0 0
        %725 = vmatprep.subr.bf16.mxu0 0
        %726 = vmatpush1.bf16.msra.mxu0 0
        %727 = vmatprep.subr.bf16.mxu0 0
        %728 = vmatpush1.bf16.msra.mxu0 0
        %729 = vmatprep.subr.bf16.mxu0 0
        %730 = vmatpush1.bf16.msra.mxu0 0
        %731 = vmatprep.subr.bf16.mxu0 0
        %732 = vmatpush1.bf16.msra.mxu0 0
        %733 = vmatprep.subr.bf16.mxu0 0
        %734 = vmatpush1.bf16.msra.mxu0 0
        %735 = vmatprep.subr.bf16.mxu0 0
        %736 = vmatpush1.bf16.msra.mxu0 0
        %737 = vmatprep.subr.bf16.mxu0 0
        %738 = vmatpush1.bf16.msra.mxu0 0
        %739 = vmatprep.subr.bf16.mxu0 0
        %740 = vmatpush1.bf16.msra.mxu0 0
        %741 = vmatprep.subr.bf16.mxu0 0
        %742 = vmatpush1.bf16.msra.mxu0 0
        %743 = vmatprep.subr.bf16.mxu0 0
        %744 = vmatpush1.bf16.msra.mxu0 0
        %745 = vmatprep.subr.bf16.mxu0 0
        %746 = vmatpush1.bf16.msra.mxu0 0
        %747 = vmatprep.subr.bf16.mxu0 0
        %748 = vmatpush1.bf16.msra.mxu0 0
        %749 = vmatprep.mubr.bf16.mxu0 0
        %750 = vmatmul.mubr.bf16.gmra.mrb[0].mxu0 %v672
        %v751 = vpop.f32.mrb[0].mxu0
        %v752 = vadd.f32 0.0, %v751
        %v753 = vpop.f32.mrb[0].mxu0
        %v754 = vadd.f32 0.0, %v753
        %v755 = vpop.f32.mrb[0].mxu0
        %v756 = vadd.f32 0.0, %v755
        %v757 = vpop.f32.mrb[0].mxu0
        %v758 = vadd.f32 0.0, %v757
        %759 = vdwg.mxu0
        %760 = vmatprep.subr.bf16.mxu0 %v659
        %761 = vmatpush1.bf16.msra.mxu0 %v658
        %762 = vmatprep.subr.bf16.mxu0 0
        %763 = vmatpush1.bf16.msra.mxu0 0
        %764 = vmatprep.subr.bf16.mxu0 0
        %765 = vmatpush1.bf16.msra.mxu0 0
        %766 = vmatprep.subr.bf16.mxu0 0
        %767 = vmatpush1.bf16.msra.mxu0 0
        %768 = vmatprep.subr.bf16.mxu0 0
        %769 = vmatpush1.bf16.msra.mxu0 0
        %770 = vmatprep.subr.bf16.mxu0 0
        %771 = vmatpush1.bf16.msra.mxu0 0
        %772 = vmatprep.subr.bf16.mxu0 0
        %773 = vmatpush1.bf16.msra.mxu0 0
        %774 = vmatprep.subr.bf16.mxu0 0
        %775 = vmatpush1.bf16.msra.mxu0 0
        %776 = vmatprep.subr.bf16.mxu0 0
        %777 = vmatpush1.bf16.msra.mxu0 0
        %778 = vmatprep.subr.bf16.mxu0 0
        %779 = vmatpush1.bf16.msra.mxu0 0
        %780 = vmatprep.subr.bf16.mxu0 0
        %781 = vmatpush1.bf16.msra.mxu0 0
        %782 = vmatprep.subr.bf16.mxu0 0
        %783 = vmatpush1.bf16.msra.mxu0 0
        %784 = vmatprep.subr.bf16.mxu0 0
        %785 = vmatpush1.bf16.msra.mxu0 0
        %786 = vmatprep.subr.bf16.mxu0 0
        %787 = vmatpush1.bf16.msra.mxu0 0
        %788 = vmatprep.subr.bf16.mxu0 0
        %789 = vmatpush1.bf16.msra.mxu0 0
        %790 = vmatprep.subr.bf16.mxu0 0
        %791 = vmatpush1.bf16.msra.mxu0 0
        %792 = vmatprep.mubr.bf16.mxu0 0
        %793 = vmatmul.mubr.bf16.gmra.mrb[0].mxu0 %v672
        %v794 = vpop.f32.mrb[0].mxu0
        %v795 = vadd.f32 0.0, %v794
        %v796 = vpop.f32.mrb[0].mxu0
        %v797 = vadd.f32 0.0, %v796
        %v798 = vpop.f32.mrb[0].mxu0
        %v799 = vadd.f32 0.0, %v798
        %v800 = vpop.f32.mrb[0].mxu0
        %v801 = vadd.f32 0.0, %v800
        %802 = vdwg.mxu0
        %803 = vmatprep.subr.bf16.mxu0 %v661
        %804 = vmatpush1.bf16.msra.mxu0 %v660
        %805 = vmatprep.subr.bf16.mxu0 0
        %806 = vmatpush1.bf16.msra.mxu0 0
        %807 = vmatprep.subr.bf16.mxu0 0
        %808 = vmatpush1.bf16.msra.mxu0 0
        %809 = vmatprep.subr.bf16.mxu0 0
        %810 = vmatpush1.bf16.msra.mxu0 0
        %811 = vmatprep.subr.bf16.mxu0 0
        %812 = vmatpush1.bf16.msra.mxu0 0
        %813 = vmatprep.subr.bf16.mxu0 0
        %814 = vmatpush1.bf16.msra.mxu0 0
        %815 = vmatprep.subr.bf16.mxu0 0
        %816 = vmatpush1.bf16.msra.mxu0 0
        %817 = vmatprep.subr.bf16.mxu0 0
        %818 = vmatpush1.bf16.msra.mxu0 0
        %819 = vmatprep.subr.bf16.mxu0 0
        %820 = vmatpush1.bf16.msra.mxu0 0
        %821 = vmatprep.subr.bf16.mxu0 0
        %822 = vmatpush1.bf16.msra.mxu0 0
        %823 = vmatprep.subr.bf16.mxu0 0
        %824 = vmatpush1.bf16.msra.mxu0 0
        %825 = vmatprep.subr.bf16.mxu0 0
        %826 = vmatpush1.bf16.msra.mxu0 0
        %827 = vmatprep.subr.bf16.mxu0 0
        %828 = vmatpush1.bf16.msra.mxu0 0
        %829 = vmatprep.subr.bf16.mxu0 0
        %830 = vmatpush1.bf16.msra.mxu0 0
        %831 = vmatprep.subr.bf16.mxu0 0
        %832 = vmatpush1.bf16.msra.mxu0 0
        %833 = vmatprep.subr.bf16.mxu0 0
        %834 = vmatpush1.bf16.msra.mxu0 0
        %835 = vmatprep.mubr.bf16.mxu0 0
        %836 = vmatmul.mubr.bf16.gmra.mrb[0].mxu0 %v672
        %v837 = vpop.f32.mrb[0].mxu0
        %v838 = vadd.f32 0.0, %v837
        %v839 = vpop.f32.mrb[0].mxu0
        %v840 = vadd.f32 0.0, %v839
        %v841 = vpop.f32.mrb[0].mxu0
        %v842 = vadd.f32 0.0, %v841
        %v843 = vpop.f32.mrb[0].mxu0
        %v844 = vadd.f32 0.0, %v843
        %845 = vdwg.mxu0
        %v848 = vunpack.c.l.b16 %v618
        %v849 = vunpack.c.l.b16 %v619
        %v850 = vpack.c.b16 %v849, %v848
        %v853 = vunpack.c.l.b16 %v610
        %v854 = vunpack.c.h.b16 %v610
        %v855 = vunpack.c.l.b16 %v614
        %v856 = vunpack.c.h.b16 %v614
        %v857 = vpack.c.b16 %v855, %v853
        %v858 = vpack.c.b16 %v856, %v854
        %v862 = vsel %vm670, %v850, 0
        %864 = vmatprep.subr.bf16.mxu0 %v858
        %865 = vmatpush1.bf16.msra.mxu0 %v857
        %866 = vmatprep.subr.bf16.mxu0 0
        %867 = vmatpush1.bf16.msra.mxu0 0
        %868 = vmatprep.subr.bf16.mxu0 0
        %869 = vmatpush1.bf16.msra.mxu0 0
        %870 = vmatprep.subr.bf16.mxu0 0
        %871 = vmatpush1.bf16.msra.mxu0 0
        %872 = vmatprep.subr.bf16.mxu0 0
        %873 = vmatpush1.bf16.msra.mxu0 0
        %874 = vmatprep.subr.bf16.mxu0 0
        %875 = vmatpush1.bf16.msra.mxu0 0
        %876 = vmatprep.subr.bf16.mxu0 0
        %877 = vmatpush1.bf16.msra.mxu0 0
        %878 = vmatprep.subr.bf16.mxu0 0
        %879 = vmatpush1.bf16.msra.mxu0 0
        %880 = vmatprep.subr.bf16.mxu0 0
        %881 = vmatpush1.bf16.msra.mxu0 0
        %882 = vmatprep.subr.bf16.mxu0 0
        %883 = vmatpush1.bf16.msra.mxu0 0
        %884 = vmatprep.subr.bf16.mxu0 0
        %885 = vmatpush1.bf16.msra.mxu0 0
        %886 = vmatprep.subr.bf16.mxu0 0
        %887 = vmatpush1.bf16.msra.mxu0 0
        %888 = vmatprep.subr.bf16.mxu0 0
        %889 = vmatpush1.bf16.msra.mxu0 0
        %890 = vmatprep.subr.bf16.mxu0 0
        %891 = vmatpush1.bf16.msra.mxu0 0
        %892 = vmatprep.subr.bf16.mxu0 0
        %893 = vmatpush1.bf16.msra.mxu0 0
        %894 = vmatprep.subr.bf16.mxu0 0
        %895 = vmatpush1.bf16.msra.mxu0 0
        %896 = vmatprep.mubr.bf16.mxu0 0
        %897 = vmatmul.mubr.bf16.gmra.mrb[0].mxu0 %v862
        %v898 = vpop.f32.mrb[0].mxu0
        %v899 = vadd.f32 %v709, %v898
        %v900 = vpop.f32.mrb[0].mxu0
        %v901 = vadd.f32 %v711, %v900
        %v902 = vpop.f32.mrb[0].mxu0
        %v903 = vadd.f32 %v713, %v902
        %v904 = vpop.f32.mrb[0].mxu0
        %v905 = vadd.f32 %v715, %v904
        %906 = vdwg.mxu0
        %907 = vmatprep.subr.bf16.mxu0 %v655
        %908 = vmatpush1.bf16.msra.mxu0 %v654
        %909 = vmatprep.subr.bf16.mxu0 0
        %910 = vmatpush1.bf16.msra.mxu0 0
        %911 = vmatprep.subr.bf16.mxu0 0
        %912 = vmatpush1.bf16.msra.mxu0 0
        %913 = vmatprep.subr.bf16.mxu0 0
        %914 = vmatpush1.bf16.msra.mxu0 0
        %915 = vmatprep.subr.bf16.mxu0 0
        %916 = vmatpush1.bf16.msra.mxu0 0
        %917 = vmatprep.subr.bf16.mxu0 0
        %918 = vmatpush1.bf16.msra.mxu0 0
        %919 = vmatprep.subr.bf16.mxu0 0
        %920 = vmatpush1.bf16.msra.mxu0 0
        %921 = vmatprep.subr.bf16.mxu0 0
        %922 = vmatpush1.bf16.msra.mxu0 0
        %923 = vmatprep.subr.bf16.mxu0 0
        %924 = vmatpush1.bf16.msra.mxu0 0
        %925 = vmatprep.subr.bf16.mxu0 0
        %926 = vmatpush1.bf16.msra.mxu0 0
        %927 = vmatprep.subr.bf16.mxu0 0
        %928 = vmatpush1.bf16.msra.mxu0 0
        %929 = vmatprep.subr.bf16.mxu0 0
        %930 = vmatpush1.bf16.msra.mxu0 0
        %931 = vmatprep.subr.bf16.mxu0 0
        %932 = vmatpush1.bf16.msra.mxu0 0
        %933 = vmatprep.subr.bf16.mxu0 0
        %934 = vmatpush1.bf16.msra.mxu0 0
        %935 = vmatprep.subr.bf16.mxu0 0
        %936 = vmatpush1.bf16.msra.mxu0 0
        %937 = vmatprep.subr.bf16.mxu0 0
        %938 = vmatpush1.bf16.msra.mxu0 0
        %939 = vmatprep.mubr.bf16.mxu0 0
        %940 = vmatmul.mubr.bf16.gmra.mrb[0].mxu0 %v862
        %v941 = vpop.f32.mrb[0].mxu0
        %v942 = vadd.f32 %v752, %v941
        %v943 = vpop.f32.mrb[0].mxu0
        %v944 = vadd.f32 %v754, %v943
        %v945 = vpop.f32.mrb[0].mxu0
        %v946 = vadd.f32 %v756, %v945
        %v947 = vpop.f32.mrb[0].mxu0
        %v948 = vadd.f32 %v758, %v947
        %949 = vdwg.mxu0
        %950 = vmatprep.subr.bf16.mxu0 %v657
        %951 = vmatpush1.bf16.msra.mxu0 %v656
        %952 = vmatprep.subr.bf16.mxu0 0
        %953 = vmatpush1.bf16.msra.mxu0 0
        %954 = vmatprep.subr.bf16.mxu0 0
        %955 = vmatpush1.bf16.msra.mxu0 0
        %956 = vmatprep.subr.bf16.mxu0 0
        %957 = vmatpush1.bf16.msra.mxu0 0
        %958 = vmatprep.subr.bf16.mxu0 0
        %959 = vmatpush1.bf16.msra.mxu0 0
        %960 = vmatprep.subr.bf16.mxu0 0
        %961 = vmatpush1.bf16.msra.mxu0 0
        %962 = vmatprep.subr.bf16.mxu0 0
        %963 = vmatpush1.bf16.msra.mxu0 0
        %964 = vmatprep.subr.bf16.mxu0 0
        %965 = vmatpush1.bf16.msra.mxu0 0
        %966 = vmatprep.subr.bf16.mxu0 0
        %967 = vmatpush1.bf16.msra.mxu0 0
        %968 = vmatprep.subr.bf16.mxu0 0
        %969 = vmatpush1.bf16.msra.mxu0 0
        %970 = vmatprep.subr.bf16.mxu0 0
        %971 = vmatpush1.bf16.msra.mxu0 0
        %972 = vmatprep.subr.bf16.mxu0 0
        %973 = vmatpush1.bf16.msra.mxu0 0
        %974 = vmatprep.subr.bf16.mxu0 0
        %975 = vmatpush1.bf16.msra.mxu0 0
        %976 = vmatprep.subr.bf16.mxu0 0
        %977 = vmatpush1.bf16.msra.mxu0 0
        %978 = vmatprep.subr.bf16.mxu0 0
        %979 = vmatpush1.bf16.msra.mxu0 0
        %980 = vmatprep.subr.bf16.mxu0 0
        %981 = vmatpush1.bf16.msra.mxu0 0
        %982 = vmatprep.mubr.bf16.mxu0 0
        %983 = vmatmul.mubr.bf16.gmra.mrb[0].mxu0 %v862
        %v984 = vpop.f32.mrb[0].mxu0
        %v985 = vadd.f32 %v795, %v984
        %v986 = vpop.f32.mrb[0].mxu0
        %v987 = vadd.f32 %v797, %v986
        %v988 = vpop.f32.mrb[0].mxu0
        %v989 = vadd.f32 %v799, %v988
        %v990 = vpop.f32.mrb[0].mxu0
        %v991 = vadd.f32 %v801, %v990
        %992 = vdwg.mxu0
        %993 = vmatprep.subr.bf16.mxu0 %v659
        %994 = vmatpush1.bf16.msra.mxu0 %v658
        %995 = vmatprep.subr.bf16.mxu0 0
        %996 = vmatpush1.bf16.msra.mxu0 0
        %997 = vmatprep.subr.bf16.mxu0 0
        %998 = vmatpush1.bf16.msra.mxu0 0
        %999 = vmatprep.subr.bf16.mxu0 0
        %1000 = vmatpush1.bf16.msra.mxu0 0
        %1001 = vmatprep.subr.bf16.mxu0 0
        %1002 = vmatpush1.bf16.msra.mxu0 0
        %1003 = vmatprep.subr.bf16.mxu0 0
        %1004 = vmatpush1.bf16.msra.mxu0 0
        %1005 = vmatprep.subr.bf16.mxu0 0
        %1006 = vmatpush1.bf16.msra.mxu0 0
        %1007 = vmatprep.subr.bf16.mxu0 0
        %1008 = vmatpush1.bf16.msra.mxu0 0
        %1009 = vmatprep.subr.bf16.mxu0 0
        %1010 = vmatpush1.bf16.msra.mxu0 0
        %1011 = vmatprep.subr.bf16.mxu0 0
        %1012 = vmatpush1.bf16.msra.mxu0 0
        %1013 = vmatprep.subr.bf16.mxu0 0
        %1014 = vmatpush1.bf16.msra.mxu0 0
        %1015 = vmatprep.subr.bf16.mxu0 0
        %1016 = vmatpush1.bf16.msra.mxu0 0
        %1017 = vmatprep.subr.bf16.mxu0 0
        %1018 = vmatpush1.bf16.msra.mxu0 0
        %1019 = vmatprep.subr.bf16.mxu0 0
        %1020 = vmatpush1.bf16.msra.mxu0 0
        %1021 = vmatprep.subr.bf16.mxu0 0
        %1022 = vmatpush1.bf16.msra.mxu0 0
        %1023 = vmatprep.subr.bf16.mxu0 0
        %1024 = vmatpush1.bf16.msra.mxu0 0
        %1025 = vmatprep.mubr.bf16.mxu0 0
        %1026 = vmatmul.mubr.bf16.gmra.mrb[0].mxu0 %v862
        %v1027 = vpop.f32.mrb[0].mxu0
        %v1028 = vadd.f32 %v838, %v1027
        %v1029 = vpop.f32.mrb[0].mxu0
        %v1030 = vadd.f32 %v840, %v1029
        %v1031 = vpop.f32.mrb[0].mxu0
        %v1032 = vadd.f32 %v842, %v1031
        %v1033 = vpop.f32.mrb[0].mxu0
        %v1034 = vadd.f32 %v844, %v1033
        %1035 = vdwg.mxu0
        %v1036 = vld [vmem:[%s502 + $0x18] sm:$0xff]
        %v1037 = vld [vmem:[%s502 + $0x20] sm:$0xff]
        %v1038 = vld [vmem:[%s502 + $0x28] sm:$0xff]
        %v1039 = vld [vmem:[%s502 + $0x30] sm:$0xff]
        %v1040 = vld [vmem:[%s502 + $0x58] sm:$0xff]
        %v1041 = vld [vmem:[%s502 + $0x60] sm:$0xff]
        %v1042 = vld [vmem:[%s502 + $0x68] sm:$0xff]
        %v1043 = vld [vmem:[%s502 + $0x70] sm:$0xff]
        %s1044 = scalar_lea.vmem %s1, 16
        %v1045 = vld [vmem:[%s1044] sm:$0xf]
        %v1046 = vld [vmem:[%s1044 + $0x4] sm:$0xf]
        %v1049 = vunpack.c.l.b16 %v1045
        %v1050 = vunpack.c.l.b16 %v1046
        %v1051 = vpack.c.b16 %v1050, %v1049
        %v1060 = vunpack.c.l.b16 %v1036
        %v1061 = vunpack.c.h.b16 %v1036
        %v1062 = vunpack.c.l.b16 %v1037
        %v1063 = vunpack.c.h.b16 %v1037
        %v1064 = vunpack.c.l.b16 %v1038
        %v1065 = vunpack.c.h.b16 %v1038
        %v1066 = vunpack.c.l.b16 %v1039
        %v1067 = vunpack.c.h.b16 %v1039
        %v1068 = vunpack.c.l.b16 %v1040
        %v1069 = vunpack.c.h.b16 %v1040
        %v1070 = vunpack.c.l.b16 %v1041
        %v1071 = vunpack.c.h.b16 %v1041
        %v1072 = vunpack.c.l.b16 %v1042
        %v1073 = vunpack.c.h.b16 %v1042
        %v1074 = vunpack.c.l.b16 %v1043
        %v1075 = vunpack.c.h.b16 %v1043
        %v1076 = vpack.c.b16 %v1068, %v1060
        %v1077 = vpack.c.b16 %v1069, %v1061
        %v1078 = vpack.c.b16 %v1070, %v1062
        %v1079 = vpack.c.b16 %v1071, %v1063
        %v1080 = vpack.c.b16 %v1072, %v1064
        %v1081 = vpack.c.b16 %v1073, %v1065
        %v1082 = vpack.c.b16 %v1074, %v1066
        %v1083 = vpack.c.b16 %v1075, %v1067
        %v1093 = vsel %vm670, %v1051, 0
        %1095 = vmatprep.subr.bf16.mxu0 %v1077
        %1096 = vmatpush1.bf16.msra.mxu0 %v1076
        %1097 = vmatprep.subr.bf16.mxu0 0
        %1098 = vmatpush1.bf16.msra.mxu0 0
        %1099 = vmatprep.subr.bf16.mxu0 0
        %1100 = vmatpush1.bf16.msra.mxu0 0
        %1101 = vmatprep.subr.bf16.mxu0 0
        %1102 = vmatpush1.bf16.msra.mxu0 0
        %1103 = vmatprep.subr.bf16.mxu0 0
        %1104 = vmatpush1.bf16.msra.mxu0 0
        %1105 = vmatprep.subr.bf16.mxu0 0
        %1106 = vmatpush1.bf16.msra.mxu0 0
        %1107 = vmatprep.subr.bf16.mxu0 0
        %1108 = vmatpush1.bf16.msra.mxu0 0
        %1109 = vmatprep.subr.bf16.mxu0 0
        %1110 = vmatpush1.bf16.msra.mxu0 0
        %1111 = vmatprep.subr.bf16.mxu0 0
        %1112 = vmatpush1.bf16.msra.mxu0 0
        %1113 = vmatprep.subr.bf16.mxu0 0
        %1114 = vmatpush1.bf16.msra.mxu0 0
        %1115 = vmatprep.subr.bf16.mxu0 0
        %1116 = vmatpush1.bf16.msra.mxu0 0
        %1117 = vmatprep.subr.bf16.mxu0 0
        %1118 = vmatpush1.bf16.msra.mxu0 0
        %1119 = vmatprep.subr.bf16.mxu0 0
        %1120 = vmatpush1.bf16.msra.mxu0 0
        %1121 = vmatprep.subr.bf16.mxu0 0
        %1122 = vmatpush1.bf16.msra.mxu0 0
        %1123 = vmatprep.subr.bf16.mxu0 0
        %1124 = vmatpush1.bf16.msra.mxu0 0
        %1125 = vmatprep.subr.bf16.mxu0 0
        %1126 = vmatpush1.bf16.msra.mxu0 0
        %1127 = vmatprep.mubr.bf16.mxu0 0
        %1128 = vmatmul.mubr.bf16.gmra.mrb[0].mxu0 %v1093
        %v1129 = vpop.f32.mrb[0].mxu0
        %v1130 = vadd.f32 0.0, %v1129
        %v1131 = vpop.f32.mrb[0].mxu0
        %v1132 = vadd.f32 0.0, %v1131
        %v1133 = vpop.f32.mrb[0].mxu0
        %v1134 = vadd.f32 0.0, %v1133
        %v1135 = vpop.f32.mrb[0].mxu0
        %v1136 = vadd.f32 0.0, %v1135
        %1137 = vdwg.mxu0
        %1138 = vmatprep.subr.bf16.mxu0 %v1079
        %1139 = vmatpush1.bf16.msra.mxu0 %v1078
        %1140 = vmatprep.subr.bf16.mxu0 0
        %1141 = vmatpush1.bf16.msra.mxu0 0
        %1142 = vmatprep.subr.bf16.mxu0 0
        %1143 = vmatpush1.bf16.msra.mxu0 0
        %1144 = vmatprep.subr.bf16.mxu0 0
        %1145 = vmatpush1.bf16.msra.mxu0 0
        %1146 = vmatprep.subr.bf16.mxu0 0
        %1147 = vmatpush1.bf16.msra.mxu0 0
        %1148 = vmatprep.subr.bf16.mxu0 0
        %1149 = vmatpush1.bf16.msra.mxu0 0
        %1150 = vmatprep.subr.bf16.mxu0 0
        %1151 = vmatpush1.bf16.msra.mxu0 0
        %1152 = vmatprep.subr.bf16.mxu0 0
        %1153 = vmatpush1.bf16.msra.mxu0 0
        %1154 = vmatprep.subr.bf16.mxu0 0
        %1155 = vmatpush1.bf16.msra.mxu0 0
        %1156 = vmatprep.subr.bf16.mxu0 0
        %1157 = vmatpush1.bf16.msra.mxu0 0
        %1158 = vmatprep.subr.bf16.mxu0 0
        %1159 = vmatpush1.bf16.msra.mxu0 0
        %1160 = vmatprep.subr.bf16.mxu0 0
        %1161 = vmatpush1.bf16.msra.mxu0 0
        %1162 = vmatprep.subr.bf16.mxu0 0
        %1163 = vmatpush1.bf16.msra.mxu0 0
        %1164 = vmatprep.subr.bf16.mxu0 0
        %1165 = vmatpush1.bf16.msra.mxu0 0
        %1166 = vmatprep.subr.bf16.mxu0 0
        %1167 = vmatpush1.bf16.msra.mxu0 0
        %1168 = vmatprep.subr.bf16.mxu0 0
        %1169 = vmatpush1.bf16.msra.mxu0 0
        %1170 = vmatprep.mubr.bf16.mxu0 0
        %1171 = vmatmul.mubr.bf16.gmra.mrb[0].mxu0 %v1093
        %v1172 = vpop.f32.mrb[0].mxu0
        %v1173 = vadd.f32 0.0, %v1172
        %v1174 = vpop.f32.mrb[0].mxu0
        %v1175 = vadd.f32 0.0, %v1174
        %v1176 = vpop.f32.mrb[0].mxu0
        %v1177 = vadd.f32 0.0, %v1176
        %v1178 = vpop.f32.mrb[0].mxu0
        %v1179 = vadd.f32 0.0, %v1178
        %1180 = vdwg.mxu0
        %1181 = vmatprep.subr.bf16.mxu0 %v1081
        %1182 = vmatpush1.bf16.msra.mxu0 %v1080
        %1183 = vmatprep.subr.bf16.mxu0 0
        %1184 = vmatpush1.bf16.msra.mxu0 0
        %1185 = vmatprep.subr.bf16.mxu0 0
        %1186 = vmatpush1.bf16.msra.mxu0 0
        %1187 = vmatprep.subr.bf16.mxu0 0
        %1188 = vmatpush1.bf16.msra.mxu0 0
        %1189 = vmatprep.subr.bf16.mxu0 0
        %1190 = vmatpush1.bf16.msra.mxu0 0
        %1191 = vmatprep.subr.bf16.mxu0 0
        %1192 = vmatpush1.bf16.msra.mxu0 0
        %1193 = vmatprep.subr.bf16.mxu0 0
        %1194 = vmatpush1.bf16.msra.mxu0 0
        %1195 = vmatprep.subr.bf16.mxu0 0
        %1196 = vmatpush1.bf16.msra.mxu0 0
        %1197 = vmatprep.subr.bf16.mxu0 0
        %1198 = vmatpush1.bf16.msra.mxu0 0
        %1199 = vmatprep.subr.bf16.mxu0 0
        %1200 = vmatpush1.bf16.msra.mxu0 0
        %1201 = vmatprep.subr.bf16.mxu0 0
        %1202 = vmatpush1.bf16.msra.mxu0 0
        %1203 = vmatprep.subr.bf16.mxu0 0
        %1204 = vmatpush1.bf16.msra.mxu0 0
        %1205 = vmatprep.subr.bf16.mxu0 0
        %1206 = vmatpush1.bf16.msra.mxu0 0
        %1207 = vmatprep.subr.bf16.mxu0 0
        %1208 = vmatpush1.bf16.msra.mxu0 0
        %1209 = vmatprep.subr.bf16.mxu0 0
        %1210 = vmatpush1.bf16.msra.mxu0 0
        %1211 = vmatprep.subr.bf16.mxu0 0
        %1212 = vmatpush1.bf16.msra.mxu0 0
        %1213 = vmatprep.mubr.bf16.mxu0 0
        %1214 = vmatmul.mubr.bf16.gmra.mrb[0].mxu0 %v1093
        %v1215 = vpop.f32.mrb[0].mxu0
        %v1216 = vadd.f32 0.0, %v1215
        %v1217 = vpop.f32.mrb[0].mxu0
        %v1218 = vadd.f32 0.0, %v1217
        %v1219 = vpop.f32.mrb[0].mxu0
        %v1220 = vadd.f32 0.0, %v1219
        %v1221 = vpop.f32.mrb[0].mxu0
        %v1222 = vadd.f32 0.0, %v1221
        %1223 = vdwg.mxu0
        %1224 = vmatprep.subr.bf16.mxu0 %v1083
        %1225 = vmatpush1.bf16.msra.mxu0 %v1082
        %1226 = vmatprep.subr.bf16.mxu0 0
        %1227 = vmatpush1.bf16.msra.mxu0 0
        %1228 = vmatprep.subr.bf16.mxu0 0
        %1229 = vmatpush1.bf16.msra.mxu0 0
        %1230 = vmatprep.subr.bf16.mxu0 0
        %1231 = vmatpush1.bf16.msra.mxu0 0
        %1232 = vmatprep.subr.bf16.mxu0 0
        %1233 = vmatpush1.bf16.msra.mxu0 0
        %1234 = vmatprep.subr.bf16.mxu0 0
        %1235 = vmatpush1.bf16.msra.mxu0 0
        %1236 = vmatprep.subr.bf16.mxu0 0
        %1237 = vmatpush1.bf16.msra.mxu0 0
        %1238 = vmatprep.subr.bf16.mxu0 0
        %1239 = vmatpush1.bf16.msra.mxu0 0
        %1240 = vmatprep.subr.bf16.mxu0 0
        %1241 = vmatpush1.bf16.msra.mxu0 0
        %1242 = vmatprep.subr.bf16.mxu0 0
        %1243 = vmatpush1.bf16.msra.mxu0 0
        %1244 = vmatprep.subr.bf16.mxu0 0
        %1245 = vmatpush1.bf16.msra.mxu0 0
        %1246 = vmatprep.subr.bf16.mxu0 0
        %1247 = vmatpush1.bf16.msra.mxu0 0
        %1248 = vmatprep.subr.bf16.mxu0 0
        %1249 = vmatpush1.bf16.msra.mxu0 0
        %1250 = vmatprep.subr.bf16.mxu0 0
        %1251 = vmatpush1.bf16.msra.mxu0 0
        %1252 = vmatprep.subr.bf16.mxu0 0
        %1253 = vmatpush1.bf16.msra.mxu0 0
        %1254 = vmatprep.subr.bf16.mxu0 0
        %1255 = vmatpush1.bf16.msra.mxu0 0
        %1256 = vmatprep.mubr.bf16.mxu0 0
        %1257 = vmatmul.mubr.bf16.gmra.mrb[0].mxu0 %v1093
        %v1258 = vpop.f32.mrb[0].mxu0
        %v1259 = vadd.f32 0.0, %v1258
        %v1260 = vpop.f32.mrb[0].mxu0
        %v1261 = vadd.f32 0.0, %v1260
        %v1262 = vpop.f32.mrb[0].mxu0
        %v1263 = vadd.f32 0.0, %v1262
        %v1264 = vpop.f32.mrb[0].mxu0
        %v1265 = vadd.f32 0.0, %v1264
        %1266 = vdwg.mxu0
        %v1267 = vadd.f32 %v899, %v1130
        %v1268 = vadd.f32 %v901, %v1132
        %v1269 = vadd.f32 %v942, %v1173
        %v1270 = vadd.f32 %v944, %v1175
        %v1271 = vadd.f32 %v985, %v1216
        %v1272 = vadd.f32 %v987, %v1218
        %v1273 = vadd.f32 %v1028, %v1259
        %v1274 = vadd.f32 %v1030, %v1261
        %v1275 = vadd.f32 %v903, %v1134
        %v1276 = vadd.f32 %v905, %v1136
        %v1277 = vadd.f32 %v946, %v1177
        %v1278 = vadd.f32 %v948, %v1179
        %v1279 = vadd.f32 %v989, %v1220
        %v1280 = vadd.f32 %v991, %v1222
        %v1281 = vadd.f32 %v1032, %v1263
        %v1282 = vadd.f32 %v1034, %v1265
        %v1283 = vld [vmem:[%s6] sm:$0xff]
        %v1284 = vld [vmem:[%s6 + $0x8] sm:$0xff]
        %1286 = vset.pattern.permute.xlu0 0
        %1287 = vperm.xlu0 %1286, %v1283
        %v1288 = vpop.permute.xlu0 %1287
        %1291 = vset.pattern.permute.xlu0 0
        %1292 = vperm.xlu0 %1291, %v1284
        %v1293 = vpop.permute.xlu0 %1292
        %v1295 = vadd.f32 %v1267, %v1288
        %v1296 = vadd.f32 %v1268, %v1288
        %v1297 = vadd.f32 %v1269, %v1288
        %v1298 = vadd.f32 %v1270, %v1288
        %v1299 = vadd.f32 %v1271, %v1288
        %v1300 = vadd.f32 %v1272, %v1288
        %v1301 = vadd.f32 %v1273, %v1288
        %v1302 = vadd.f32 %v1274, %v1288
        %v1303 = vadd.f32 %v1275, %v1293
        %v1304 = vadd.f32 %v1276, %v1293
        %v1305 = vadd.f32 %v1277, %v1293
        %v1306 = vadd.f32 %v1278, %v1293
        %v1307 = vadd.f32 %v1279, %v1293
        %v1308 = vadd.f32 %v1280, %v1293
        %v1309 = vadd.f32 %v1281, %v1293
        %v1310 = vadd.f32 %v1282, %v1293
        %vm1311 = vcmp.ge.f32.partialorder %v1295, 0.0
        %vm1312 = vcmp.ge.f32.partialorder %v1296, 0.0
        %vm1313 = vcmp.ge.f32.partialorder %v1297, 0.0
        %vm1314 = vcmp.ge.f32.partialorder %v1298, 0.0
        %vm1315 = vcmp.ge.f32.partialorder %v1299, 0.0
        %vm1316 = vcmp.ge.f32.partialorder %v1300, 0.0
        %vm1317 = vcmp.ge.f32.partialorder %v1301, 0.0
        %vm1318 = vcmp.ge.f32.partialorder %v1302, 0.0
        %vm1319 = vcmp.ge.f32.partialorder %v1303, 0.0
        %vm1320 = vcmp.ge.f32.partialorder %v1304, 0.0
        %vm1321 = vcmp.ge.f32.partialorder %v1305, 0.0
        %vm1322 = vcmp.ge.f32.partialorder %v1306, 0.0
        %vm1323 = vcmp.ge.f32.partialorder %v1307, 0.0
        %vm1324 = vcmp.ge.f32.partialorder %v1308, 0.0
        %vm1325 = vcmp.ge.f32.partialorder %v1309, 0.0
        %vm1326 = vcmp.ge.f32.partialorder %v1310, 0.0
        %v1327 = vmul.f32 %v1295, 0.1
        %v1328 = vmul.f32 %v1296, 0.1
        %v1329 = vmul.f32 %v1297, 0.1
        %v1330 = vmul.f32 %v1298, 0.1
        %v1331 = vmul.f32 %v1299, 0.1
        %v1332 = vmul.f32 %v1300, 0.1
        %v1333 = vmul.f32 %v1301, 0.1
        %v1334 = vmul.f32 %v1302, 0.1
        %v1335 = vmul.f32 %v1303, 0.1
        %v1336 = vmul.f32 %v1304, 0.1
        %v1337 = vmul.f32 %v1305, 0.1
        %v1338 = vmul.f32 %v1306, 0.1
        %v1339 = vmul.f32 %v1307, 0.1
        %v1340 = vmul.f32 %v1308, 0.1
        %v1341 = vmul.f32 %v1309, 0.1
        %v1342 = vmul.f32 %v1310, 0.1
        %v1343 = vsel %vm1311, %v1295, %v1327
        %v1344 = vsel %vm1312, %v1296, %v1328
        %v1345 = vsel %vm1313, %v1297, %v1329
        %v1346 = vsel %vm1314, %v1298, %v1330
        %v1347 = vsel %vm1315, %v1299, %v1331
        %v1348 = vsel %vm1316, %v1300, %v1332
        %v1349 = vsel %vm1317, %v1301, %v1333
        %v1350 = vsel %vm1318, %v1302, %v1334
        %v1351 = vsel %vm1319, %v1303, %v1335
        %v1352 = vsel %vm1320, %v1304, %v1336
        %v1353 = vsel %vm1321, %v1305, %v1337
        %v1354 = vsel %vm1322, %v1306, %v1338
        %v1355 = vsel %vm1323, %v1307, %v1339
        %v1356 = vsel %vm1324, %v1308, %v1340
        %v1357 = vsel %vm1325, %v1309, %v1341
        %v1358 = vsel %vm1326, %v1310, %v1342
        %1359 = vst [vmem:[%s548] sm:$0xff] %v1343
        %1360 = vst [vmem:[%s548 + $0x8] sm:$0xff] %v1344
        %1361 = vst [vmem:[%s548 + $0x10] sm:$0xff] %v1345
        %1362 = vst [vmem:[%s548 + $0x18] sm:$0xff] %v1346
        %1363 = vst [vmem:[%s548 + $0x20] sm:$0xff] %v1347
        %1364 = vst [vmem:[%s548 + $0x28] sm:$0xff] %v1348
        %1365 = vst [vmem:[%s548 + $0x30] sm:$0xff] %v1349
        %1366 = vst [vmem:[%s548 + $0x38] sm:$0xff] %v1350
        %1367 = vst [vmem:[%s548 + $0x40] sm:$0xff] %v1351
        %1368 = vst [vmem:[%s548 + $0x48] sm:$0xff] %v1352
        %1369 = vst [vmem:[%s548 + $0x50] sm:$0xff] %v1353
        %1370 = vst [vmem:[%s548 + $0x58] sm:$0xff] %v1354
        %1371 = vst [vmem:[%s548 + $0x60] sm:$0xff] %v1355
        %1372 = vst [vmem:[%s548 + $0x68] sm:$0xff] %v1356
        %1373 = vst [vmem:[%s548 + $0x70] sm:$0xff] %v1357
        %1374 = vst [vmem:[%s548 + $0x78] sm:$0xff] %v1358
        %v1375 = vpack.c.bf16 %v1351, %v1343
        %v1376 = vpack.c.bf16 %v1352, %v1344
        %v1377 = vpack.c.bf16 %v1353, %v1345
        %v1378 = vpack.c.bf16 %v1354, %v1346
        %v1379 = vpack.c.bf16 %v1355, %v1347
        %v1380 = vpack.c.bf16 %v1356, %v1348
        %v1381 = vpack.c.bf16 %v1357, %v1349
        %v1382 = vpack.c.bf16 %v1358, %v1350
        %1383 = vst [vmem:[#allocation2 + $0x20] sm:$0xff] %v1375
        %1384 = vst [vmem:[#allocation2 + $0x28] sm:$0xff] %v1376
        %1385 = vst [vmem:[#allocation2 + $0x30] sm:$0xff] %v1377
        %1386 = vst [vmem:[#allocation2 + $0x38] sm:$0xff] %v1378
        %1387 = vst [vmem:[#allocation2 + $0x40] sm:$0xff] %v1379
        %1388 = vst [vmem:[#allocation2 + $0x48] sm:$0xff] %v1380
        %1389 = vst [vmem:[#allocation2 + $0x50] sm:$0xff] %v1381
        %1390 = vst [vmem:[#allocation2 + $0x58] sm:$0xff] %v1382
        %v1391 = vld [vmem:[#allocation2 + $0x10] sm:$0xff]
        %v1392 = vld [vmem:[#allocation2 + $0x18] sm:$0xff]
        %v1393 = vld [vmem:[#allocation2 + $0x20] sm:$0xff]
        %v1394 = vld [vmem:[#allocation2 + $0x28] sm:$0xff]
        %v1395 = vld [vmem:[#allocation2 + $0x30] sm:$0xff]
        %v1396 = vld [vmem:[#allocation2 + $0x38] sm:$0xff]
        %v1397 = vld [vmem:[#allocation2 + $0x40] sm:$0xff]
        %v1398 = vld [vmem:[#allocation2 + $0x48] sm:$0xff]
        %v1399 = vld [vmem:[%s2] sm:$0xf]
        %v1400 = vld [vmem:[%s2 + $0x4] sm:$0xf]
        %v1401 = vld [vmem:[#allocation2 + $0x50] sm:$0xff]
        %v1402 = vld [vmem:[#allocation2 + $0x58] sm:$0xff]
        %s1403 = scalar_lea.vmem %s2, 8
        %v1404 = vld [vmem:[%s1403] sm:$0xf]
        %v1405 = vld [vmem:[%s1403 + $0x4] sm:$0xf]
        %v1408 = vunpack.c.l.b16 %v1404
        %v1409 = vunpack.c.l.b16 %v1405
        %v1410 = vpack.c.b16 %v1409, %v1408
        %v1412 = vsel %vm670, %v1410, 0
        %1414 = vmatprep.subr.bf16.mxu0 %v1394
        %1415 = vmatpush1.bf16.msra.mxu0 %v1393
        %1416 = vmatprep.subr.bf16.mxu0 0
        %1417 = vmatpush1.bf16.msra.mxu0 0
        %1418 = vmatprep.subr.bf16.mxu0 0
        %1419 = vmatpush1.bf16.msra.mxu0 0
        %1420 = vmatprep.subr.bf16.mxu0 0
        %1421 = vmatpush1.bf16.msra.mxu0 0
        %1422 = vmatprep.subr.bf16.mxu0 0
        %1423 = vmatpush1.bf16.msra.mxu0 0
        %1424 = vmatprep.subr.bf16.mxu0 0
        %1425 = vmatpush1.bf16.msra.mxu0 0
        %1426 = vmatprep.subr.bf16.mxu0 0
        %1427 = vmatpush1.bf16.msra.mxu0 0
        %1428 = vmatprep.subr.bf16.mxu0 0
        %1429 = vmatpush1.bf16.msra.mxu0 0
        %1430 = vmatprep.subr.bf16.mxu0 0
        %1431 = vmatpush1.bf16.msra.mxu0 0
        %1432 = vmatprep.subr.bf16.mxu0 0
        %1433 = vmatpush1.bf16.msra.mxu0 0
        %1434 = vmatprep.subr.bf16.mxu0 0
        %1435 = vmatpush1.bf16.msra.mxu0 0
        %1436 = vmatprep.subr.bf16.mxu0 0
        %1437 = vmatpush1.bf16.msra.mxu0 0
        %1438 = vmatprep.subr.bf16.mxu0 0
        %1439 = vmatpush1.bf16.msra.mxu0 0
        %1440 = vmatprep.subr.bf16.mxu0 0
        %1441 = vmatpush1.bf16.msra.mxu0 0
        %1442 = vmatprep.subr.bf16.mxu0 0
        %1443 = vmatpush1.bf16.msra.mxu0 0
        %1444 = vmatprep.subr.bf16.mxu0 0
        %1445 = vmatpush1.bf16.msra.mxu0 0
        %1446 = vmatprep.mubr.bf16.mxu0 0
        %1447 = vmatmul.mubr.bf16.gmra.mrb[0].mxu0 %v1412
        %v1448 = vpop.f32.mrb[0].mxu0
        %v1449 = vadd.f32 0.0, %v1448
        %v1450 = vpop.f32.mrb[0].mxu0
        %v1451 = vadd.f32 0.0, %v1450
        %v1452 = vpop.f32.mrb[0].mxu0
        %v1453 = vadd.f32 0.0, %v1452
        %v1454 = vpop.f32.mrb[0].mxu0
        %v1455 = vadd.f32 0.0, %v1454
        %1456 = vdwg.mxu0
        %1457 = vmatprep.subr.bf16.mxu0 %v1396
        %1458 = vmatpush1.bf16.msra.mxu0 %v1395
        %1459 = vmatprep.subr.bf16.mxu0 0
        %1460 = vmatpush1.bf16.msra.mxu0 0
        %1461 = vmatprep.subr.bf16.mxu0 0
        %1462 = vmatpush1.bf16.msra.mxu0 0
        %1463 = vmatprep.subr.bf16.mxu0 0
        %1464 = vmatpush1.bf16.msra.mxu0 0
        %1465 = vmatprep.subr.bf16.mxu0 0
        %1466 = vmatpush1.bf16.msra.mxu0 0
        %1467 = vmatprep.subr.bf16.mxu0 0
        %1468 = vmatpush1.bf16.msra.mxu0 0
        %1469 = vmatprep.subr.bf16.mxu0 0
        %1470 = vmatpush1.bf16.msra.mxu0 0
        %1471 = vmatprep.subr.bf16.mxu0 0
        %1472 = vmatpush1.bf16.msra.mxu0 0
        %1473 = vmatprep.subr.bf16.mxu0 0
        %1474 = vmatpush1.bf16.msra.mxu0 0
        %1475 = vmatprep.subr.bf16.mxu0 0
        %1476 = vmatpush1.bf16.msra.mxu0 0
        %1477 = vmatprep.subr.bf16.mxu0 0
        %1478 = vmatpush1.bf16.msra.mxu0 0
        %1479 = vmatprep.subr.bf16.mxu0 0
        %1480 = vmatpush1.bf16.msra.mxu0 0
        %1481 = vmatprep.subr.bf16.mxu0 0
        %1482 = vmatpush1.bf16.msra.mxu0 0
        %1483 = vmatprep.subr.bf16.mxu0 0
        %1484 = vmatpush1.bf16.msra.mxu0 0
        %1485 = vmatprep.subr.bf16.mxu0 0
        %1486 = vmatpush1.bf16.msra.mxu0 0
        %1487 = vmatprep.subr.bf16.mxu0 0
        %1488 = vmatpush1.bf16.msra.mxu0 0
        %1489 = vmatprep.mubr.bf16.mxu0 0
        %1490 = vmatmul.mubr.bf16.gmra.mrb[0].mxu0 %v1412
        %v1491 = vpop.f32.mrb[0].mxu0
        %v1492 = vadd.f32 0.0, %v1491
        %v1493 = vpop.f32.mrb[0].mxu0
        %v1494 = vadd.f32 0.0, %v1493
        %v1495 = vpop.f32.mrb[0].mxu0
        %v1496 = vadd.f32 0.0, %v1495
        %v1497 = vpop.f32.mrb[0].mxu0
        %v1498 = vadd.f32 0.0, %v1497
        %1499 = vdwg.mxu0
        %1500 = vmatprep.subr.bf16.mxu0 %v1398
        %1501 = vmatpush1.bf16.msra.mxu0 %v1397
        %1502 = vmatprep.subr.bf16.mxu0 0
        %1503 = vmatpush1.bf16.msra.mxu0 0
        %1504 = vmatprep.subr.bf16.mxu0 0
        %1505 = vmatpush1.bf16.msra.mxu0 0
        %1506 = vmatprep.subr.bf16.mxu0 0
        %1507 = vmatpush1.bf16.msra.mxu0 0
        %1508 = vmatprep.subr.bf16.mxu0 0
        %1509 = vmatpush1.bf16.msra.mxu0 0
        %1510 = vmatprep.subr.bf16.mxu0 0
        %1511 = vmatpush1.bf16.msra.mxu0 0
        %1512 = vmatprep.subr.bf16.mxu0 0
        %1513 = vmatpush1.bf16.msra.mxu0 0
        %1514 = vmatprep.subr.bf16.mxu0 0
        %1515 = vmatpush1.bf16.msra.mxu0 0
        %1516 = vmatprep.subr.bf16.mxu0 0
        %1517 = vmatpush1.bf16.msra.mxu0 0
        %1518 = vmatprep.subr.bf16.mxu0 0
        %1519 = vmatpush1.bf16.msra.mxu0 0
        %1520 = vmatprep.subr.bf16.mxu0 0
        %1521 = vmatpush1.bf16.msra.mxu0 0
        %1522 = vmatprep.subr.bf16.mxu0 0
        %1523 = vmatpush1.bf16.msra.mxu0 0
        %1524 = vmatprep.subr.bf16.mxu0 0
        %1525 = vmatpush1.bf16.msra.mxu0 0
        %1526 = vmatprep.subr.bf16.mxu0 0
        %1527 = vmatpush1.bf16.msra.mxu0 0
        %1528 = vmatprep.subr.bf16.mxu0 0
        %1529 = vmatpush1.bf16.msra.mxu0 0
        %1530 = vmatprep.subr.bf16.mxu0 0
        %1531 = vmatpush1.bf16.msra.mxu0 0
        %1532 = vmatprep.mubr.bf16.mxu0 0
        %1533 = vmatmul.mubr.bf16.gmra.mrb[0].mxu0 %v1412
        %v1534 = vpop.f32.mrb[0].mxu0
        %v1535 = vadd.f32 0.0, %v1534
        %v1536 = vpop.f32.mrb[0].mxu0
        %v1537 = vadd.f32 0.0, %v1536
        %v1538 = vpop.f32.mrb[0].mxu0
        %v1539 = vadd.f32 0.0, %v1538
        %v1540 = vpop.f32.mrb[0].mxu0
        %v1541 = vadd.f32 0.0, %v1540
        %1542 = vdwg.mxu0
        %1543 = vmatprep.subr.bf16.mxu0 %v1402
        %1544 = vmatpush1.bf16.msra.mxu0 %v1401
        %1545 = vmatprep.subr.bf16.mxu0 0
        %1546 = vmatpush1.bf16.msra.mxu0 0
        %1547 = vmatprep.subr.bf16.mxu0 0
        %1548 = vmatpush1.bf16.msra.mxu0 0
        %1549 = vmatprep.subr.bf16.mxu0 0
        %1550 = vmatpush1.bf16.msra.mxu0 0
        %1551 = vmatprep.subr.bf16.mxu0 0
        %1552 = vmatpush1.bf16.msra.mxu0 0
        %1553 = vmatprep.subr.bf16.mxu0 0
        %1554 = vmatpush1.bf16.msra.mxu0 0
        %1555 = vmatprep.subr.bf16.mxu0 0
        %1556 = vmatpush1.bf16.msra.mxu0 0
        %1557 = vmatprep.subr.bf16.mxu0 0
        %1558 = vmatpush1.bf16.msra.mxu0 0
        %1559 = vmatprep.subr.bf16.mxu0 0
        %1560 = vmatpush1.bf16.msra.mxu0 0
        %1561 = vmatprep.subr.bf16.mxu0 0
        %1562 = vmatpush1.bf16.msra.mxu0 0
        %1563 = vmatprep.subr.bf16.mxu0 0
        %1564 = vmatpush1.bf16.msra.mxu0 0
        %1565 = vmatprep.subr.bf16.mxu0 0
        %1566 = vmatpush1.bf16.msra.mxu0 0
        %1567 = vmatprep.subr.bf16.mxu0 0
        %1568 = vmatpush1.bf16.msra.mxu0 0
        %1569 = vmatprep.subr.bf16.mxu0 0
        %1570 = vmatpush1.bf16.msra.mxu0 0
        %1571 = vmatprep.subr.bf16.mxu0 0
        %1572 = vmatpush1.bf16.msra.mxu0 0
        %1573 = vmatprep.subr.bf16.mxu0 0
        %1574 = vmatpush1.bf16.msra.mxu0 0
        %1575 = vmatprep.mubr.bf16.mxu0 0
        %1576 = vmatmul.mubr.bf16.gmra.mrb[0].mxu0 %v1412
        %v1577 = vpop.f32.mrb[0].mxu0
        %v1578 = vadd.f32 0.0, %v1577
        %v1579 = vpop.f32.mrb[0].mxu0
        %v1580 = vadd.f32 0.0, %v1579
        %v1581 = vpop.f32.mrb[0].mxu0
        %v1582 = vadd.f32 0.0, %v1581
        %v1583 = vpop.f32.mrb[0].mxu0
        %v1584 = vadd.f32 0.0, %v1583
        %1585 = vdwg.mxu0
        %v1588 = vunpack.c.l.b16 %v1399
        %v1589 = vunpack.c.l.b16 %v1400
        %v1590 = vpack.c.b16 %v1589, %v1588
        %v1592 = vsel %vm670, %v1590, 0
        %1594 = vmatprep.subr.bf16.mxu0 %v1392
        %1595 = vmatpush1.bf16.msra.mxu0 %v1391
        %1596 = vmatprep.subr.bf16.mxu0 0
        %1597 = vmatpush1.bf16.msra.mxu0 0
        %1598 = vmatprep.subr.bf16.mxu0 0
        %1599 = vmatpush1.bf16.msra.mxu0 0
        %1600 = vmatprep.subr.bf16.mxu0 0
        %1601 = vmatpush1.bf16.msra.mxu0 0
        %1602 = vmatprep.subr.bf16.mxu0 0
        %1603 = vmatpush1.bf16.msra.mxu0 0
        %1604 = vmatprep.subr.bf16.mxu0 0
        %1605 = vmatpush1.bf16.msra.mxu0 0
        %1606 = vmatprep.subr.bf16.mxu0 0
        %1607 = vmatpush1.bf16.msra.mxu0 0
        %1608 = vmatprep.subr.bf16.mxu0 0
        %1609 = vmatpush1.bf16.msra.mxu0 0
        %1610 = vmatprep.subr.bf16.mxu0 0
        %1611 = vmatpush1.bf16.msra.mxu0 0
        %1612 = vmatprep.subr.bf16.mxu0 0
        %1613 = vmatpush1.bf16.msra.mxu0 0
        %1614 = vmatprep.subr.bf16.mxu0 0
        %1615 = vmatpush1.bf16.msra.mxu0 0
        %1616 = vmatprep.subr.bf16.mxu0 0
        %1617 = vmatpush1.bf16.msra.mxu0 0
        %1618 = vmatprep.subr.bf16.mxu0 0
        %1619 = vmatpush1.bf16.msra.mxu0 0
        %1620 = vmatprep.subr.bf16.mxu0 0
        %1621 = vmatpush1.bf16.msra.mxu0 0
        %1622 = vmatprep.subr.bf16.mxu0 0
        %1623 = vmatpush1.bf16.msra.mxu0 0
        %1624 = vmatprep.subr.bf16.mxu0 0
        %1625 = vmatpush1.bf16.msra.mxu0 0
        %1626 = vmatprep.mubr.bf16.mxu0 0
        %1627 = vmatmul.mubr.bf16.gmra.mrb[0].mxu0 %v1592
        %v1628 = vpop.f32.mrb[0].mxu0
        %v1629 = vadd.f32 %v1449, %v1628
        %v1630 = vpop.f32.mrb[0].mxu0
        %v1631 = vadd.f32 %v1451, %v1630
        %v1632 = vpop.f32.mrb[0].mxu0
        %v1633 = vadd.f32 %v1453, %v1632
        %v1634 = vpop.f32.mrb[0].mxu0
        %v1635 = vadd.f32 %v1455, %v1634
        %1636 = vdwg.mxu0
        %1637 = vmatprep.subr.bf16.mxu0 %v1394
        %1638 = vmatpush1.bf16.msra.mxu0 %v1393
        %1639 = vmatprep.subr.bf16.mxu0 0
        %1640 = vmatpush1.bf16.msra.mxu0 0
        %1641 = vmatprep.subr.bf16.mxu0 0
        %1642 = vmatpush1.bf16.msra.mxu0 0
        %1643 = vmatprep.subr.bf16.mxu0 0
        %1644 = vmatpush1.bf16.msra.mxu0 0
        %1645 = vmatprep.subr.bf16.mxu0 0
        %1646 = vmatpush1.bf16.msra.mxu0 0
        %1647 = vmatprep.subr.bf16.mxu0 0
        %1648 = vmatpush1.bf16.msra.mxu0 0
        %1649 = vmatprep.subr.bf16.mxu0 0
        %1650 = vmatpush1.bf16.msra.mxu0 0
        %1651 = vmatprep.subr.bf16.mxu0 0
        %1652 = vmatpush1.bf16.msra.mxu0 0
        %1653 = vmatprep.subr.bf16.mxu0 0
        %1654 = vmatpush1.bf16.msra.mxu0 0
        %1655 = vmatprep.subr.bf16.mxu0 0
        %1656 = vmatpush1.bf16.msra.mxu0 0
        %1657 = vmatprep.subr.bf16.mxu0 0
        %1658 = vmatpush1.bf16.msra.mxu0 0
        %1659 = vmatprep.subr.bf16.mxu0 0
        %1660 = vmatpush1.bf16.msra.mxu0 0
        %1661 = vmatprep.subr.bf16.mxu0 0
        %1662 = vmatpush1.bf16.msra.mxu0 0
        %1663 = vmatprep.subr.bf16.mxu0 0
        %1664 = vmatpush1.bf16.msra.mxu0 0
        %1665 = vmatprep.subr.bf16.mxu0 0
        %1666 = vmatpush1.bf16.msra.mxu0 0
        %1667 = vmatprep.subr.bf16.mxu0 0
        %1668 = vmatpush1.bf16.msra.mxu0 0
        %1669 = vmatprep.mubr.bf16.mxu0 0
        %1670 = vmatmul.mubr.bf16.gmra.mrb[0].mxu0 %v1592
        %v1671 = vpop.f32.mrb[0].mxu0
        %v1672 = vadd.f32 %v1492, %v1671
        %v1673 = vpop.f32.mrb[0].mxu0
        %v1674 = vadd.f32 %v1494, %v1673
        %v1675 = vpop.f32.mrb[0].mxu0
        %v1676 = vadd.f32 %v1496, %v1675
        %v1677 = vpop.f32.mrb[0].mxu0
        %v1678 = vadd.f32 %v1498, %v1677
        %1679 = vdwg.mxu0
        %1680 = vmatprep.subr.bf16.mxu0 %v1396
        %1681 = vmatpush1.bf16.msra.mxu0 %v1395
        %1682 = vmatprep.subr.bf16.mxu0 0
        %1683 = vmatpush1.bf16.msra.mxu0 0
        %1684 = vmatprep.subr.bf16.mxu0 0
        %1685 = vmatpush1.bf16.msra.mxu0 0
        %1686 = vmatprep.subr.bf16.mxu0 0
        %1687 = vmatpush1.bf16.msra.mxu0 0
        %1688 = vmatprep.subr.bf16.mxu0 0
        %1689 = vmatpush1.bf16.msra.mxu0 0
        %1690 = vmatprep.subr.bf16.mxu0 0
        %1691 = vmatpush1.bf16.msra.mxu0 0
        %1692 = vmatprep.subr.bf16.mxu0 0
        %1693 = vmatpush1.bf16.msra.mxu0 0
        %1694 = vmatprep.subr.bf16.mxu0 0
        %1695 = vmatpush1.bf16.msra.mxu0 0
        %1696 = vmatprep.subr.bf16.mxu0 0
        %1697 = vmatpush1.bf16.msra.mxu0 0
        %1698 = vmatprep.subr.bf16.mxu0 0
        %1699 = vmatpush1.bf16.msra.mxu0 0
        %1700 = vmatprep.subr.bf16.mxu0 0
        %1701 = vmatpush1.bf16.msra.mxu0 0
        %1702 = vmatprep.subr.bf16.mxu0 0
        %1703 = vmatpush1.bf16.msra.mxu0 0
        %1704 = vmatprep.subr.bf16.mxu0 0
        %1705 = vmatpush1.bf16.msra.mxu0 0
        %1706 = vmatprep.subr.bf16.mxu0 0
        %1707 = vmatpush1.bf16.msra.mxu0 0
        %1708 = vmatprep.subr.bf16.mxu0 0
        %1709 = vmatpush1.bf16.msra.mxu0 0
        %1710 = vmatprep.subr.bf16.mxu0 0
        %1711 = vmatpush1.bf16.msra.mxu0 0
        %1712 = vmatprep.mubr.bf16.mxu0 0
        %1713 = vmatmul.mubr.bf16.gmra.mrb[0].mxu0 %v1592
        %v1714 = vpop.f32.mrb[0].mxu0
        %v1715 = vadd.f32 %v1535, %v1714
        %v1716 = vpop.f32.mrb[0].mxu0
        %v1717 = vadd.f32 %v1537, %v1716
        %v1718 = vpop.f32.mrb[0].mxu0
        %v1719 = vadd.f32 %v1539, %v1718
        %v1720 = vpop.f32.mrb[0].mxu0
        %v1721 = vadd.f32 %v1541, %v1720
        %1722 = vdwg.mxu0
        %1723 = vmatprep.subr.bf16.mxu0 %v1398
        %1724 = vmatpush1.bf16.msra.mxu0 %v1397
        %1725 = vmatprep.subr.bf16.mxu0 0
        %1726 = vmatpush1.bf16.msra.mxu0 0
        %1727 = vmatprep.subr.bf16.mxu0 0
        %1728 = vmatpush1.bf16.msra.mxu0 0
        %1729 = vmatprep.subr.bf16.mxu0 0
        %1730 = vmatpush1.bf16.msra.mxu0 0
        %1731 = vmatprep.subr.bf16.mxu0 0
        %1732 = vmatpush1.bf16.msra.mxu0 0
        %1733 = vmatprep.subr.bf16.mxu0 0
        %1734 = vmatpush1.bf16.msra.mxu0 0
        %1735 = vmatprep.subr.bf16.mxu0 0
        %1736 = vmatpush1.bf16.msra.mxu0 0
        %1737 = vmatprep.subr.bf16.mxu0 0
        %1738 = vmatpush1.bf16.msra.mxu0 0
        %1739 = vmatprep.subr.bf16.mxu0 0
        %1740 = vmatpush1.bf16.msra.mxu0 0
        %1741 = vmatprep.subr.bf16.mxu0 0
        %1742 = vmatpush1.bf16.msra.mxu0 0
        %1743 = vmatprep.subr.bf16.mxu0 0
        %1744 = vmatpush1.bf16.msra.mxu0 0
        %1745 = vmatprep.subr.bf16.mxu0 0
        %1746 = vmatpush1.bf16.msra.mxu0 0
        %1747 = vmatprep.subr.bf16.mxu0 0
        %1748 = vmatpush1.bf16.msra.mxu0 0
        %1749 = vmatprep.subr.bf16.mxu0 0
        %1750 = vmatpush1.bf16.msra.mxu0 0
        %1751 = vmatprep.subr.bf16.mxu0 0
        %1752 = vmatpush1.bf16.msra.mxu0 0
        %1753 = vmatprep.subr.bf16.mxu0 0
        %1754 = vmatpush1.bf16.msra.mxu0 0
        %1755 = vmatprep.mubr.bf16.mxu0 0
        %1756 = vmatmul.mubr.bf16.gmra.mrb[0].mxu0 %v1592
        %v1757 = vpop.f32.mrb[0].mxu0
        %v1758 = vadd.f32 %v1578, %v1757
        %v1759 = vpop.f32.mrb[0].mxu0
        %v1760 = vadd.f32 %v1580, %v1759
        %v1761 = vpop.f32.mrb[0].mxu0
        %v1762 = vadd.f32 %v1582, %v1761
        %v1763 = vpop.f32.mrb[0].mxu0
        %v1764 = vadd.f32 %v1584, %v1763
        %1765 = vdwg.mxu0
        %v1766 = vld [vmem:[#allocation2 + $0x30] sm:$0xff]
        %v1767 = vld [vmem:[#allocation2 + $0x38] sm:$0xff]
        %v1768 = vld [vmem:[#allocation2 + $0x40] sm:$0xff]
        %v1769 = vld [vmem:[#allocation2 + $0x48] sm:$0xff]
        %v1770 = vld [vmem:[#allocation2 + $0x50] sm:$0xff]
        %v1771 = vld [vmem:[#allocation2 + $0x58] sm:$0xff]
        %v1772 = vld [vmem:[#allocation2 + $0x60] sm:$0xff]
        %v1773 = vld [vmem:[#allocation2 + $0x68] sm:$0xff]
        %s1774 = scalar_lea.vmem %s2, 16
        %v1775 = vld [vmem:[%s1774] sm:$0xf]
        %v1776 = vld [vmem:[%s1774 + $0x4] sm:$0xf]
        %v1779 = vunpack.c.l.b16 %v1775
        %v1780 = vunpack.c.l.b16 %v1776
        %v1781 = vpack.c.b16 %v1780, %v1779
        %v1783 = vsel %vm670, %v1781, 0
        %1785 = vmatprep.subr.bf16.mxu0 %v1767
        %1786 = vmatpush1.bf16.msra.mxu0 %v1766
        %1787 = vmatprep.subr.bf16.mxu0 0
        %1788 = vmatpush1.bf16.msra.mxu0 0
        %1789 = vmatprep.subr.bf16.mxu0 0
        %1790 = vmatpush1.bf16.msra.mxu0 0
        %1791 = vmatprep.subr.bf16.mxu0 0
        %1792 = vmatpush1.bf16.msra.mxu0 0
        %1793 = vmatprep.subr.bf16.mxu0 0
        %1794 = vmatpush1.bf16.msra.mxu0 0
        %1795 = vmatprep.subr.bf16.mxu0 0
        %1796 = vmatpush1.bf16.msra.mxu0 0
        %1797 = vmatprep.subr.bf16.mxu0 0
        %1798 = vmatpush1.bf16.msra.mxu0 0
        %1799 = vmatprep.subr.bf16.mxu0 0
        %1800 = vmatpush1.bf16.msra.mxu0 0
        %1801 = vmatprep.subr.bf16.mxu0 0
        %1802 = vmatpush1.bf16.msra.mxu0 0
        %1803 = vmatprep.subr.bf16.mxu0 0
        %1804 = vmatpush1.bf16.msra.mxu0 0
        %1805 = vmatprep.subr.bf16.mxu0 0
        %1806 = vmatpush1.bf16.msra.mxu0 0
        %1807 = vmatprep.subr.bf16.mxu0 0
        %1808 = vmatpush1.bf16.msra.mxu0 0
        %1809 = vmatprep.subr.bf16.mxu0 0
        %1810 = vmatpush1.bf16.msra.mxu0 0
        %1811 = vmatprep.subr.bf16.mxu0 0
        %1812 = vmatpush1.bf16.msra.mxu0 0
        %1813 = vmatprep.subr.bf16.mxu0 0
        %1814 = vmatpush1.bf16.msra.mxu0 0
        %1815 = vmatprep.subr.bf16.mxu0 0
        %1816 = vmatpush1.bf16.msra.mxu0 0
        %1817 = vmatprep.mubr.bf16.mxu0 0
        %1818 = vmatmul.mubr.bf16.gmra.mrb[0].mxu0 %v1783
        %v1819 = vpop.f32.mrb[0].mxu0
        %v1820 = vadd.f32 0.0, %v1819
        %v1821 = vpop.f32.mrb[0].mxu0
        %v1822 = vadd.f32 0.0, %v1821
        %v1823 = vpop.f32.mrb[0].mxu0
        %v1824 = vadd.f32 0.0, %v1823
        %v1825 = vpop.f32.mrb[0].mxu0
        %v1826 = vadd.f32 0.0, %v1825
        %1827 = vdwg.mxu0
        %1828 = vmatprep.subr.bf16.mxu0 %v1769
        %1829 = vmatpush1.bf16.msra.mxu0 %v1768
        %1830 = vmatprep.subr.bf16.mxu0 0
        %1831 = vmatpush1.bf16.msra.mxu0 0
        %1832 = vmatprep.subr.bf16.mxu0 0
        %1833 = vmatpush1.bf16.msra.mxu0 0
        %1834 = vmatprep.subr.bf16.mxu0 0
        %1835 = vmatpush1.bf16.msra.mxu0 0
        %1836 = vmatprep.subr.bf16.mxu0 0
        %1837 = vmatpush1.bf16.msra.mxu0 0
        %1838 = vmatprep.subr.bf16.mxu0 0
        %1839 = vmatpush1.bf16.msra.mxu0 0
        %1840 = vmatprep.subr.bf16.mxu0 0
        %1841 = vmatpush1.bf16.msra.mxu0 0
        %1842 = vmatprep.subr.bf16.mxu0 0
        %1843 = vmatpush1.bf16.msra.mxu0 0
        %1844 = vmatprep.subr.bf16.mxu0 0
        %1845 = vmatpush1.bf16.msra.mxu0 0
        %1846 = vmatprep.subr.bf16.mxu0 0
        %1847 = vmatpush1.bf16.msra.mxu0 0
        %1848 = vmatprep.subr.bf16.mxu0 0
        %1849 = vmatpush1.bf16.msra.mxu0 0
        %1850 = vmatprep.subr.bf16.mxu0 0
        %1851 = vmatpush1.bf16.msra.mxu0 0
        %1852 = vmatprep.subr.bf16.mxu0 0
        %1853 = vmatpush1.bf16.msra.mxu0 0
        %1854 = vmatprep.subr.bf16.mxu0 0
        %1855 = vmatpush1.bf16.msra.mxu0 0
        %1856 = vmatprep.subr.bf16.mxu0 0
        %1857 = vmatpush1.bf16.msra.mxu0 0
        %1858 = vmatprep.subr.bf16.mxu0 0
        %1859 = vmatpush1.bf16.msra.mxu0 0
        %1860 = vmatprep.mubr.bf16.mxu0 0
        %1861 = vmatmul.mubr.bf16.gmra.mrb[0].mxu0 %v1783
        %v1862 = vpop.f32.mrb[0].mxu0
        %v1863 = vadd.f32 0.0, %v1862
        %v1864 = vpop.f32.mrb[0].mxu0
        %v1865 = vadd.f32 0.0, %v1864
        %v1866 = vpop.f32.mrb[0].mxu0
        %v1867 = vadd.f32 0.0, %v1866
        %v1868 = vpop.f32.mrb[0].mxu0
        %v1869 = vadd.f32 0.0, %v1868
        %1870 = vdwg.mxu0
        %1871 = vmatprep.subr.bf16.mxu0 %v1771
        %1872 = vmatpush1.bf16.msra.mxu0 %v1770
        %1873 = vmatprep.subr.bf16.mxu0 0
        %1874 = vmatpush1.bf16.msra.mxu0 0
        %1875 = vmatprep.subr.bf16.mxu0 0
        %1876 = vmatpush1.bf16.msra.mxu0 0
        %1877 = vmatprep.subr.bf16.mxu0 0
        %1878 = vmatpush1.bf16.msra.mxu0 0
        %1879 = vmatprep.subr.bf16.mxu0 0
        %1880 = vmatpush1.bf16.msra.mxu0 0
        %1881 = vmatprep.subr.bf16.mxu0 0
        %1882 = vmatpush1.bf16.msra.mxu0 0
        %1883 = vmatprep.subr.bf16.mxu0 0
        %1884 = vmatpush1.bf16.msra.mxu0 0
        %1885 = vmatprep.subr.bf16.mxu0 0
        %1886 = vmatpush1.bf16.msra.mxu0 0
        %1887 = vmatprep.subr.bf16.mxu0 0
        %1888 = vmatpush1.bf16.msra.mxu0 0
        %1889 = vmatprep.subr.bf16.mxu0 0
        %1890 = vmatpush1.bf16.msra.mxu0 0
        %1891 = vmatprep.subr.bf16.mxu0 0
        %1892 = vmatpush1.bf16.msra.mxu0 0
        %1893 = vmatprep.subr.bf16.mxu0 0
        %1894 = vmatpush1.bf16.msra.mxu0 0
        %1895 = vmatprep.subr.bf16.mxu0 0
        %1896 = vmatpush1.bf16.msra.mxu0 0
        %1897 = vmatprep.subr.bf16.mxu0 0
        %1898 = vmatpush1.bf16.msra.mxu0 0
        %1899 = vmatprep.subr.bf16.mxu0 0
        %1900 = vmatpush1.bf16.msra.mxu0 0
        %1901 = vmatprep.subr.bf16.mxu0 0
        %1902 = vmatpush1.bf16.msra.mxu0 0
        %1903 = vmatprep.mubr.bf16.mxu0 0
        %1904 = vmatmul.mubr.bf16.gmra.mrb[0].mxu0 %v1783
        %v1905 = vpop.f32.mrb[0].mxu0
        %v1906 = vadd.f32 0.0, %v1905
        %v1907 = vpop.f32.mrb[0].mxu0
        %v1908 = vadd.f32 0.0, %v1907
        %v1909 = vpop.f32.mrb[0].mxu0
        %v1910 = vadd.f32 0.0, %v1909
        %v1911 = vpop.f32.mrb[0].mxu0
        %v1912 = vadd.f32 0.0, %v1911
        %1913 = vdwg.mxu0
        %1914 = vmatprep.subr.bf16.mxu0 %v1773
        %1915 = vmatpush1.bf16.msra.mxu0 %v1772
        %1916 = vmatprep.subr.bf16.mxu0 0
        %1917 = vmatpush1.bf16.msra.mxu0 0
        %1918 = vmatprep.subr.bf16.mxu0 0
        %1919 = vmatpush1.bf16.msra.mxu0 0
        %1920 = vmatprep.subr.bf16.mxu0 0
        %1921 = vmatpush1.bf16.msra.mxu0 0
        %1922 = vmatprep.subr.bf16.mxu0 0
        %1923 = vmatpush1.bf16.msra.mxu0 0
        %1924 = vmatprep.subr.bf16.mxu0 0
        %1925 = vmatpush1.bf16.msra.mxu0 0
        %1926 = vmatprep.subr.bf16.mxu0 0
        %1927 = vmatpush1.bf16.msra.mxu0 0
        %1928 = vmatprep.subr.bf16.mxu0 0
        %1929 = vmatpush1.bf16.msra.mxu0 0
        %1930 = vmatprep.subr.bf16.mxu0 0
        %1931 = vmatpush1.bf16.msra.mxu0 0
        %1932 = vmatprep.subr.bf16.mxu0 0
        %1933 = vmatpush1.bf16.msra.mxu0 0
        %1934 = vmatprep.subr.bf16.mxu0 0
        %1935 = vmatpush1.bf16.msra.mxu0 0
        %1936 = vmatprep.subr.bf16.mxu0 0
        %1937 = vmatpush1.bf16.msra.mxu0 0
        %1938 = vmatprep.subr.bf16.mxu0 0
        %1939 = vmatpush1.bf16.msra.mxu0 0
        %1940 = vmatprep.subr.bf16.mxu0 0
        %1941 = vmatpush1.bf16.msra.mxu0 0
        %1942 = vmatprep.subr.bf16.mxu0 0
        %1943 = vmatpush1.bf16.msra.mxu0 0
        %1944 = vmatprep.subr.bf16.mxu0 0
        %1945 = vmatpush1.bf16.msra.mxu0 0
        %1946 = vmatprep.mubr.bf16.mxu0 0
        %1947 = vmatmul.mubr.bf16.gmra.mrb[0].mxu0 %v1783
        %v1948 = vpop.f32.mrb[0].mxu0
        %v1949 = vadd.f32 0.0, %v1948
        %v1950 = vpop.f32.mrb[0].mxu0
        %v1951 = vadd.f32 0.0, %v1950
        %v1952 = vpop.f32.mrb[0].mxu0
        %v1953 = vadd.f32 0.0, %v1952
        %v1954 = vpop.f32.mrb[0].mxu0
        %v1955 = vadd.f32 0.0, %v1954
        %1956 = vdwg.mxu0
        %v1957 = vadd.f32 %v1629, %v1820
        %v1958 = vadd.f32 %v1631, %v1822
        %v1959 = vadd.f32 %v1672, %v1863
        %v1960 = vadd.f32 %v1674, %v1865
        %v1961 = vadd.f32 %v1715, %v1906
        %v1962 = vadd.f32 %v1717, %v1908
        %v1963 = vadd.f32 %v1758, %v1949
        %v1964 = vadd.f32 %v1760, %v1951
        %v1965 = vadd.f32 %v1633, %v1824
        %v1966 = vadd.f32 %v1635, %v1826
        %v1967 = vadd.f32 %v1676, %v1867
        %v1968 = vadd.f32 %v1678, %v1869
        %v1969 = vadd.f32 %v1719, %v1910
        %v1970 = vadd.f32 %v1721, %v1912
        %v1971 = vadd.f32 %v1762, %v1953
        %v1972 = vadd.f32 %v1764, %v1955
        %v1973 = vld [vmem:[%s7] sm:$0xff]
        %v1974 = vld [vmem:[%s7 + $0x8] sm:$0xff]
        %1976 = vset.pattern.permute.xlu0 0
        %1977 = vperm.xlu0 %1976, %v1973
        %v1978 = vpop.permute.xlu0 %1977
        %1981 = vset.pattern.permute.xlu0 0
        %1982 = vperm.xlu0 %1981, %v1974
        %v1983 = vpop.permute.xlu0 %1982
        %v1985 = vadd.f32 %v1957, %v1978
        %v1986 = vadd.f32 %v1958, %v1978
        %v1987 = vadd.f32 %v1959, %v1978
        %v1988 = vadd.f32 %v1960, %v1978
        %v1989 = vadd.f32 %v1961, %v1978
        %v1990 = vadd.f32 %v1962, %v1978
        %v1991 = vadd.f32 %v1963, %v1978
        %v1992 = vadd.f32 %v1964, %v1978
        %v1993 = vadd.f32 %v1965, %v1983
        %v1994 = vadd.f32 %v1966, %v1983
        %v1995 = vadd.f32 %v1967, %v1983
        %v1996 = vadd.f32 %v1968, %v1983
        %v1997 = vadd.f32 %v1969, %v1983
        %v1998 = vadd.f32 %v1970, %v1983
        %v1999 = vadd.f32 %v1971, %v1983
        %v2000 = vadd.f32 %v1972, %v1983
        %vm2001 = vcmp.ge.f32.partialorder %v1985, 0.0
        %vm2002 = vcmp.ge.f32.partialorder %v1986, 0.0
        %vm2003 = vcmp.ge.f32.partialorder %v1987, 0.0
        %vm2004 = vcmp.ge.f32.partialorder %v1988, 0.0
        %vm2005 = vcmp.ge.f32.partialorder %v1989, 0.0
        %vm2006 = vcmp.ge.f32.partialorder %v1990, 0.0
        %vm2007 = vcmp.ge.f32.partialorder %v1991, 0.0
        %vm2008 = vcmp.ge.f32.partialorder %v1992, 0.0
        %vm2009 = vcmp.ge.f32.partialorder %v1993, 0.0
        %vm2010 = vcmp.ge.f32.partialorder %v1994, 0.0
        %vm2011 = vcmp.ge.f32.partialorder %v1995, 0.0
        %vm2012 = vcmp.ge.f32.partialorder %v1996, 0.0
        %vm2013 = vcmp.ge.f32.partialorder %v1997, 0.0
        %vm2014 = vcmp.ge.f32.partialorder %v1998, 0.0
        %vm2015 = vcmp.ge.f32.partialorder %v1999, 0.0
        %vm2016 = vcmp.ge.f32.partialorder %v2000, 0.0
        %v2017 = vmul.f32 %v1985, 0.1
        %v2018 = vmul.f32 %v1986, 0.1
        %v2019 = vmul.f32 %v1987, 0.1
        %v2020 = vmul.f32 %v1988, 0.1
        %v2021 = vmul.f32 %v1989, 0.1
        %v2022 = vmul.f32 %v1990, 0.1
        %v2023 = vmul.f32 %v1991, 0.1
        %v2024 = vmul.f32 %v1992, 0.1
        %v2025 = vmul.f32 %v1993, 0.1
        %v2026 = vmul.f32 %v1994, 0.1
        %v2027 = vmul.f32 %v1995, 0.1
        %v2028 = vmul.f32 %v1996, 0.1
        %v2029 = vmul.f32 %v1997, 0.1
        %v2030 = vmul.f32 %v1998, 0.1
        %v2031 = vmul.f32 %v1999, 0.1
        %v2032 = vmul.f32 %v2000, 0.1
        %v2033 = vsel %vm2001, %v1985, %v2017
        %v2034 = vsel %vm2002, %v1986, %v2018
        %v2035 = vsel %vm2003, %v1987, %v2019
        %v2036 = vsel %vm2004, %v1988, %v2020
        %v2037 = vsel %vm2005, %v1989, %v2021
        %v2038 = vsel %vm2006, %v1990, %v2022
        %v2039 = vsel %vm2007, %v1991, %v2023
        %v2040 = vsel %vm2008, %v1992, %v2024
        %v2041 = vsel %vm2009, %v1993, %v2025
        %v2042 = vsel %vm2010, %v1994, %v2026
        %v2043 = vsel %vm2011, %v1995, %v2027
        %v2044 = vsel %vm2012, %v1996, %v2028
        %v2045 = vsel %vm2013, %v1997, %v2029
        %v2046 = vsel %vm2014, %v1998, %v2030
        %v2047 = vsel %vm2015, %v1999, %v2031
        %v2048 = vsel %vm2016, %v2000, %v2032
        %2049 = vst [vmem:[%s555] sm:$0xff] %v2033
        %2050 = vst [vmem:[%s555 + $0x8] sm:$0xff] %v2034
        %2051 = vst [vmem:[%s555 + $0x10] sm:$0xff] %v2035
        %2052 = vst [vmem:[%s555 + $0x18] sm:$0xff] %v2036
        %2053 = vst [vmem:[%s555 + $0x20] sm:$0xff] %v2037
        %2054 = vst [vmem:[%s555 + $0x28] sm:$0xff] %v2038
        %2055 = vst [vmem:[%s555 + $0x30] sm:$0xff] %v2039
        %2056 = vst [vmem:[%s555 + $0x38] sm:$0xff] %v2040
        %2057 = vst [vmem:[%s555 + $0x40] sm:$0xff] %v2041
        %2058 = vst [vmem:[%s555 + $0x48] sm:$0xff] %v2042
        %2059 = vst [vmem:[%s555 + $0x50] sm:$0xff] %v2043
        %2060 = vst [vmem:[%s555 + $0x58] sm:$0xff] %v2044
        %2061 = vst [vmem:[%s555 + $0x60] sm:$0xff] %v2045
        %2062 = vst [vmem:[%s555 + $0x68] sm:$0xff] %v2046
        %2063 = vst [vmem:[%s555 + $0x70] sm:$0xff] %v2047
        %2064 = vst [vmem:[%s555 + $0x78] sm:$0xff] %v2048
        %v2065 = vpack.c.bf16 %v2041, %v2033
        %v2066 = vpack.c.bf16 %v2042, %v2034
        %v2067 = vpack.c.bf16 %v2043, %v2035
        %v2068 = vpack.c.bf16 %v2044, %v2036
        %v2069 = vpack.c.bf16 %v2045, %v2037
        %v2070 = vpack.c.bf16 %v2046, %v2038
        %v2071 = vpack.c.bf16 %v2047, %v2039
        %v2072 = vpack.c.bf16 %v2048, %v2040
        %2073 = vst [vmem:[#allocation3 + $0x20] sm:$0xff] %v2065
        %2074 = vst [vmem:[#allocation3 + $0x28] sm:$0xff] %v2066
        %2075 = vst [vmem:[#allocation3 + $0x30] sm:$0xff] %v2067
        %2076 = vst [vmem:[#allocation3 + $0x38] sm:$0xff] %v2068
        %2077 = vst [vmem:[#allocation3 + $0x40] sm:$0xff] %v2069
        %2078 = vst [vmem:[#allocation3 + $0x48] sm:$0xff] %v2070
        %2079 = vst [vmem:[#allocation3 + $0x50] sm:$0xff] %v2071
        %2080 = vst [vmem:[#allocation3 + $0x58] sm:$0xff] %v2072
        %v2081 = vld [vmem:[#allocation3 + $0x10] sm:$0xff]
        %v2082 = vld [vmem:[#allocation3 + $0x18] sm:$0xff]
        %v2083 = vld [vmem:[#allocation3 + $0x20] sm:$0xff]
        %v2084 = vld [vmem:[#allocation3 + $0x28] sm:$0xff]
        %v2085 = vld [vmem:[#allocation3 + $0x30] sm:$0xff]
        %v2086 = vld [vmem:[#allocation3 + $0x38] sm:$0xff]
        %v2087 = vld [vmem:[#allocation3 + $0x40] sm:$0xff]
        %v2088 = vld [vmem:[#allocation3 + $0x48] sm:$0xff]
        %v2089 = vld [vmem:[#allocation7] sm:$0xf]
        %v2090 = vld [vmem:[#allocation3 + $0x50] sm:$0xff]
        %v2091 = vld [vmem:[#allocation3 + $0x58] sm:$0xff]
        %s2092 = scalar_lea.vmem [#allocation7], 4
        %v2093 = vld [vmem:[%s2092] sm:$0xf]
        %v2095 = vsel %vm670, %v2093, 0
        %2097 = vmatprep.subr.bf16.mxu0 %v2084
        %2098 = vmatpush1.bf16.msra.mxu0 %v2083
        %2099 = vmatprep.subr.bf16.mxu0 0
        %2100 = vmatpush1.bf16.msra.mxu0 0
        %2101 = vmatprep.subr.bf16.mxu0 0
        %2102 = vmatpush1.bf16.msra.mxu0 0
        %2103 = vmatprep.subr.bf16.mxu0 0
        %2104 = vmatpush1.bf16.msra.mxu0 0
        %2105 = vmatprep.subr.bf16.mxu0 0
        %2106 = vmatpush1.bf16.msra.mxu0 0
        %2107 = vmatprep.subr.bf16.mxu0 0
        %2108 = vmatpush1.bf16.msra.mxu0 0
        %2109 = vmatprep.subr.bf16.mxu0 0
        %2110 = vmatpush1.bf16.msra.mxu0 0
        %2111 = vmatprep.subr.bf16.mxu0 0
        %2112 = vmatpush1.bf16.msra.mxu0 0
        %2113 = vmatprep.subr.bf16.mxu0 0
        %2114 = vmatpush1.bf16.msra.mxu0 0
        %2115 = vmatprep.subr.bf16.mxu0 0
        %2116 = vmatpush1.bf16.msra.mxu0 0
        %2117 = vmatprep.subr.bf16.mxu0 0
        %2118 = vmatpush1.bf16.msra.mxu0 0
        %2119 = vmatprep.subr.bf16.mxu0 0
        %2120 = vmatpush1.bf16.msra.mxu0 0
        %2121 = vmatprep.subr.bf16.mxu0 0
        %2122 = vmatpush1.bf16.msra.mxu0 0
        %2123 = vmatprep.subr.bf16.mxu0 0
        %2124 = vmatpush1.bf16.msra.mxu0 0
        %2125 = vmatprep.subr.bf16.mxu0 0
        %2126 = vmatpush1.bf16.msra.mxu0 0
        %2127 = vmatprep.subr.bf16.mxu0 0
        %2128 = vmatpush1.bf16.msra.mxu0 0
        %2129 = vmatprep.mubr.bf16.mxu0 0
        %2130 = vmatmul.mubr.bf16.gmra.mrb[0].mxu0 %v2095
        %v2131 = vpop.f32.mrb[0].mxu0
        %v2132 = vadd.f32 0.0, %v2131
        %v2133 = vpop.f32.mrb[0].mxu0
        %v2134 = vadd.f32 0.0, %v2133
        %v2135 = vpop.f32.mrb[0].mxu0
        %v2136 = vpop.f32.mrb[0].mxu0
        %2137 = vdwg.mxu0
        %2138 = vmatprep.subr.bf16.mxu0 %v2086
        %2139 = vmatpush1.bf16.msra.mxu0 %v2085
        %2140 = vmatprep.subr.bf16.mxu0 0
        %2141 = vmatpush1.bf16.msra.mxu0 0
        %2142 = vmatprep.subr.bf16.mxu0 0
        %2143 = vmatpush1.bf16.msra.mxu0 0
        %2144 = vmatprep.subr.bf16.mxu0 0
        %2145 = vmatpush1.bf16.msra.mxu0 0
        %2146 = vmatprep.subr.bf16.mxu0 0
        %2147 = vmatpush1.bf16.msra.mxu0 0
        %2148 = vmatprep.subr.bf16.mxu0 0
        %2149 = vmatpush1.bf16.msra.mxu0 0
        %2150 = vmatprep.subr.bf16.mxu0 0
        %2151 = vmatpush1.bf16.msra.mxu0 0
        %2152 = vmatprep.subr.bf16.mxu0 0
        %2153 = vmatpush1.bf16.msra.mxu0 0
        %2154 = vmatprep.subr.bf16.mxu0 0
        %2155 = vmatpush1.bf16.msra.mxu0 0
        %2156 = vmatprep.subr.bf16.mxu0 0
        %2157 = vmatpush1.bf16.msra.mxu0 0
        %2158 = vmatprep.subr.bf16.mxu0 0
        %2159 = vmatpush1.bf16.msra.mxu0 0
        %2160 = vmatprep.subr.bf16.mxu0 0
        %2161 = vmatpush1.bf16.msra.mxu0 0
        %2162 = vmatprep.subr.bf16.mxu0 0
        %2163 = vmatpush1.bf16.msra.mxu0 0
        %2164 = vmatprep.subr.bf16.mxu0 0
        %2165 = vmatpush1.bf16.msra.mxu0 0
        %2166 = vmatprep.subr.bf16.mxu0 0
        %2167 = vmatpush1.bf16.msra.mxu0 0
        %2168 = vmatprep.subr.bf16.mxu0 0
        %2169 = vmatpush1.bf16.msra.mxu0 0
        %2170 = vmatprep.mubr.bf16.mxu0 0
        %2171 = vmatmul.mubr.bf16.gmra.mrb[0].mxu0 %v2095
        %v2172 = vpop.f32.mrb[0].mxu0
        %v2173 = vadd.f32 0.0, %v2172
        %v2174 = vpop.f32.mrb[0].mxu0
        %v2175 = vadd.f32 0.0, %v2174
        %v2176 = vpop.f32.mrb[0].mxu0
        %v2177 = vpop.f32.mrb[0].mxu0
        %2178 = vdwg.mxu0
        %2179 = vmatprep.subr.bf16.mxu0 %v2088
        %2180 = vmatpush1.bf16.msra.mxu0 %v2087
        %2181 = vmatprep.subr.bf16.mxu0 0
        %2182 = vmatpush1.bf16.msra.mxu0 0
        %2183 = vmatprep.subr.bf16.mxu0 0
        %2184 = vmatpush1.bf16.msra.mxu0 0
        %2185 = vmatprep.subr.bf16.mxu0 0
        %2186 = vmatpush1.bf16.msra.mxu0 0
        %2187 = vmatprep.subr.bf16.mxu0 0
        %2188 = vmatpush1.bf16.msra.mxu0 0
        %2189 = vmatprep.subr.bf16.mxu0 0
        %2190 = vmatpush1.bf16.msra.mxu0 0
        %2191 = vmatprep.subr.bf16.mxu0 0
        %2192 = vmatpush1.bf16.msra.mxu0 0
        %2193 = vmatprep.subr.bf16.mxu0 0
        %2194 = vmatpush1.bf16.msra.mxu0 0
        %2195 = vmatprep.subr.bf16.mxu0 0
        %2196 = vmatpush1.bf16.msra.mxu0 0
        %2197 = vmatprep.subr.bf16.mxu0 0
        %2198 = vmatpush1.bf16.msra.mxu0 0
        %2199 = vmatprep.subr.bf16.mxu0 0
        %2200 = vmatpush1.bf16.msra.mxu0 0
        %2201 = vmatprep.subr.bf16.mxu0 0
        %2202 = vmatpush1.bf16.msra.mxu0 0
        %2203 = vmatprep.subr.bf16.mxu0 0
        %2204 = vmatpush1.bf16.msra.mxu0 0
        %2205 = vmatprep.subr.bf16.mxu0 0
        %2206 = vmatpush1.bf16.msra.mxu0 0
        %2207 = vmatprep.subr.bf16.mxu0 0
        %2208 = vmatpush1.bf16.msra.mxu0 0
        %2209 = vmatprep.subr.bf16.mxu0 0
        %2210 = vmatpush1.bf16.msra.mxu0 0
        %2211 = vmatprep.mubr.bf16.mxu0 0
        %2212 = vmatmul.mubr.bf16.gmra.mrb[0].mxu0 %v2095
        %v2213 = vpop.f32.mrb[0].mxu0
        %v2214 = vadd.f32 0.0, %v2213
        %v2215 = vpop.f32.mrb[0].mxu0
        %v2216 = vadd.f32 0.0, %v2215
        %v2217 = vpop.f32.mrb[0].mxu0
        %v2218 = vpop.f32.mrb[0].mxu0
        %2219 = vdwg.mxu0
        %2220 = vmatprep.subr.bf16.mxu0 %v2091
        %2221 = vmatpush1.bf16.msra.mxu0 %v2090
        %2222 = vmatprep.subr.bf16.mxu0 0
        %2223 = vmatpush1.bf16.msra.mxu0 0
        %2224 = vmatprep.subr.bf16.mxu0 0
        %2225 = vmatpush1.bf16.msra.mxu0 0
        %2226 = vmatprep.subr.bf16.mxu0 0
        %2227 = vmatpush1.bf16.msra.mxu0 0
        %2228 = vmatprep.subr.bf16.mxu0 0
        %2229 = vmatpush1.bf16.msra.mxu0 0
        %2230 = vmatprep.subr.bf16.mxu0 0
        %2231 = vmatpush1.bf16.msra.mxu0 0
        %2232 = vmatprep.subr.bf16.mxu0 0
        %2233 = vmatpush1.bf16.msra.mxu0 0
        %2234 = vmatprep.subr.bf16.mxu0 0
        %2235 = vmatpush1.bf16.msra.mxu0 0
        %2236 = vmatprep.subr.bf16.mxu0 0
        %2237 = vmatpush1.bf16.msra.mxu0 0
        %2238 = vmatprep.subr.bf16.mxu0 0
        %2239 = vmatpush1.bf16.msra.mxu0 0
        %2240 = vmatprep.subr.bf16.mxu0 0
        %2241 = vmatpush1.bf16.msra.mxu0 0
        %2242 = vmatprep.subr.bf16.mxu0 0
        %2243 = vmatpush1.bf16.msra.mxu0 0
        %2244 = vmatprep.subr.bf16.mxu0 0
        %2245 = vmatpush1.bf16.msra.mxu0 0
        %2246 = vmatprep.subr.bf16.mxu0 0
        %2247 = vmatpush1.bf16.msra.mxu0 0
        %2248 = vmatprep.subr.bf16.mxu0 0
        %2249 = vmatpush1.bf16.msra.mxu0 0
        %2250 = vmatprep.subr.bf16.mxu0 0
        %2251 = vmatpush1.bf16.msra.mxu0 0
        %2252 = vmatprep.mubr.bf16.mxu0 0
        %2253 = vmatmul.mubr.bf16.gmra.mrb[0].mxu0 %v2095
        %v2254 = vpop.f32.mrb[0].mxu0
        %v2255 = vadd.f32 0.0, %v2254
        %v2256 = vpop.f32.mrb[0].mxu0
        %v2257 = vadd.f32 0.0, %v2256
        %v2258 = vpop.f32.mrb[0].mxu0
        %v2259 = vpop.f32.mrb[0].mxu0
        %2260 = vdwg.mxu0
        %v2262 = vsel %vm670, %v2089, 0
        %2264 = vmatprep.subr.bf16.mxu0 %v2082
        %2265 = vmatpush1.bf16.msra.mxu0 %v2081
        %2266 = vmatprep.subr.bf16.mxu0 0
        %2267 = vmatpush1.bf16.msra.mxu0 0
        %2268 = vmatprep.subr.bf16.mxu0 0
        %2269 = vmatpush1.bf16.msra.mxu0 0
        %2270 = vmatprep.subr.bf16.mxu0 0
        %2271 = vmatpush1.bf16.msra.mxu0 0
        %2272 = vmatprep.subr.bf16.mxu0 0
        %2273 = vmatpush1.bf16.msra.mxu0 0
        %2274 = vmatprep.subr.bf16.mxu0 0
        %2275 = vmatpush1.bf16.msra.mxu0 0
        %2276 = vmatprep.subr.bf16.mxu0 0
        %2277 = vmatpush1.bf16.msra.mxu0 0
        %2278 = vmatprep.subr.bf16.mxu0 0
        %2279 = vmatpush1.bf16.msra.mxu0 0
        %2280 = vmatprep.subr.bf16.mxu0 0
        %2281 = vmatpush1.bf16.msra.mxu0 0
        %2282 = vmatprep.subr.bf16.mxu0 0
        %2283 = vmatpush1.bf16.msra.mxu0 0
        %2284 = vmatprep.subr.bf16.mxu0 0
        %2285 = vmatpush1.bf16.msra.mxu0 0
        %2286 = vmatprep.subr.bf16.mxu0 0
        %2287 = vmatpush1.bf16.msra.mxu0 0
        %2288 = vmatprep.subr.bf16.mxu0 0
        %2289 = vmatpush1.bf16.msra.mxu0 0
        %2290 = vmatprep.subr.bf16.mxu0 0
        %2291 = vmatpush1.bf16.msra.mxu0 0
        %2292 = vmatprep.subr.bf16.mxu0 0
        %2293 = vmatpush1.bf16.msra.mxu0 0
        %2294 = vmatprep.subr.bf16.mxu0 0
        %2295 = vmatpush1.bf16.msra.mxu0 0
        %2296 = vmatprep.mubr.bf16.mxu0 0
        %2297 = vmatmul.mubr.bf16.gmra.mrb[0].mxu0 %v2262
        %v2298 = vpop.f32.mrb[0].mxu0
        %v2299 = vadd.f32 %v2132, %v2298
        %v2300 = vpop.f32.mrb[0].mxu0
        %v2301 = vadd.f32 %v2134, %v2300
        %v2302 = vpop.f32.mrb[0].mxu0
        %v2303 = vpop.f32.mrb[0].mxu0
        %2304 = vdwg.mxu0
        %2305 = vmatprep.subr.bf16.mxu0 %v2084
        %2306 = vmatpush1.bf16.msra.mxu0 %v2083
        %2307 = vmatprep.subr.bf16.mxu0 0
        %2308 = vmatpush1.bf16.msra.mxu0 0
        %2309 = vmatprep.subr.bf16.mxu0 0
        %2310 = vmatpush1.bf16.msra.mxu0 0
        %2311 = vmatprep.subr.bf16.mxu0 0
        %2312 = vmatpush1.bf16.msra.mxu0 0
        %2313 = vmatprep.subr.bf16.mxu0 0
        %2314 = vmatpush1.bf16.msra.mxu0 0
        %2315 = vmatprep.subr.bf16.mxu0 0
        %2316 = vmatpush1.bf16.msra.mxu0 0
        %2317 = vmatprep.subr.bf16.mxu0 0
        %2318 = vmatpush1.bf16.msra.mxu0 0
        %2319 = vmatprep.subr.bf16.mxu0 0
        %2320 = vmatpush1.bf16.msra.mxu0 0
        %2321 = vmatprep.subr.bf16.mxu0 0
        %2322 = vmatpush1.bf16.msra.mxu0 0
        %2323 = vmatprep.subr.bf16.mxu0 0
        %2324 = vmatpush1.bf16.msra.mxu0 0
        %2325 = vmatprep.subr.bf16.mxu0 0
        %2326 = vmatpush1.bf16.msra.mxu0 0
        %2327 = vmatprep.subr.bf16.mxu0 0
        %2328 = vmatpush1.bf16.msra.mxu0 0
        %2329 = vmatprep.subr.bf16.mxu0 0
        %2330 = vmatpush1.bf16.msra.mxu0 0
        %2331 = vmatprep.subr.bf16.mxu0 0
        %2332 = vmatpush1.bf16.msra.mxu0 0
        %2333 = vmatprep.subr.bf16.mxu0 0
        %2334 = vmatpush1.bf16.msra.mxu0 0
        %2335 = vmatprep.subr.bf16.mxu0 0
        %2336 = vmatpush1.bf16.msra.mxu0 0
        %2337 = vmatprep.mubr.bf16.mxu0 0
        %2338 = vmatmul.mubr.bf16.gmra.mrb[0].mxu0 %v2262
        %v2339 = vpop.f32.mrb[0].mxu0
        %v2340 = vadd.f32 %v2173, %v2339
        %v2341 = vpop.f32.mrb[0].mxu0
        %v2342 = vadd.f32 %v2175, %v2341
        %v2343 = vpop.f32.mrb[0].mxu0
        %v2344 = vpop.f32.mrb[0].mxu0
        %2345 = vdwg.mxu0
        %2346 = vmatprep.subr.bf16.mxu0 %v2086
        %2347 = vmatpush1.bf16.msra.mxu0 %v2085
        %2348 = vmatprep.subr.bf16.mxu0 0
        %2349 = vmatpush1.bf16.msra.mxu0 0
        %2350 = vmatprep.subr.bf16.mxu0 0
        %2351 = vmatpush1.bf16.msra.mxu0 0
        %2352 = vmatprep.subr.bf16.mxu0 0
        %2353 = vmatpush1.bf16.msra.mxu0 0
        %2354 = vmatprep.subr.bf16.mxu0 0
        %2355 = vmatpush1.bf16.msra.mxu0 0
        %2356 = vmatprep.subr.bf16.mxu0 0
        %2357 = vmatpush1.bf16.msra.mxu0 0
        %2358 = vmatprep.subr.bf16.mxu0 0
        %2359 = vmatpush1.bf16.msra.mxu0 0
        %2360 = vmatprep.subr.bf16.mxu0 0
        %2361 = vmatpush1.bf16.msra.mxu0 0
        %2362 = vmatprep.subr.bf16.mxu0 0
        %2363 = vmatpush1.bf16.msra.mxu0 0
        %2364 = vmatprep.subr.bf16.mxu0 0
        %2365 = vmatpush1.bf16.msra.mxu0 0
        %2366 = vmatprep.subr.bf16.mxu0 0
        %2367 = vmatpush1.bf16.msra.mxu0 0
        %2368 = vmatprep.subr.bf16.mxu0 0
        %2369 = vmatpush1.bf16.msra.mxu0 0
        %2370 = vmatprep.subr.bf16.mxu0 0
        %2371 = vmatpush1.bf16.msra.mxu0 0
        %2372 = vmatprep.subr.bf16.mxu0 0
        %2373 = vmatpush1.bf16.msra.mxu0 0
        %2374 = vmatprep.subr.bf16.mxu0 0
        %2375 = vmatpush1.bf16.msra.mxu0 0
        %2376 = vmatprep.subr.bf16.mxu0 0
        %2377 = vmatpush1.bf16.msra.mxu0 0
        %2378 = vmatprep.mubr.bf16.mxu0 0
        %2379 = vmatmul.mubr.bf16.gmra.mrb[0].mxu0 %v2262
        %v2380 = vpop.f32.mrb[0].mxu0
        %v2381 = vadd.f32 %v2214, %v2380
        %v2382 = vpop.f32.mrb[0].mxu0
        %v2383 = vadd.f32 %v2216, %v2382
        %v2384 = vpop.f32.mrb[0].mxu0
        %v2385 = vpop.f32.mrb[0].mxu0
        %2386 = vdwg.mxu0
        %2387 = vmatprep.subr.bf16.mxu0 %v2088
        %2388 = vmatpush1.bf16.msra.mxu0 %v2087
        %2389 = vmatprep.subr.bf16.mxu0 0
        %2390 = vmatpush1.bf16.msra.mxu0 0
        %2391 = vmatprep.subr.bf16.mxu0 0
        %2392 = vmatpush1.bf16.msra.mxu0 0
        %2393 = vmatprep.subr.bf16.mxu0 0
        %2394 = vmatpush1.bf16.msra.mxu0 0
        %2395 = vmatprep.subr.bf16.mxu0 0
        %2396 = vmatpush1.bf16.msra.mxu0 0
        %2397 = vmatprep.subr.bf16.mxu0 0
        %2398 = vmatpush1.bf16.msra.mxu0 0
        %2399 = vmatprep.subr.bf16.mxu0 0
        %2400 = vmatpush1.bf16.msra.mxu0 0
        %2401 = vmatprep.subr.bf16.mxu0 0
        %2402 = vmatpush1.bf16.msra.mxu0 0
        %2403 = vmatprep.subr.bf16.mxu0 0
        %2404 = vmatpush1.bf16.msra.mxu0 0
        %2405 = vmatprep.subr.bf16.mxu0 0
        %2406 = vmatpush1.bf16.msra.mxu0 0
        %2407 = vmatprep.subr.bf16.mxu0 0
        %2408 = vmatpush1.bf16.msra.mxu0 0
        %2409 = vmatprep.subr.bf16.mxu0 0
        %2410 = vmatpush1.bf16.msra.mxu0 0
        %2411 = vmatprep.subr.bf16.mxu0 0
        %2412 = vmatpush1.bf16.msra.mxu0 0
        %2413 = vmatprep.subr.bf16.mxu0 0
        %2414 = vmatpush1.bf16.msra.mxu0 0
        %2415 = vmatprep.subr.bf16.mxu0 0
        %2416 = vmatpush1.bf16.msra.mxu0 0
        %2417 = vmatprep.subr.bf16.mxu0 0
        %2418 = vmatpush1.bf16.msra.mxu0 0
        %2419 = vmatprep.mubr.bf16.mxu0 0
        %2420 = vmatmul.mubr.bf16.gmra.mrb[0].mxu0 %v2262
        %v2421 = vpop.f32.mrb[0].mxu0
        %v2422 = vadd.f32 %v2255, %v2421
        %v2423 = vpop.f32.mrb[0].mxu0
        %v2424 = vadd.f32 %v2257, %v2423
        %v2425 = vpop.f32.mrb[0].mxu0
        %v2426 = vpop.f32.mrb[0].mxu0
        %2427 = vdwg.mxu0
        %v2428 = vld [vmem:[#allocation3 + $0x30] sm:$0xff]
        %v2429 = vld [vmem:[#allocation3 + $0x38] sm:$0xff]
        %v2430 = vld [vmem:[#allocation3 + $0x40] sm:$0xff]
        %v2431 = vld [vmem:[#allocation3 + $0x48] sm:$0xff]
        %v2432 = vld [vmem:[#allocation3 + $0x50] sm:$0xff]
        %v2433 = vld [vmem:[#allocation3 + $0x58] sm:$0xff]
        %v2434 = vld [vmem:[#allocation3 + $0x60] sm:$0xff]
        %v2435 = vld [vmem:[#allocation3 + $0x68] sm:$0xff]
        %s2436 = scalar_lea.vmem [#allocation7], 8
        %v2437 = vld [vmem:[%s2436] sm:$0xf]
        %v2439 = vsel %vm670, %v2437, 0
        %2441 = vmatprep.subr.bf16.mxu0 %v2429
        %2442 = vmatpush1.bf16.msra.mxu0 %v2428
        %2443 = vmatprep.subr.bf16.mxu0 0
        %2444 = vmatpush1.bf16.msra.mxu0 0
        %2445 = vmatprep.subr.bf16.mxu0 0
        %2446 = vmatpush1.bf16.msra.mxu0 0
        %2447 = vmatprep.subr.bf16.mxu0 0
        %2448 = vmatpush1.bf16.msra.mxu0 0
        %2449 = vmatprep.subr.bf16.mxu0 0
        %2450 = vmatpush1.bf16.msra.mxu0 0
        %2451 = vmatprep.subr.bf16.mxu0 0
        %2452 = vmatpush1.bf16.msra.mxu0 0
        %2453 = vmatprep.subr.bf16.mxu0 0
        %2454 = vmatpush1.bf16.msra.mxu0 0
        %2455 = vmatprep.subr.bf16.mxu0 0
        %2456 = vmatpush1.bf16.msra.mxu0 0
        %2457 = vmatprep.subr.bf16.mxu0 0
        %2458 = vmatpush1.bf16.msra.mxu0 0
        %2459 = vmatprep.subr.bf16.mxu0 0
        %2460 = vmatpush1.bf16.msra.mxu0 0
        %2461 = vmatprep.subr.bf16.mxu0 0
        %2462 = vmatpush1.bf16.msra.mxu0 0
        %2463 = vmatprep.subr.bf16.mxu0 0
        %2464 = vmatpush1.bf16.msra.mxu0 0
        %2465 = vmatprep.subr.bf16.mxu0 0
        %2466 = vmatpush1.bf16.msra.mxu0 0
        %2467 = vmatprep.subr.bf16.mxu0 0
        %2468 = vmatpush1.bf16.msra.mxu0 0
        %2469 = vmatprep.subr.bf16.mxu0 0
        %2470 = vmatpush1.bf16.msra.mxu0 0
        %2471 = vmatprep.subr.bf16.mxu0 0
        %2472 = vmatpush1.bf16.msra.mxu0 0
        %2473 = vmatprep.mubr.bf16.mxu0 0
        %2474 = vmatmul.mubr.bf16.gmra.mrb[0].mxu0 %v2439
        %v2475 = vpop.f32.mrb[0].mxu0
        %v2476 = vadd.f32 0.0, %v2475
        %v2477 = vpop.f32.mrb[0].mxu0
        %v2478 = vadd.f32 0.0, %v2477
        %v2479 = vpop.f32.mrb[0].mxu0
        %v2480 = vpop.f32.mrb[0].mxu0
        %2481 = vdwg.mxu0
        %2482 = vmatprep.subr.bf16.mxu0 %v2431
        %2483 = vmatpush1.bf16.msra.mxu0 %v2430
        %2484 = vmatprep.subr.bf16.mxu0 0
        %2485 = vmatpush1.bf16.msra.mxu0 0
        %2486 = vmatprep.subr.bf16.mxu0 0
        %2487 = vmatpush1.bf16.msra.mxu0 0
        %2488 = vmatprep.subr.bf16.mxu0 0
        %2489 = vmatpush1.bf16.msra.mxu0 0
        %2490 = vmatprep.subr.bf16.mxu0 0
        %2491 = vmatpush1.bf16.msra.mxu0 0
        %2492 = vmatprep.subr.bf16.mxu0 0
        %2493 = vmatpush1.bf16.msra.mxu0 0
        %2494 = vmatprep.subr.bf16.mxu0 0
        %2495 = vmatpush1.bf16.msra.mxu0 0
        %2496 = vmatprep.subr.bf16.mxu0 0
        %2497 = vmatpush1.bf16.msra.mxu0 0
        %2498 = vmatprep.subr.bf16.mxu0 0
        %2499 = vmatpush1.bf16.msra.mxu0 0
        %2500 = vmatprep.subr.bf16.mxu0 0
        %2501 = vmatpush1.bf16.msra.mxu0 0
        %2502 = vmatprep.subr.bf16.mxu0 0
        %2503 = vmatpush1.bf16.msra.mxu0 0
        %2504 = vmatprep.subr.bf16.mxu0 0
        %2505 = vmatpush1.bf16.msra.mxu0 0
        %2506 = vmatprep.subr.bf16.mxu0 0
        %2507 = vmatpush1.bf16.msra.mxu0 0
        %2508 = vmatprep.subr.bf16.mxu0 0
        %2509 = vmatpush1.bf16.msra.mxu0 0
        %2510 = vmatprep.subr.bf16.mxu0 0
        %2511 = vmatpush1.bf16.msra.mxu0 0
        %2512 = vmatprep.subr.bf16.mxu0 0
        %2513 = vmatpush1.bf16.msra.mxu0 0
        %2514 = vmatprep.mubr.bf16.mxu0 0
        %2515 = vmatmul.mubr.bf16.gmra.mrb[0].mxu0 %v2439
        %v2516 = vpop.f32.mrb[0].mxu0
        %v2517 = vadd.f32 0.0, %v2516
        %v2518 = vpop.f32.mrb[0].mxu0
        %v2519 = vadd.f32 0.0, %v2518
        %v2520 = vpop.f32.mrb[0].mxu0
        %v2521 = vpop.f32.mrb[0].mxu0
        %2522 = vdwg.mxu0
        %2523 = vmatprep.subr.bf16.mxu0 %v2433
        %2524 = vmatpush1.bf16.msra.mxu0 %v2432
        %2525 = vmatprep.subr.bf16.mxu0 0
        %2526 = vmatpush1.bf16.msra.mxu0 0
        %2527 = vmatprep.subr.bf16.mxu0 0
        %2528 = vmatpush1.bf16.msra.mxu0 0
        %2529 = vmatprep.subr.bf16.mxu0 0
        %2530 = vmatpush1.bf16.msra.mxu0 0
        %2531 = vmatprep.subr.bf16.mxu0 0
        %2532 = vmatpush1.bf16.msra.mxu0 0
        %2533 = vmatprep.subr.bf16.mxu0 0
        %2534 = vmatpush1.bf16.msra.mxu0 0
        %2535 = vmatprep.subr.bf16.mxu0 0
        %2536 = vmatpush1.bf16.msra.mxu0 0
        %2537 = vmatprep.subr.bf16.mxu0 0
        %2538 = vmatpush1.bf16.msra.mxu0 0
        %2539 = vmatprep.subr.bf16.mxu0 0
        %2540 = vmatpush1.bf16.msra.mxu0 0
        %2541 = vmatprep.subr.bf16.mxu0 0
        %2542 = vmatpush1.bf16.msra.mxu0 0
        %2543 = vmatprep.subr.bf16.mxu0 0
        %2544 = vmatpush1.bf16.msra.mxu0 0
        %2545 = vmatprep.subr.bf16.mxu0 0
        %2546 = vmatpush1.bf16.msra.mxu0 0
        %2547 = vmatprep.subr.bf16.mxu0 0
        %2548 = vmatpush1.bf16.msra.mxu0 0
        %2549 = vmatprep.subr.bf16.mxu0 0
        %2550 = vmatpush1.bf16.msra.mxu0 0
        %2551 = vmatprep.subr.bf16.mxu0 0
        %2552 = vmatpush1.bf16.msra.mxu0 0
        %2553 = vmatprep.subr.bf16.mxu0 0
        %2554 = vmatpush1.bf16.msra.mxu0 0
        %2555 = vmatprep.mubr.bf16.mxu0 0
        %2556 = vmatmul.mubr.bf16.gmra.mrb[0].mxu0 %v2439
        %v2557 = vpop.f32.mrb[0].mxu0
        %v2558 = vadd.f32 0.0, %v2557
        %v2559 = vpop.f32.mrb[0].mxu0
        %v2560 = vadd.f32 0.0, %v2559
        %v2561 = vpop.f32.mrb[0].mxu0
        %v2562 = vpop.f32.mrb[0].mxu0
        %2563 = vdwg.mxu0
        %2564 = vmatprep.subr.bf16.mxu0 %v2435
        %2565 = vmatpush1.bf16.msra.mxu0 %v2434
        %2566 = vmatprep.subr.bf16.mxu0 0
        %2567 = vmatpush1.bf16.msra.mxu0 0
        %2568 = vmatprep.subr.bf16.mxu0 0
        %2569 = vmatpush1.bf16.msra.mxu0 0
        %2570 = vmatprep.subr.bf16.mxu0 0
        %2571 = vmatpush1.bf16.msra.mxu0 0
        %2572 = vmatprep.subr.bf16.mxu0 0
        %2573 = vmatpush1.bf16.msra.mxu0 0
        %2574 = vmatprep.subr.bf16.mxu0 0
        %2575 = vmatpush1.bf16.msra.mxu0 0
        %2576 = vmatprep.subr.bf16.mxu0 0
        %2577 = vmatpush1.bf16.msra.mxu0 0
        %2578 = vmatprep.subr.bf16.mxu0 0
        %2579 = vmatpush1.bf16.msra.mxu0 0
        %2580 = vmatprep.subr.bf16.mxu0 0
        %2581 = vmatpush1.bf16.msra.mxu0 0
        %2582 = vmatprep.subr.bf16.mxu0 0
        %2583 = vmatpush1.bf16.msra.mxu0 0
        %2584 = vmatprep.subr.bf16.mxu0 0
        %2585 = vmatpush1.bf16.msra.mxu0 0
        %2586 = vmatprep.subr.bf16.mxu0 0
        %2587 = vmatpush1.bf16.msra.mxu0 0
        %2588 = vmatprep.subr.bf16.mxu0 0
        %2589 = vmatpush1.bf16.msra.mxu0 0
        %2590 = vmatprep.subr.bf16.mxu0 0
        %2591 = vmatpush1.bf16.msra.mxu0 0
        %2592 = vmatprep.subr.bf16.mxu0 0
        %2593 = vmatpush1.bf16.msra.mxu0 0
        %2594 = vmatprep.subr.bf16.mxu0 0
        %2595 = vmatpush1.bf16.msra.mxu0 0
        %2596 = vmatprep.mubr.bf16.mxu0 0
        %2597 = vmatmul.mubr.bf16.gmra.mrb[0].mxu0 %v2439
        %v2598 = vpop.f32.mrb[0].mxu0
        %v2599 = vadd.f32 0.0, %v2598
        %v2600 = vpop.f32.mrb[0].mxu0
        %v2601 = vadd.f32 0.0, %v2600
        %v2602 = vpop.f32.mrb[0].mxu0
        %v2603 = vpop.f32.mrb[0].mxu0
        %2604 = vdwg.mxu0
        %v2605 = vadd.f32 %v2299, %v2476
        %v2606 = vadd.f32 %v2301, %v2478
        %v2607 = vadd.f32 %v2340, %v2517
        %v2608 = vadd.f32 %v2342, %v2519
        %v2609 = vadd.f32 %v2381, %v2558
        %v2610 = vadd.f32 %v2383, %v2560
        %v2611 = vadd.f32 %v2422, %v2599
        %v2612 = vadd.f32 %v2424, %v2601
        %v2613 = vld [vmem:[%s8] sm:$0xff]
        %2615 = vset.pattern.permute.xlu0 0
        %2616 = vperm.xlu0 %2615, %v2613
        %v2617 = vpop.permute.xlu0 %2616
        %v2619 = vadd.f32 %v2605, %v2617
        %v2620 = vadd.f32 %v2606, %v2617
        %v2621 = vadd.f32 %v2607, %v2617
        %v2622 = vadd.f32 %v2608, %v2617
        %v2623 = vadd.f32 %v2609, %v2617
        %v2624 = vadd.f32 %v2610, %v2617
        %v2625 = vadd.f32 %v2611, %v2617
        %v2626 = vadd.f32 %v2612, %v2617
        %vm2627 = vcmp.ge.f32.partialorder %v2619, 0.0
        %vm2628 = vcmp.ge.f32.partialorder %v2620, 0.0
        %vm2629 = vcmp.ge.f32.partialorder %v2621, 0.0
        %vm2630 = vcmp.ge.f32.partialorder %v2622, 0.0
        %vm2631 = vcmp.ge.f32.partialorder %v2623, 0.0
        %vm2632 = vcmp.ge.f32.partialorder %v2624, 0.0
        %vm2633 = vcmp.ge.f32.partialorder %v2625, 0.0
        %vm2634 = vcmp.ge.f32.partialorder %v2626, 0.0
        %v2635 = vmul.f32 %v2619, 0.1
        %v2636 = vmul.f32 %v2620, 0.1
        %v2637 = vmul.f32 %v2621, 0.1
        %v2638 = vmul.f32 %v2622, 0.1
        %v2639 = vmul.f32 %v2623, 0.1
        %v2640 = vmul.f32 %v2624, 0.1
        %v2641 = vmul.f32 %v2625, 0.1
        %v2642 = vmul.f32 %v2626, 0.1
        %v2643 = vsel %vm2627, %v2619, %v2635
        %v2644 = vsel %vm2628, %v2620, %v2636
        %v2645 = vsel %vm2629, %v2621, %v2637
        %v2646 = vsel %vm2630, %v2622, %v2638
        %v2647 = vsel %vm2631, %v2623, %v2639
        %v2648 = vsel %vm2632, %v2624, %v2640
        %v2649 = vsel %vm2633, %v2625, %v2641
        %v2650 = vsel %vm2634, %v2626, %v2642
        %2651 = vst [vmem:[%s562] sm:$0xff] %v2643
        %2652 = vst [vmem:[%s562 + $0x8] sm:$0xff] %v2644
        %2653 = vst [vmem:[%s562 + $0x10] sm:$0xff] %v2645
        %2654 = vst [vmem:[%s562 + $0x18] sm:$0xff] %v2646
        %2655 = vst [vmem:[%s562 + $0x20] sm:$0xff] %v2647
        %2656 = vst [vmem:[%s562 + $0x28] sm:$0xff] %v2648
        %2657 = vst [vmem:[%s562 + $0x30] sm:$0xff] %v2649
        %2658 = vst [vmem:[%s562 + $0x38] sm:$0xff] %v2650
        %v2659 = vpack.c.bf16 %v2643, %v2643
        %v2660 = vpack.c.bf16 %v2644, %v2644
        %v2661 = vpack.c.bf16 %v2645, %v2645
        %v2662 = vpack.c.bf16 %v2646, %v2646
        %v2663 = vpack.c.bf16 %v2647, %v2647
        %v2664 = vpack.c.bf16 %v2648, %v2648
        %v2665 = vpack.c.bf16 %v2649, %v2649
        %v2666 = vpack.c.bf16 %v2650, %v2650
        %2667 = vst [vmem:[#allocation2 + $0x20] sm:$0xf] %v2659
        %2668 = vst [vmem:[#allocation2 + $0x28] sm:$0xf] %v2660
        %2669 = vst [vmem:[#allocation2 + $0x30] sm:$0xf] %v2661
        %2670 = vst [vmem:[#allocation2 + $0x38] sm:$0xf] %v2662
        %2671 = vst [vmem:[#allocation2 + $0x40] sm:$0xf] %v2663
        %2672 = vst [vmem:[#allocation2 + $0x48] sm:$0xf] %v2664
        %2673 = vst [vmem:[#allocation2 + $0x50] sm:$0xf] %v2665
        %2674 = vst [vmem:[#allocation2 + $0x58] sm:$0xf] %v2666
        %v2675 = vld [vmem:[#allocation2] sm:$0xff]
        %v2676 = vld [vmem:[#allocation2 + $0x8] sm:$0xff]
        %v2677 = vld [vmem:[#allocation2 + $0x10] sm:$0xff]
        %v2678 = vld [vmem:[#allocation2 + $0x18] sm:$0xff]
        %v2679 = vld [vmem:[#allocation2 + $0x20] sm:$0xff]
        %v2680 = vld [vmem:[#allocation2 + $0x28] sm:$0xff]
        %v2681 = vld [vmem:[#allocation2 + $0x30] sm:$0xff]
        %v2682 = vld [vmem:[#allocation2 + $0x38] sm:$0xff]
        %v2683 = vld [vmem:[%s4] sm:$0xf]
        %v2684 = vld [vmem:[#allocation2 + $0x40] sm:$0xff]
        %v2685 = vld [vmem:[#allocation2 + $0x48] sm:$0xff]
        %s2686 = scalar_lea.vmem %s4, 4
        %v2687 = vld [vmem:[%s2686] sm:$0xf]
        %v2689 = vsel %vm670, %v2687, 0
        %2691 = vmatprep.subr.bf16.mxu0 %v2678
        %2692 = vmatpush1.bf16.msra.mxu0 %v2677
        %2693 = vmatprep.subr.bf16.mxu0 0
        %2694 = vmatpush1.bf16.msra.mxu0 0
        %2695 = vmatprep.subr.bf16.mxu0 0
        %2696 = vmatpush1.bf16.msra.mxu0 0
        %2697 = vmatprep.subr.bf16.mxu0 0
        %2698 = vmatpush1.bf16.msra.mxu0 0
        %2699 = vmatprep.subr.bf16.mxu0 0
        %2700 = vmatpush1.bf16.msra.mxu0 0
        %2701 = vmatprep.subr.bf16.mxu0 0
        %2702 = vmatpush1.bf16.msra.mxu0 0
        %2703 = vmatprep.subr.bf16.mxu0 0
        %2704 = vmatpush1.bf16.msra.mxu0 0
        %2705 = vmatprep.subr.bf16.mxu0 0
        %2706 = vmatpush1.bf16.msra.mxu0 0
        %2707 = vmatprep.subr.bf16.mxu0 0
        %2708 = vmatpush1.bf16.msra.mxu0 0
        %2709 = vmatprep.subr.bf16.mxu0 0
        %2710 = vmatpush1.bf16.msra.mxu0 0
        %2711 = vmatprep.subr.bf16.mxu0 0
        %2712 = vmatpush1.bf16.msra.mxu0 0
        %2713 = vmatprep.subr.bf16.mxu0 0
        %2714 = vmatpush1.bf16.msra.mxu0 0
        %2715 = vmatprep.subr.bf16.mxu0 0
        %2716 = vmatpush1.bf16.msra.mxu0 0
        %2717 = vmatprep.subr.bf16.mxu0 0
        %2718 = vmatpush1.bf16.msra.mxu0 0
        %2719 = vmatprep.subr.bf16.mxu0 0
        %2720 = vmatpush1.bf16.msra.mxu0 0
        %2721 = vmatprep.subr.bf16.mxu0 0
        %2722 = vmatpush1.bf16.msra.mxu0 0
        %2723 = vmatprep.mubr.bf16.mxu0 0
        %2724 = vmatmul.mubr.bf16.gmra.mrb[0].mxu0 %v2689
        %v2725 = vpop.f32.mrb[0].mxu0
        %v2726 = vadd.f32 0.0, %v2725
        %v2727 = vpop.f32.mrb[0].mxu0
        %v2728 = vadd.f32 0.0, %v2727
        %v2729 = vpop.f32.mrb[0].mxu0
        %v2730 = vpop.f32.mrb[0].mxu0
        %2731 = vdwg.mxu0
        %2732 = vmatprep.subr.bf16.mxu0 %v2680
        %2733 = vmatpush1.bf16.msra.mxu0 %v2679
        %2734 = vmatprep.subr.bf16.mxu0 0
        %2735 = vmatpush1.bf16.msra.mxu0 0
        %2736 = vmatprep.subr.bf16.mxu0 0
        %2737 = vmatpush1.bf16.msra.mxu0 0
        %2738 = vmatprep.subr.bf16.mxu0 0
        %2739 = vmatpush1.bf16.msra.mxu0 0
        %2740 = vmatprep.subr.bf16.mxu0 0
        %2741 = vmatpush1.bf16.msra.mxu0 0
        %2742 = vmatprep.subr.bf16.mxu0 0
        %2743 = vmatpush1.bf16.msra.mxu0 0
        %2744 = vmatprep.subr.bf16.mxu0 0
        %2745 = vmatpush1.bf16.msra.mxu0 0
        %2746 = vmatprep.subr.bf16.mxu0 0
        %2747 = vmatpush1.bf16.msra.mxu0 0
        %2748 = vmatprep.subr.bf16.mxu0 0
        %2749 = vmatpush1.bf16.msra.mxu0 0
        %2750 = vmatprep.subr.bf16.mxu0 0
        %2751 = vmatpush1.bf16.msra.mxu0 0
        %2752 = vmatprep.subr.bf16.mxu0 0
        %2753 = vmatpush1.bf16.msra.mxu0 0
        %2754 = vmatprep.subr.bf16.mxu0 0
        %2755 = vmatpush1.bf16.msra.mxu0 0
        %2756 = vmatprep.subr.bf16.mxu0 0
        %2757 = vmatpush1.bf16.msra.mxu0 0
        %2758 = vmatprep.subr.bf16.mxu0 0
        %2759 = vmatpush1.bf16.msra.mxu0 0
        %2760 = vmatprep.subr.bf16.mxu0 0
        %2761 = vmatpush1.bf16.msra.mxu0 0
        %2762 = vmatprep.subr.bf16.mxu0 0
        %2763 = vmatpush1.bf16.msra.mxu0 0
        %2764 = vmatprep.mubr.bf16.mxu0 0
        %2765 = vmatmul.mubr.bf16.gmra.mrb[0].mxu0 %v2689
        %v2766 = vpop.f32.mrb[0].mxu0
        %v2767 = vadd.f32 0.0, %v2766
        %v2768 = vpop.f32.mrb[0].mxu0
        %v2769 = vadd.f32 0.0, %v2768
        %v2770 = vpop.f32.mrb[0].mxu0
        %v2771 = vpop.f32.mrb[0].mxu0
        %2772 = vdwg.mxu0
        %2773 = vmatprep.subr.bf16.mxu0 %v2682
        %2774 = vmatpush1.bf16.msra.mxu0 %v2681
        %2775 = vmatprep.subr.bf16.mxu0 0
        %2776 = vmatpush1.bf16.msra.mxu0 0
        %2777 = vmatprep.subr.bf16.mxu0 0
        %2778 = vmatpush1.bf16.msra.mxu0 0
        %2779 = vmatprep.subr.bf16.mxu0 0
        %2780 = vmatpush1.bf16.msra.mxu0 0
        %2781 = vmatprep.subr.bf16.mxu0 0
        %2782 = vmatpush1.bf16.msra.mxu0 0
        %2783 = vmatprep.subr.bf16.mxu0 0
        %2784 = vmatpush1.bf16.msra.mxu0 0
        %2785 = vmatprep.subr.bf16.mxu0 0
        %2786 = vmatpush1.bf16.msra.mxu0 0
        %2787 = vmatprep.subr.bf16.mxu0 0
        %2788 = vmatpush1.bf16.msra.mxu0 0
        %2789 = vmatprep.subr.bf16.mxu0 0
        %2790 = vmatpush1.bf16.msra.mxu0 0
        %2791 = vmatprep.subr.bf16.mxu0 0
        %2792 = vmatpush1.bf16.msra.mxu0 0
        %2793 = vmatprep.subr.bf16.mxu0 0
        %2794 = vmatpush1.bf16.msra.mxu0 0
        %2795 = vmatprep.subr.bf16.mxu0 0
        %2796 = vmatpush1.bf16.msra.mxu0 0
        %2797 = vmatprep.subr.bf16.mxu0 0
        %2798 = vmatpush1.bf16.msra.mxu0 0
        %2799 = vmatprep.subr.bf16.mxu0 0
        %2800 = vmatpush1.bf16.msra.mxu0 0
        %2801 = vmatprep.subr.bf16.mxu0 0
        %2802 = vmatpush1.bf16.msra.mxu0 0
        %2803 = vmatprep.subr.bf16.mxu0 0
        %2804 = vmatpush1.bf16.msra.mxu0 0
        %2805 = vmatprep.mubr.bf16.mxu0 0
        %2806 = vmatmul.mubr.bf16.gmra.mrb[0].mxu0 %v2689
        %v2807 = vpop.f32.mrb[0].mxu0
        %v2808 = vadd.f32 0.0, %v2807
        %v2809 = vpop.f32.mrb[0].mxu0
        %v2810 = vadd.f32 0.0, %v2809
        %v2811 = vpop.f32.mrb[0].mxu0
        %v2812 = vpop.f32.mrb[0].mxu0
        %2813 = vdwg.mxu0
        %2814 = vmatprep.subr.bf16.mxu0 %v2685
        %2815 = vmatpush1.bf16.msra.mxu0 %v2684
        %2816 = vmatprep.subr.bf16.mxu0 0
        %2817 = vmatpush1.bf16.msra.mxu0 0
        %2818 = vmatprep.subr.bf16.mxu0 0
        %2819 = vmatpush1.bf16.msra.mxu0 0
        %2820 = vmatprep.subr.bf16.mxu0 0
        %2821 = vmatpush1.bf16.msra.mxu0 0
        %2822 = vmatprep.subr.bf16.mxu0 0
        %2823 = vmatpush1.bf16.msra.mxu0 0
        %2824 = vmatprep.subr.bf16.mxu0 0
        %2825 = vmatpush1.bf16.msra.mxu0 0
        %2826 = vmatprep.subr.bf16.mxu0 0
        %2827 = vmatpush1.bf16.msra.mxu0 0
        %2828 = vmatprep.subr.bf16.mxu0 0
        %2829 = vmatpush1.bf16.msra.mxu0 0
        %2830 = vmatprep.subr.bf16.mxu0 0
        %2831 = vmatpush1.bf16.msra.mxu0 0
        %2832 = vmatprep.subr.bf16.mxu0 0
        %2833 = vmatpush1.bf16.msra.mxu0 0
        %2834 = vmatprep.subr.bf16.mxu0 0
        %2835 = vmatpush1.bf16.msra.mxu0 0
        %2836 = vmatprep.subr.bf16.mxu0 0
        %2837 = vmatpush1.bf16.msra.mxu0 0
        %2838 = vmatprep.subr.bf16.mxu0 0
        %2839 = vmatpush1.bf16.msra.mxu0 0
        %2840 = vmatprep.subr.bf16.mxu0 0
        %2841 = vmatpush1.bf16.msra.mxu0 0
        %2842 = vmatprep.subr.bf16.mxu0 0
        %2843 = vmatpush1.bf16.msra.mxu0 0
        %2844 = vmatprep.subr.bf16.mxu0 0
        %2845 = vmatpush1.bf16.msra.mxu0 0
        %2846 = vmatprep.mubr.bf16.mxu0 0
        %2847 = vmatmul.mubr.bf16.gmra.mrb[0].mxu0 %v2689
        %v2848 = vpop.f32.mrb[0].mxu0
        %v2849 = vadd.f32 0.0, %v2848
        %v2850 = vpop.f32.mrb[0].mxu0
        %v2851 = vadd.f32 0.0, %v2850
        %v2852 = vpop.f32.mrb[0].mxu0
        %v2853 = vpop.f32.mrb[0].mxu0
        %2854 = vdwg.mxu0
        %v2856 = vsel %vm670, %v2683, 0
        %2858 = vmatprep.subr.bf16.mxu0 %v2676
        %2859 = vmatpush1.bf16.msra.mxu0 %v2675
        %2860 = vmatprep.subr.bf16.mxu0 0
        %2861 = vmatpush1.bf16.msra.mxu0 0
        %2862 = vmatprep.subr.bf16.mxu0 0
        %2863 = vmatpush1.bf16.msra.mxu0 0
        %2864 = vmatprep.subr.bf16.mxu0 0
        %2865 = vmatpush1.bf16.msra.mxu0 0
        %2866 = vmatprep.subr.bf16.mxu0 0
        %2867 = vmatpush1.bf16.msra.mxu0 0
        %2868 = vmatprep.subr.bf16.mxu0 0
        %2869 = vmatpush1.bf16.msra.mxu0 0
        %2870 = vmatprep.subr.bf16.mxu0 0
        %2871 = vmatpush1.bf16.msra.mxu0 0
        %2872 = vmatprep.subr.bf16.mxu0 0
        %2873 = vmatpush1.bf16.msra.mxu0 0
        %2874 = vmatprep.subr.bf16.mxu0 0
        %2875 = vmatpush1.bf16.msra.mxu0 0
        %2876 = vmatprep.subr.bf16.mxu0 0
        %2877 = vmatpush1.bf16.msra.mxu0 0
        %2878 = vmatprep.subr.bf16.mxu0 0
        %2879 = vmatpush1.bf16.msra.mxu0 0
        %2880 = vmatprep.subr.bf16.mxu0 0
        %2881 = vmatpush1.bf16.msra.mxu0 0
        %2882 = vmatprep.subr.bf16.mxu0 0
        %2883 = vmatpush1.bf16.msra.mxu0 0
        %2884 = vmatprep.subr.bf16.mxu0 0
        %2885 = vmatpush1.bf16.msra.mxu0 0
        %2886 = vmatprep.subr.bf16.mxu0 0
        %2887 = vmatpush1.bf16.msra.mxu0 0
        %2888 = vmatprep.subr.bf16.mxu0 0
        %2889 = vmatpush1.bf16.msra.mxu0 0
        %2890 = vmatprep.mubr.bf16.mxu0 0
        %2891 = vmatmul.mubr.bf16.gmra.mrb[0].mxu0 %v2856
        %v2892 = vpop.f32.mrb[0].mxu0
        %v2893 = vadd.f32 %v2726, %v2892
        %v2894 = vpop.f32.mrb[0].mxu0
        %v2895 = vadd.f32 %v2728, %v2894
        %v2896 = vpop.f32.mrb[0].mxu0
        %v2897 = vpop.f32.mrb[0].mxu0
        %2898 = vdwg.mxu0
        %2899 = vmatprep.subr.bf16.mxu0 %v2678
        %2900 = vmatpush1.bf16.msra.mxu0 %v2677
        %2901 = vmatprep.subr.bf16.mxu0 0
        %2902 = vmatpush1.bf16.msra.mxu0 0
        %2903 = vmatprep.subr.bf16.mxu0 0
        %2904 = vmatpush1.bf16.msra.mxu0 0
        %2905 = vmatprep.subr.bf16.mxu0 0
        %2906 = vmatpush1.bf16.msra.mxu0 0
        %2907 = vmatprep.subr.bf16.mxu0 0
        %2908 = vmatpush1.bf16.msra.mxu0 0
        %2909 = vmatprep.subr.bf16.mxu0 0
        %2910 = vmatpush1.bf16.msra.mxu0 0
        %2911 = vmatprep.subr.bf16.mxu0 0
        %2912 = vmatpush1.bf16.msra.mxu0 0
        %2913 = vmatprep.subr.bf16.mxu0 0
        %2914 = vmatpush1.bf16.msra.mxu0 0
        %2915 = vmatprep.subr.bf16.mxu0 0
        %2916 = vmatpush1.bf16.msra.mxu0 0
        %2917 = vmatprep.subr.bf16.mxu0 0
        %2918 = vmatpush1.bf16.msra.mxu0 0
        %2919 = vmatprep.subr.bf16.mxu0 0
        %2920 = vmatpush1.bf16.msra.mxu0 0
        %2921 = vmatprep.subr.bf16.mxu0 0
        %2922 = vmatpush1.bf16.msra.mxu0 0
        %2923 = vmatprep.subr.bf16.mxu0 0
        %2924 = vmatpush1.bf16.msra.mxu0 0
        %2925 = vmatprep.subr.bf16.mxu0 0
        %2926 = vmatpush1.bf16.msra.mxu0 0
        %2927 = vmatprep.subr.bf16.mxu0 0
        %2928 = vmatpush1.bf16.msra.mxu0 0
        %2929 = vmatprep.subr.bf16.mxu0 0
        %2930 = vmatpush1.bf16.msra.mxu0 0
        %2931 = vmatprep.mubr.bf16.mxu0 0
        %2932 = vmatmul.mubr.bf16.gmra.mrb[0].mxu0 %v2856
        %v2933 = vpop.f32.mrb[0].mxu0
        %v2934 = vadd.f32 %v2767, %v2933
        %v2935 = vpop.f32.mrb[0].mxu0
        %v2936 = vadd.f32 %v2769, %v2935
        %v2937 = vpop.f32.mrb[0].mxu0
        %v2938 = vpop.f32.mrb[0].mxu0
        %2939 = vdwg.mxu0
        %2940 = vmatprep.subr.bf16.mxu0 %v2680
        %2941 = vmatpush1.bf16.msra.mxu0 %v2679
        %2942 = vmatprep.subr.bf16.mxu0 0
        %2943 = vmatpush1.bf16.msra.mxu0 0
        %2944 = vmatprep.subr.bf16.mxu0 0
        %2945 = vmatpush1.bf16.msra.mxu0 0
        %2946 = vmatprep.subr.bf16.mxu0 0
        %2947 = vmatpush1.bf16.msra.mxu0 0
        %2948 = vmatprep.subr.bf16.mxu0 0
        %2949 = vmatpush1.bf16.msra.mxu0 0
        %2950 = vmatprep.subr.bf16.mxu0 0
        %2951 = vmatpush1.bf16.msra.mxu0 0
        %2952 = vmatprep.subr.bf16.mxu0 0
        %2953 = vmatpush1.bf16.msra.mxu0 0
        %2954 = vmatprep.subr.bf16.mxu0 0
        %2955 = vmatpush1.bf16.msra.mxu0 0
        %2956 = vmatprep.subr.bf16.mxu0 0
        %2957 = vmatpush1.bf16.msra.mxu0 0
        %2958 = vmatprep.subr.bf16.mxu0 0
        %2959 = vmatpush1.bf16.msra.mxu0 0
        %2960 = vmatprep.subr.bf16.mxu0 0
        %2961 = vmatpush1.bf16.msra.mxu0 0
        %2962 = vmatprep.subr.bf16.mxu0 0
        %2963 = vmatpush1.bf16.msra.mxu0 0
        %2964 = vmatprep.subr.bf16.mxu0 0
        %2965 = vmatpush1.bf16.msra.mxu0 0
        %2966 = vmatprep.subr.bf16.mxu0 0
        %2967 = vmatpush1.bf16.msra.mxu0 0
        %2968 = vmatprep.subr.bf16.mxu0 0
        %2969 = vmatpush1.bf16.msra.mxu0 0
        %2970 = vmatprep.subr.bf16.mxu0 0
        %2971 = vmatpush1.bf16.msra.mxu0 0
        %2972 = vmatprep.mubr.bf16.mxu0 0
        %2973 = vmatmul.mubr.bf16.gmra.mrb[0].mxu0 %v2856
        %v2974 = vpop.f32.mrb[0].mxu0
        %v2975 = vadd.f32 %v2808, %v2974
        %v2976 = vpop.f32.mrb[0].mxu0
        %v2977 = vadd.f32 %v2810, %v2976
        %v2978 = vpop.f32.mrb[0].mxu0
        %v2979 = vpop.f32.mrb[0].mxu0
        %2980 = vdwg.mxu0
        %2981 = vmatprep.subr.bf16.mxu0 %v2682
        %2982 = vmatpush1.bf16.msra.mxu0 %v2681
        %2983 = vmatprep.subr.bf16.mxu0 0
        %2984 = vmatpush1.bf16.msra.mxu0 0
        %2985 = vmatprep.subr.bf16.mxu0 0
        %2986 = vmatpush1.bf16.msra.mxu0 0
        %2987 = vmatprep.subr.bf16.mxu0 0
        %2988 = vmatpush1.bf16.msra.mxu0 0
        %2989 = vmatprep.subr.bf16.mxu0 0
        %2990 = vmatpush1.bf16.msra.mxu0 0
        %2991 = vmatprep.subr.bf16.mxu0 0
        %2992 = vmatpush1.bf16.msra.mxu0 0
        %2993 = vmatprep.subr.bf16.mxu0 0
        %2994 = vmatpush1.bf16.msra.mxu0 0
        %2995 = vmatprep.subr.bf16.mxu0 0
        %2996 = vmatpush1.bf16.msra.mxu0 0
        %2997 = vmatprep.subr.bf16.mxu0 0
        %2998 = vmatpush1.bf16.msra.mxu0 0
        %2999 = vmatprep.subr.bf16.mxu0 0
        %3000 = vmatpush1.bf16.msra.mxu0 0
        %3001 = vmatprep.subr.bf16.mxu0 0
        %3002 = vmatpush1.bf16.msra.mxu0 0
        %3003 = vmatprep.subr.bf16.mxu0 0
        %3004 = vmatpush1.bf16.msra.mxu0 0
        %3005 = vmatprep.subr.bf16.mxu0 0
        %3006 = vmatpush1.bf16.msra.mxu0 0
        %3007 = vmatprep.subr.bf16.mxu0 0
        %3008 = vmatpush1.bf16.msra.mxu0 0
        %3009 = vmatprep.subr.bf16.mxu0 0
        %3010 = vmatpush1.bf16.msra.mxu0 0
        %3011 = vmatprep.subr.bf16.mxu0 0
        %3012 = vmatpush1.bf16.msra.mxu0 0
        %3013 = vmatprep.mubr.bf16.mxu0 0
        %3014 = vmatmul.mubr.bf16.gmra.mrb[0].mxu0 %v2856
        %v3015 = vpop.f32.mrb[0].mxu0
        %v3016 = vadd.f32 %v2849, %v3015
        %v3017 = vpop.f32.mrb[0].mxu0
        %v3018 = vadd.f32 %v2851, %v3017
        %v3019 = vpop.f32.mrb[0].mxu0
        %v3020 = vpop.f32.mrb[0].mxu0
        %3021 = vdwg.mxu0
        %v3022 = vld [vmem:[#allocation2 + $0x20] sm:$0xff]
        %v3023 = vld [vmem:[#allocation2 + $0x28] sm:$0xff]
        %v3024 = vld [vmem:[#allocation2 + $0x30] sm:$0xff]
        %v3025 = vld [vmem:[#allocation2 + $0x38] sm:$0xff]
        %v3026 = vld [vmem:[#allocation2 + $0x40] sm:$0xff]
        %v3027 = vld [vmem:[#allocation2 + $0x48] sm:$0xff]
        %v3028 = vld [vmem:[#allocation2 + $0x50] sm:$0xff]
        %v3029 = vld [vmem:[#allocation2 + $0x58] sm:$0xff]
        %s3030 = scalar_lea.vmem %s4, 8
        %v3031 = vld [vmem:[%s3030] sm:$0xf]
        %v3033 = vsel %vm670, %v3031, 0
        %3035 = vmatprep.subr.bf16.mxu0 %v3023
        %3036 = vmatpush1.bf16.msra.mxu0 %v3022
        %3037 = vmatprep.subr.bf16.mxu0 0
        %3038 = vmatpush1.bf16.msra.mxu0 0
        %3039 = vmatprep.subr.bf16.mxu0 0
        %3040 = vmatpush1.bf16.msra.mxu0 0
        %3041 = vmatprep.subr.bf16.mxu0 0
        %3042 = vmatpush1.bf16.msra.mxu0 0
        %3043 = vmatprep.subr.bf16.mxu0 0
        %3044 = vmatpush1.bf16.msra.mxu0 0
        %3045 = vmatprep.subr.bf16.mxu0 0
        %3046 = vmatpush1.bf16.msra.mxu0 0
        %3047 = vmatprep.subr.bf16.mxu0 0
        %3048 = vmatpush1.bf16.msra.mxu0 0
        %3049 = vmatprep.subr.bf16.mxu0 0
        %3050 = vmatpush1.bf16.msra.mxu0 0
        %3051 = vmatprep.subr.bf16.mxu0 0
        %3052 = vmatpush1.bf16.msra.mxu0 0
        %3053 = vmatprep.subr.bf16.mxu0 0
        %3054 = vmatpush1.bf16.msra.mxu0 0
        %3055 = vmatprep.subr.bf16.mxu0 0
        %3056 = vmatpush1.bf16.msra.mxu0 0
        %3057 = vmatprep.subr.bf16.mxu0 0
        %3058 = vmatpush1.bf16.msra.mxu0 0
        %3059 = vmatprep.subr.bf16.mxu0 0
        %3060 = vmatpush1.bf16.msra.mxu0 0
        %3061 = vmatprep.subr.bf16.mxu0 0
        %3062 = vmatpush1.bf16.msra.mxu0 0
        %3063 = vmatprep.subr.bf16.mxu0 0
        %3064 = vmatpush1.bf16.msra.mxu0 0
        %3065 = vmatprep.subr.bf16.mxu0 0
        %3066 = vmatpush1.bf16.msra.mxu0 0
        %3067 = vmatprep.mubr.bf16.mxu0 0
        %3068 = vmatmul.mubr.bf16.gmra.mrb[0].mxu0 %v3033
        %v3069 = vpop.f32.mrb[0].mxu0
        %v3070 = vadd.f32 0.0, %v3069
        %v3071 = vpop.f32.mrb[0].mxu0
        %v3072 = vadd.f32 0.0, %v3071
        %v3073 = vpop.f32.mrb[0].mxu0
        %v3074 = vpop.f32.mrb[0].mxu0
        %3075 = vdwg.mxu0
        %3076 = vmatprep.subr.bf16.mxu0 %v3025
        %3077 = vmatpush1.bf16.msra.mxu0 %v3024
        %3078 = vmatprep.subr.bf16.mxu0 0
        %3079 = vmatpush1.bf16.msra.mxu0 0
        %3080 = vmatprep.subr.bf16.mxu0 0
        %3081 = vmatpush1.bf16.msra.mxu0 0
        %3082 = vmatprep.subr.bf16.mxu0 0
        %3083 = vmatpush1.bf16.msra.mxu0 0
        %3084 = vmatprep.subr.bf16.mxu0 0
        %3085 = vmatpush1.bf16.msra.mxu0 0
        %3086 = vmatprep.subr.bf16.mxu0 0
        %3087 = vmatpush1.bf16.msra.mxu0 0
        %3088 = vmatprep.subr.bf16.mxu0 0
        %3089 = vmatpush1.bf16.msra.mxu0 0
        %3090 = vmatprep.subr.bf16.mxu0 0
        %3091 = vmatpush1.bf16.msra.mxu0 0
        %3092 = vmatprep.subr.bf16.mxu0 0
        %3093 = vmatpush1.bf16.msra.mxu0 0
        %3094 = vmatprep.subr.bf16.mxu0 0
        %3095 = vmatpush1.bf16.msra.mxu0 0
        %3096 = vmatprep.subr.bf16.mxu0 0
        %3097 = vmatpush1.bf16.msra.mxu0 0
        %3098 = vmatprep.subr.bf16.mxu0 0
        %3099 = vmatpush1.bf16.msra.mxu0 0
        %3100 = vmatprep.subr.bf16.mxu0 0
        %3101 = vmatpush1.bf16.msra.mxu0 0
        %3102 = vmatprep.subr.bf16.mxu0 0
        %3103 = vmatpush1.bf16.msra.mxu0 0
        %3104 = vmatprep.subr.bf16.mxu0 0
        %3105 = vmatpush1.bf16.msra.mxu0 0
        %3106 = vmatprep.subr.bf16.mxu0 0
        %3107 = vmatpush1.bf16.msra.mxu0 0
        %3108 = vmatprep.mubr.bf16.mxu0 0
        %3109 = vmatmul.mubr.bf16.gmra.mrb[0].mxu0 %v3033
        %v3110 = vpop.f32.mrb[0].mxu0
        %v3111 = vadd.f32 0.0, %v3110
        %v3112 = vpop.f32.mrb[0].mxu0
        %v3113 = vadd.f32 0.0, %v3112
        %v3114 = vpop.f32.mrb[0].mxu0
        %v3115 = vpop.f32.mrb[0].mxu0
        %3116 = vdwg.mxu0
        %3117 = vmatprep.subr.bf16.mxu0 %v3027
        %3118 = vmatpush1.bf16.msra.mxu0 %v3026
        %3119 = vmatprep.subr.bf16.mxu0 0
        %3120 = vmatpush1.bf16.msra.mxu0 0
        %3121 = vmatprep.subr.bf16.mxu0 0
        %3122 = vmatpush1.bf16.msra.mxu0 0
        %3123 = vmatprep.subr.bf16.mxu0 0
        %3124 = vmatpush1.bf16.msra.mxu0 0
        %3125 = vmatprep.subr.bf16.mxu0 0
        %3126 = vmatpush1.bf16.msra.mxu0 0
        %3127 = vmatprep.subr.bf16.mxu0 0
        %3128 = vmatpush1.bf16.msra.mxu0 0
        %3129 = vmatprep.subr.bf16.mxu0 0
        %3130 = vmatpush1.bf16.msra.mxu0 0
        %3131 = vmatprep.subr.bf16.mxu0 0
        %3132 = vmatpush1.bf16.msra.mxu0 0
        %3133 = vmatprep.subr.bf16.mxu0 0
        %3134 = vmatpush1.bf16.msra.mxu0 0
        %3135 = vmatprep.subr.bf16.mxu0 0
        %3136 = vmatpush1.bf16.msra.mxu0 0
        %3137 = vmatprep.subr.bf16.mxu0 0
        %3138 = vmatpush1.bf16.msra.mxu0 0
        %3139 = vmatprep.subr.bf16.mxu0 0
        %3140 = vmatpush1.bf16.msra.mxu0 0
        %3141 = vmatprep.subr.bf16.mxu0 0
        %3142 = vmatpush1.bf16.msra.mxu0 0
        %3143 = vmatprep.subr.bf16.mxu0 0
        %3144 = vmatpush1.bf16.msra.mxu0 0
        %3145 = vmatprep.subr.bf16.mxu0 0
        %3146 = vmatpush1.bf16.msra.mxu0 0
        %3147 = vmatprep.subr.bf16.mxu0 0
        %3148 = vmatpush1.bf16.msra.mxu0 0
        %3149 = vmatprep.mubr.bf16.mxu0 0
        %3150 = vmatmul.mubr.bf16.gmra.mrb[0].mxu0 %v3033
        %v3151 = vpop.f32.mrb[0].mxu0
        %v3152 = vadd.f32 0.0, %v3151
        %v3153 = vpop.f32.mrb[0].mxu0
        %v3154 = vadd.f32 0.0, %v3153
        %v3155 = vpop.f32.mrb[0].mxu0
        %v3156 = vpop.f32.mrb[0].mxu0
        %3157 = vdwg.mxu0
        %3158 = vmatprep.subr.bf16.mxu0 %v3029
        %3159 = vmatpush1.bf16.msra.mxu0 %v3028
        %3160 = vmatprep.subr.bf16.mxu0 0
        %3161 = vmatpush1.bf16.msra.mxu0 0
        %3162 = vmatprep.subr.bf16.mxu0 0
        %3163 = vmatpush1.bf16.msra.mxu0 0
        %3164 = vmatprep.subr.bf16.mxu0 0
        %3165 = vmatpush1.bf16.msra.mxu0 0
        %3166 = vmatprep.subr.bf16.mxu0 0
        %3167 = vmatpush1.bf16.msra.mxu0 0
        %3168 = vmatprep.subr.bf16.mxu0 0
        %3169 = vmatpush1.bf16.msra.mxu0 0
        %3170 = vmatprep.subr.bf16.mxu0 0
        %3171 = vmatpush1.bf16.msra.mxu0 0
        %3172 = vmatprep.subr.bf16.mxu0 0
        %3173 = vmatpush1.bf16.msra.mxu0 0
        %3174 = vmatprep.subr.bf16.mxu0 0
        %3175 = vmatpush1.bf16.msra.mxu0 0
        %3176 = vmatprep.subr.bf16.mxu0 0
        %3177 = vmatpush1.bf16.msra.mxu0 0
        %3178 = vmatprep.subr.bf16.mxu0 0
        %3179 = vmatpush1.bf16.msra.mxu0 0
        %3180 = vmatprep.subr.bf16.mxu0 0
        %3181 = vmatpush1.bf16.msra.mxu0 0
        %3182 = vmatprep.subr.bf16.mxu0 0
        %3183 = vmatpush1.bf16.msra.mxu0 0
        %3184 = vmatprep.subr.bf16.mxu0 0
        %3185 = vmatpush1.bf16.msra.mxu0 0
        %3186 = vmatprep.subr.bf16.mxu0 0
        %3187 = vmatpush1.bf16.msra.mxu0 0
        %3188 = vmatprep.subr.bf16.mxu0 0
        %3189 = vmatpush1.bf16.msra.mxu0 0
        %3190 = vmatprep.mubr.bf16.mxu0 0
        %3191 = vmatmul.mubr.bf16.gmra.mrb[0].mxu0 %v3033
        %v3192 = vpop.f32.mrb[0].mxu0
        %v3193 = vadd.f32 0.0, %v3192
        %v3194 = vpop.f32.mrb[0].mxu0
        %v3195 = vadd.f32 0.0, %v3194
        %v3196 = vpop.f32.mrb[0].mxu0
        %v3197 = vpop.f32.mrb[0].mxu0
        %3198 = vdwg.mxu0
        %v3199 = vadd.f32 %v2893, %v3070
        %v3200 = vadd.f32 %v2895, %v3072
        %v3201 = vadd.f32 %v2934, %v3111
        %v3202 = vadd.f32 %v2936, %v3113
        %v3203 = vadd.f32 %v2975, %v3152
        %v3204 = vadd.f32 %v2977, %v3154
        %v3205 = vadd.f32 %v3016, %v3193
        %v3206 = vadd.f32 %v3018, %v3195
        %v3207 = vld [vmem:[#allocation2 + $0x30] sm:$0xff]
        %v3208 = vld [vmem:[#allocation2 + $0x38] sm:$0xff]
        %v3209 = vld [vmem:[#allocation2 + $0x40] sm:$0xff]
        %v3210 = vld [vmem:[#allocation2 + $0x48] sm:$0xff]
        %v3211 = vld [vmem:[#allocation2 + $0x50] sm:$0xff]
        %v3212 = vld [vmem:[#allocation2 + $0x58] sm:$0xff]
        %v3213 = vld [vmem:[#allocation2 + $0x60] sm:$0xff]
        %v3214 = vld [vmem:[#allocation2 + $0x68] sm:$0xff]
        %s3215 = scalar_lea.vmem %s4, 12
        %v3216 = vld [vmem:[%s3215] sm:$0xf]
        %v3218 = vsel %vm670, %v3216, 0
        %3220 = vmatprep.subr.bf16.mxu0 %v3208
        %3221 = vmatpush1.bf16.msra.mxu0 %v3207
        %3222 = vmatprep.subr.bf16.mxu0 0
        %3223 = vmatpush1.bf16.msra.mxu0 0
        %3224 = vmatprep.subr.bf16.mxu0 0
        %3225 = vmatpush1.bf16.msra.mxu0 0
        %3226 = vmatprep.subr.bf16.mxu0 0
        %3227 = vmatpush1.bf16.msra.mxu0 0
        %3228 = vmatprep.subr.bf16.mxu0 0
        %3229 = vmatpush1.bf16.msra.mxu0 0
        %3230 = vmatprep.subr.bf16.mxu0 0
        %3231 = vmatpush1.bf16.msra.mxu0 0
        %3232 = vmatprep.subr.bf16.mxu0 0
        %3233 = vmatpush1.bf16.msra.mxu0 0
        %3234 = vmatprep.subr.bf16.mxu0 0
        %3235 = vmatpush1.bf16.msra.mxu0 0
        %3236 = vmatprep.subr.bf16.mxu0 0
        %3237 = vmatpush1.bf16.msra.mxu0 0
        %3238 = vmatprep.subr.bf16.mxu0 0
        %3239 = vmatpush1.bf16.msra.mxu0 0
        %3240 = vmatprep.subr.bf16.mxu0 0
        %3241 = vmatpush1.bf16.msra.mxu0 0
        %3242 = vmatprep.subr.bf16.mxu0 0
        %3243 = vmatpush1.bf16.msra.mxu0 0
        %3244 = vmatprep.subr.bf16.mxu0 0
        %3245 = vmatpush1.bf16.msra.mxu0 0
        %3246 = vmatprep.subr.bf16.mxu0 0
        %3247 = vmatpush1.bf16.msra.mxu0 0
        %3248 = vmatprep.subr.bf16.mxu0 0
        %3249 = vmatpush1.bf16.msra.mxu0 0
        %3250 = vmatprep.subr.bf16.mxu0 0
        %3251 = vmatpush1.bf16.msra.mxu0 0
        %3252 = vmatprep.mubr.bf16.mxu0 0
        %3253 = vmatmul.mubr.bf16.gmra.mrb[0].mxu0 %v3218
        %v3254 = vpop.f32.mrb[0].mxu0
        %v3255 = vadd.f32 0.0, %v3254
        %v3256 = vpop.f32.mrb[0].mxu0
        %v3257 = vadd.f32 0.0, %v3256
        %v3258 = vpop.f32.mrb[0].mxu0
        %v3259 = vpop.f32.mrb[0].mxu0
        %3260 = vdwg.mxu0
        %3261 = vmatprep.subr.bf16.mxu0 %v3210
        %3262 = vmatpush1.bf16.msra.mxu0 %v3209
        %3263 = vmatprep.subr.bf16.mxu0 0
        %3264 = vmatpush1.bf16.msra.mxu0 0
        %3265 = vmatprep.subr.bf16.mxu0 0
        %3266 = vmatpush1.bf16.msra.mxu0 0
        %3267 = vmatprep.subr.bf16.mxu0 0
        %3268 = vmatpush1.bf16.msra.mxu0 0
        %3269 = vmatprep.subr.bf16.mxu0 0
        %3270 = vmatpush1.bf16.msra.mxu0 0
        %3271 = vmatprep.subr.bf16.mxu0 0
        %3272 = vmatpush1.bf16.msra.mxu0 0
        %3273 = vmatprep.subr.bf16.mxu0 0
        %3274 = vmatpush1.bf16.msra.mxu0 0
        %3275 = vmatprep.subr.bf16.mxu0 0
        %3276 = vmatpush1.bf16.msra.mxu0 0
        %3277 = vmatprep.subr.bf16.mxu0 0
        %3278 = vmatpush1.bf16.msra.mxu0 0
        %3279 = vmatprep.subr.bf16.mxu0 0
        %3280 = vmatpush1.bf16.msra.mxu0 0
        %3281 = vmatprep.subr.bf16.mxu0 0
        %3282 = vmatpush1.bf16.msra.mxu0 0
        %3283 = vmatprep.subr.bf16.mxu0 0
        %3284 = vmatpush1.bf16.msra.mxu0 0
        %3285 = vmatprep.subr.bf16.mxu0 0
        %3286 = vmatpush1.bf16.msra.mxu0 0
        %3287 = vmatprep.subr.bf16.mxu0 0
        %3288 = vmatpush1.bf16.msra.mxu0 0
        %3289 = vmatprep.subr.bf16.mxu0 0
        %3290 = vmatpush1.bf16.msra.mxu0 0
        %3291 = vmatprep.subr.bf16.mxu0 0
        %3292 = vmatpush1.bf16.msra.mxu0 0
        %3293 = vmatprep.mubr.bf16.mxu0 0
        %3294 = vmatmul.mubr.bf16.gmra.mrb[0].mxu0 %v3218
        %v3295 = vpop.f32.mrb[0].mxu0
        %v3296 = vadd.f32 0.0, %v3295
        %v3297 = vpop.f32.mrb[0].mxu0
        %v3298 = vadd.f32 0.0, %v3297
        %v3299 = vpop.f32.mrb[0].mxu0
        %v3300 = vpop.f32.mrb[0].mxu0
        %3301 = vdwg.mxu0
        %3302 = vmatprep.subr.bf16.mxu0 %v3212
        %3303 = vmatpush1.bf16.msra.mxu0 %v3211
        %3304 = vmatprep.subr.bf16.mxu0 0
        %3305 = vmatpush1.bf16.msra.mxu0 0
        %3306 = vmatprep.subr.bf16.mxu0 0
        %3307 = vmatpush1.bf16.msra.mxu0 0
        %3308 = vmatprep.subr.bf16.mxu0 0
        %3309 = vmatpush1.bf16.msra.mxu0 0
        %3310 = vmatprep.subr.bf16.mxu0 0
        %3311 = vmatpush1.bf16.msra.mxu0 0
        %3312 = vmatprep.subr.bf16.mxu0 0
        %3313 = vmatpush1.bf16.msra.mxu0 0
        %3314 = vmatprep.subr.bf16.mxu0 0
        %3315 = vmatpush1.bf16.msra.mxu0 0
        %3316 = vmatprep.subr.bf16.mxu0 0
        %3317 = vmatpush1.bf16.msra.mxu0 0
        %3318 = vmatprep.subr.bf16.mxu0 0
        %3319 = vmatpush1.bf16.msra.mxu0 0
        %3320 = vmatprep.subr.bf16.mxu0 0
        %3321 = vmatpush1.bf16.msra.mxu0 0
        %3322 = vmatprep.subr.bf16.mxu0 0
        %3323 = vmatpush1.bf16.msra.mxu0 0
        %3324 = vmatprep.subr.bf16.mxu0 0
        %3325 = vmatpush1.bf16.msra.mxu0 0
        %3326 = vmatprep.subr.bf16.mxu0 0
        %3327 = vmatpush1.bf16.msra.mxu0 0
        %3328 = vmatprep.subr.bf16.mxu0 0
        %3329 = vmatpush1.bf16.msra.mxu0 0
        %3330 = vmatprep.subr.bf16.mxu0 0
        %3331 = vmatpush1.bf16.msra.mxu0 0
        %3332 = vmatprep.subr.bf16.mxu0 0
        %3333 = vmatpush1.bf16.msra.mxu0 0
        %3334 = vmatprep.mubr.bf16.mxu0 0
        %3335 = vmatmul.mubr.bf16.gmra.mrb[0].mxu0 %v3218
        %v3336 = vpop.f32.mrb[0].mxu0
        %v3337 = vadd.f32 0.0, %v3336
        %v3338 = vpop.f32.mrb[0].mxu0
        %v3339 = vadd.f32 0.0, %v3338
        %v3340 = vpop.f32.mrb[0].mxu0
        %v3341 = vpop.f32.mrb[0].mxu0
        %3342 = vdwg.mxu0
        %3343 = vmatprep.subr.bf16.mxu0 %v3214
        %3344 = vmatpush1.bf16.msra.mxu0 %v3213
        %3345 = vmatprep.subr.bf16.mxu0 0
        %3346 = vmatpush1.bf16.msra.mxu0 0
        %3347 = vmatprep.subr.bf16.mxu0 0
        %3348 = vmatpush1.bf16.msra.mxu0 0
        %3349 = vmatprep.subr.bf16.mxu0 0
        %3350 = vmatpush1.bf16.msra.mxu0 0
        %3351 = vmatprep.subr.bf16.mxu0 0
        %3352 = vmatpush1.bf16.msra.mxu0 0
        %3353 = vmatprep.subr.bf16.mxu0 0
        %3354 = vmatpush1.bf16.msra.mxu0 0
        %3355 = vmatprep.subr.bf16.mxu0 0
        %3356 = vmatpush1.bf16.msra.mxu0 0
        %3357 = vmatprep.subr.bf16.mxu0 0
        %3358 = vmatpush1.bf16.msra.mxu0 0
        %3359 = vmatprep.subr.bf16.mxu0 0
        %3360 = vmatpush1.bf16.msra.mxu0 0
        %3361 = vmatprep.subr.bf16.mxu0 0
        %3362 = vmatpush1.bf16.msra.mxu0 0
        %3363 = vmatprep.subr.bf16.mxu0 0
        %3364 = vmatpush1.bf16.msra.mxu0 0
        %3365 = vmatprep.subr.bf16.mxu0 0
        %3366 = vmatpush1.bf16.msra.mxu0 0
        %3367 = vmatprep.subr.bf16.mxu0 0
        %3368 = vmatpush1.bf16.msra.mxu0 0
        %3369 = vmatprep.subr.bf16.mxu0 0
        %3370 = vmatpush1.bf16.msra.mxu0 0
        %3371 = vmatprep.subr.bf16.mxu0 0
        %3372 = vmatpush1.bf16.msra.mxu0 0
        %3373 = vmatprep.subr.bf16.mxu0 0
        %3374 = vmatpush1.bf16.msra.mxu0 0
        %3375 = vmatprep.mubr.bf16.mxu0 0
        %3376 = vmatmul.mubr.bf16.gmra.mrb[0].mxu0 %v3218
        %v3377 = vpop.f32.mrb[0].mxu0
        %v3378 = vadd.f32 0.0, %v3377
        %v3379 = vpop.f32.mrb[0].mxu0
        %v3380 = vadd.f32 0.0, %v3379
        %v3381 = vpop.f32.mrb[0].mxu0
        %v3382 = vpop.f32.mrb[0].mxu0
        %3383 = vdwg.mxu0
        %v3384 = vadd.f32 %v3199, %v3255
        %v3385 = vadd.f32 %v3200, %v3257
        %v3386 = vadd.f32 %v3201, %v3296
        %v3387 = vadd.f32 %v3202, %v3298
        %v3388 = vadd.f32 %v3203, %v3337
        %v3389 = vadd.f32 %v3204, %v3339
        %v3390 = vadd.f32 %v3205, %v3378
        %v3391 = vadd.f32 %v3206, %v3380
        %v3392 = vld [vmem:[#allocation2 + $0x40] sm:$0xff]
        %v3393 = vld [vmem:[#allocation2 + $0x48] sm:$0xff]
        %v3394 = vld [vmem:[#allocation2 + $0x50] sm:$0xff]
        %v3395 = vld [vmem:[#allocation2 + $0x58] sm:$0xff]
        %v3396 = vld [vmem:[#allocation2 + $0x60] sm:$0xff]
        %v3397 = vld [vmem:[#allocation2 + $0x68] sm:$0xff]
        %v3398 = vld [vmem:[#allocation2 + $0x70] sm:$0xff]
        %v3399 = vld [vmem:[#allocation2 + $0x78] sm:$0xff]
        %s3400 = scalar_lea.vmem %s4, 16
        %v3401 = vld [vmem:[%s3400] sm:$0xf]
        %v3403 = vsel %vm670, %v3401, 0
        %3405 = vmatprep.subr.bf16.mxu0 %v3393
        %3406 = vmatpush1.bf16.msra.mxu0 %v3392
        %3407 = vmatprep.subr.bf16.mxu0 0
        %3408 = vmatpush1.bf16.msra.mxu0 0
        %3409 = vmatprep.subr.bf16.mxu0 0
        %3410 = vmatpush1.bf16.msra.mxu0 0
        %3411 = vmatprep.subr.bf16.mxu0 0
        %3412 = vmatpush1.bf16.msra.mxu0 0
        %3413 = vmatprep.subr.bf16.mxu0 0
        %3414 = vmatpush1.bf16.msra.mxu0 0
        %3415 = vmatprep.subr.bf16.mxu0 0
        %3416 = vmatpush1.bf16.msra.mxu0 0
        %3417 = vmatprep.subr.bf16.mxu0 0
        %3418 = vmatpush1.bf16.msra.mxu0 0
        %3419 = vmatprep.subr.bf16.mxu0 0
        %3420 = vmatpush1.bf16.msra.mxu0 0
        %3421 = vmatprep.subr.bf16.mxu0 0
        %3422 = vmatpush1.bf16.msra.mxu0 0
        %3423 = vmatprep.subr.bf16.mxu0 0
        %3424 = vmatpush1.bf16.msra.mxu0 0
        %3425 = vmatprep.subr.bf16.mxu0 0
        %3426 = vmatpush1.bf16.msra.mxu0 0
        %3427 = vmatprep.subr.bf16.mxu0 0
        %3428 = vmatpush1.bf16.msra.mxu0 0
        %3429 = vmatprep.subr.bf16.mxu0 0
        %3430 = vmatpush1.bf16.msra.mxu0 0
        %3431 = vmatprep.subr.bf16.mxu0 0
        %3432 = vmatpush1.bf16.msra.mxu0 0
        %3433 = vmatprep.subr.bf16.mxu0 0
        %3434 = vmatpush1.bf16.msra.mxu0 0
        %3435 = vmatprep.subr.bf16.mxu0 0
        %3436 = vmatpush1.bf16.msra.mxu0 0
        %3437 = vmatprep.mubr.bf16.mxu0 0
        %3438 = vmatmul.mubr.bf16.gmra.mrb[0].mxu0 %v3403
        %v3439 = vpop.f32.mrb[0].mxu0
        %v3440 = vadd.f32 0.0, %v3439
        %v3441 = vpop.f32.mrb[0].mxu0
        %v3442 = vadd.f32 0.0, %v3441
        %v3443 = vpop.f32.mrb[0].mxu0
        %v3444 = vpop.f32.mrb[0].mxu0
        %3445 = vdwg.mxu0
        %3446 = vmatprep.subr.bf16.mxu0 %v3395
        %3447 = vmatpush1.bf16.msra.mxu0 %v3394
        %3448 = vmatprep.subr.bf16.mxu0 0
        %3449 = vmatpush1.bf16.msra.mxu0 0
        %3450 = vmatprep.subr.bf16.mxu0 0
        %3451 = vmatpush1.bf16.msra.mxu0 0
        %3452 = vmatprep.subr.bf16.mxu0 0
        %3453 = vmatpush1.bf16.msra.mxu0 0
        %3454 = vmatprep.subr.bf16.mxu0 0
        %3455 = vmatpush1.bf16.msra.mxu0 0
        %3456 = vmatprep.subr.bf16.mxu0 0
        %3457 = vmatpush1.bf16.msra.mxu0 0
        %3458 = vmatprep.subr.bf16.mxu0 0
        %3459 = vmatpush1.bf16.msra.mxu0 0
        %3460 = vmatprep.subr.bf16.mxu0 0
        %3461 = vmatpush1.bf16.msra.mxu0 0
        %3462 = vmatprep.subr.bf16.mxu0 0
        %3463 = vmatpush1.bf16.msra.mxu0 0
        %3464 = vmatprep.subr.bf16.mxu0 0
        %3465 = vmatpush1.bf16.msra.mxu0 0
        %3466 = vmatprep.subr.bf16.mxu0 0
        %3467 = vmatpush1.bf16.msra.mxu0 0
        %3468 = vmatprep.subr.bf16.mxu0 0
        %3469 = vmatpush1.bf16.msra.mxu0 0
        %3470 = vmatprep.subr.bf16.mxu0 0
        %3471 = vmatpush1.bf16.msra.mxu0 0
        %3472 = vmatprep.subr.bf16.mxu0 0
        %3473 = vmatpush1.bf16.msra.mxu0 0
        %3474 = vmatprep.subr.bf16.mxu0 0
        %3475 = vmatpush1.bf16.msra.mxu0 0
        %3476 = vmatprep.subr.bf16.mxu0 0
        %3477 = vmatpush1.bf16.msra.mxu0 0
        %3478 = vmatprep.mubr.bf16.mxu0 0
        %3479 = vmatmul.mubr.bf16.gmra.mrb[0].mxu0 %v3403
        %v3480 = vpop.f32.mrb[0].mxu0
        %v3481 = vadd.f32 0.0, %v3480
        %v3482 = vpop.f32.mrb[0].mxu0
        %v3483 = vadd.f32 0.0, %v3482
        %v3484 = vpop.f32.mrb[0].mxu0
        %v3485 = vpop.f32.mrb[0].mxu0
        %3486 = vdwg.mxu0
        %3487 = vmatprep.subr.bf16.mxu0 %v3397
        %3488 = vmatpush1.bf16.msra.mxu0 %v3396
        %3489 = vmatprep.subr.bf16.mxu0 0
        %3490 = vmatpush1.bf16.msra.mxu0 0
        %3491 = vmatprep.subr.bf16.mxu0 0
        %3492 = vmatpush1.bf16.msra.mxu0 0
        %3493 = vmatprep.subr.bf16.mxu0 0
        %3494 = vmatpush1.bf16.msra.mxu0 0
        %3495 = vmatprep.subr.bf16.mxu0 0
        %3496 = vmatpush1.bf16.msra.mxu0 0
        %3497 = vmatprep.subr.bf16.mxu0 0
        %3498 = vmatpush1.bf16.msra.mxu0 0
        %3499 = vmatprep.subr.bf16.mxu0 0
        %3500 = vmatpush1.bf16.msra.mxu0 0
        %3501 = vmatprep.subr.bf16.mxu0 0
        %3502 = vmatpush1.bf16.msra.mxu0 0
        %3503 = vmatprep.subr.bf16.mxu0 0
        %3504 = vmatpush1.bf16.msra.mxu0 0
        %3505 = vmatprep.subr.bf16.mxu0 0
        %3506 = vmatpush1.bf16.msra.mxu0 0
        %3507 = vmatprep.subr.bf16.mxu0 0
        %3508 = vmatpush1.bf16.msra.mxu0 0
        %3509 = vmatprep.subr.bf16.mxu0 0
        %3510 = vmatpush1.bf16.msra.mxu0 0
        %3511 = vmatprep.subr.bf16.mxu0 0
        %3512 = vmatpush1.bf16.msra.mxu0 0
        %3513 = vmatprep.subr.bf16.mxu0 0
        %3514 = vmatpush1.bf16.msra.mxu0 0
        %3515 = vmatprep.subr.bf16.mxu0 0
        %3516 = vmatpush1.bf16.msra.mxu0 0
        %3517 = vmatprep.subr.bf16.mxu0 0
        %3518 = vmatpush1.bf16.msra.mxu0 0
        %3519 = vmatprep.mubr.bf16.mxu0 0
        %3520 = vmatmul.mubr.bf16.gmra.mrb[0].mxu0 %v3403
        %v3521 = vpop.f32.mrb[0].mxu0
        %v3522 = vadd.f32 0.0, %v3521
        %v3523 = vpop.f32.mrb[0].mxu0
        %v3524 = vadd.f32 0.0, %v3523
        %v3525 = vpop.f32.mrb[0].mxu0
        %v3526 = vpop.f32.mrb[0].mxu0
        %3527 = vdwg.mxu0
        %3528 = vmatprep.subr.bf16.mxu0 %v3399
        %3529 = vmatpush1.bf16.msra.mxu0 %v3398
        %3530 = vmatprep.subr.bf16.mxu0 0
        %3531 = vmatpush1.bf16.msra.mxu0 0
        %3532 = vmatprep.subr.bf16.mxu0 0
        %3533 = vmatpush1.bf16.msra.mxu0 0
        %3534 = vmatprep.subr.bf16.mxu0 0
        %3535 = vmatpush1.bf16.msra.mxu0 0
        %3536 = vmatprep.subr.bf16.mxu0 0
        %3537 = vmatpush1.bf16.msra.mxu0 0
        %3538 = vmatprep.subr.bf16.mxu0 0
        %3539 = vmatpush1.bf16.msra.mxu0 0
        %3540 = vmatprep.subr.bf16.mxu0 0
        %3541 = vmatpush1.bf16.msra.mxu0 0
        %3542 = vmatprep.subr.bf16.mxu0 0
        %3543 = vmatpush1.bf16.msra.mxu0 0
        %3544 = vmatprep.subr.bf16.mxu0 0
        %3545 = vmatpush1.bf16.msra.mxu0 0
        %3546 = vmatprep.subr.bf16.mxu0 0
        %3547 = vmatpush1.bf16.msra.mxu0 0
        %3548 = vmatprep.subr.bf16.mxu0 0
        %3549 = vmatpush1.bf16.msra.mxu0 0
        %3550 = vmatprep.subr.bf16.mxu0 0
        %3551 = vmatpush1.bf16.msra.mxu0 0
        %3552 = vmatprep.subr.bf16.mxu0 0
        %3553 = vmatpush1.bf16.msra.mxu0 0
        %3554 = vmatprep.subr.bf16.mxu0 0
        %3555 = vmatpush1.bf16.msra.mxu0 0
        %3556 = vmatprep.subr.bf16.mxu0 0
        %3557 = vmatpush1.bf16.msra.mxu0 0
        %3558 = vmatprep.subr.bf16.mxu0 0
        %3559 = vmatpush1.bf16.msra.mxu0 0
        %3560 = vmatprep.mubr.bf16.mxu0 0
        %3561 = vmatmul.mubr.bf16.gmra.mrb[0].mxu0 %v3403
        %v3562 = vpop.f32.mrb[0].mxu0
        %v3563 = vadd.f32 0.0, %v3562
        %v3564 = vpop.f32.mrb[0].mxu0
        %v3565 = vadd.f32 0.0, %v3564
        %v3566 = vpop.f32.mrb[0].mxu0
        %v3567 = vpop.f32.mrb[0].mxu0
        %3568 = vdwg.mxu0
        %v3569 = vadd.f32 %v3384, %v3440
        %v3570 = vadd.f32 %v3385, %v3442
        %v3571 = vadd.f32 %v3386, %v3481
        %v3572 = vadd.f32 %v3387, %v3483
        %v3573 = vadd.f32 %v3388, %v3522
        %v3574 = vadd.f32 %v3389, %v3524
        %v3575 = vadd.f32 %v3390, %v3563
        %v3576 = vadd.f32 %v3391, %v3565
        %v3577 = vld [vmem:[%s9] sm:$0xff]
        %3579 = vset.pattern.permute.xlu0 0
        %3580 = vperm.xlu0 %3579, %v3577
        %v3581 = vpop.permute.xlu0 %3580
        %v3583 = vadd.f32 %v3569, %v3581
        %v3584 = vadd.f32 %v3570, %v3581
        %v3585 = vadd.f32 %v3571, %v3581
        %v3586 = vadd.f32 %v3572, %v3581
        %v3587 = vadd.f32 %v3573, %v3581
        %v3588 = vadd.f32 %v3574, %v3581
        %v3589 = vadd.f32 %v3575, %v3581
        %v3590 = vadd.f32 %v3576, %v3581
        %vm3591 = vcmp.ge.f32.partialorder %v3583, 0.0
        %vm3592 = vcmp.ge.f32.partialorder %v3584, 0.0
        %vm3593 = vcmp.ge.f32.partialorder %v3585, 0.0
        %vm3594 = vcmp.ge.f32.partialorder %v3586, 0.0
        %vm3595 = vcmp.ge.f32.partialorder %v3587, 0.0
        %vm3596 = vcmp.ge.f32.partialorder %v3588, 0.0
        %vm3597 = vcmp.ge.f32.partialorder %v3589, 0.0
        %vm3598 = vcmp.ge.f32.partialorder %v3590, 0.0
        %v3599 = vmul.f32 %v3583, 0.1
        %v3600 = vmul.f32 %v3584, 0.1
        %v3601 = vmul.f32 %v3585, 0.1
        %v3602 = vmul.f32 %v3586, 0.1
        %v3603 = vmul.f32 %v3587, 0.1
        %v3604 = vmul.f32 %v3588, 0.1
        %v3605 = vmul.f32 %v3589, 0.1
        %v3606 = vmul.f32 %v3590, 0.1
        %v3607 = vsel %vm3591, %v3583, %v3599
        %v3608 = vsel %vm3592, %v3584, %v3600
        %v3609 = vsel %vm3593, %v3585, %v3601
        %v3610 = vsel %vm3594, %v3586, %v3602
        %v3611 = vsel %vm3595, %v3587, %v3603
        %v3612 = vsel %vm3596, %v3588, %v3604
        %v3613 = vsel %vm3597, %v3589, %v3605
        %v3614 = vsel %vm3598, %v3590, %v3606
        %3615 = vst [vmem:[%s569] sm:$0xff] %v3607
        %3616 = vst [vmem:[%s569 + $0x8] sm:$0xff] %v3608
        %3617 = vst [vmem:[%s569 + $0x10] sm:$0xff] %v3609
        %3618 = vst [vmem:[%s569 + $0x18] sm:$0xff] %v3610
        %3619 = vst [vmem:[%s569 + $0x20] sm:$0xff] %v3611
        %3620 = vst [vmem:[%s569 + $0x28] sm:$0xff] %v3612
        %3621 = vst [vmem:[%s569 + $0x30] sm:$0xff] %v3613
        %3622 = vst [vmem:[%s569 + $0x38] sm:$0xff] %v3614
        %v3623 = vpack.c.bf16 %v3607, %v3607
        %v3624 = vpack.c.bf16 %v3608, %v3608
        %v3625 = vpack.c.bf16 %v3609, %v3609
        %v3626 = vpack.c.bf16 %v3610, %v3610
        %v3627 = vpack.c.bf16 %v3611, %v3611
        %v3628 = vpack.c.bf16 %v3612, %v3612
        %v3629 = vpack.c.bf16 %v3613, %v3613
        %v3630 = vpack.c.bf16 %v3614, %v3614
        %3631 = vst [vmem:[#allocation3 + $0x20] sm:$0xf] %v3623
        %3632 = vst [vmem:[#allocation3 + $0x28] sm:$0xf] %v3624
        %3633 = vst [vmem:[#allocation3 + $0x30] sm:$0xf] %v3625
        %3634 = vst [vmem:[#allocation3 + $0x38] sm:$0xf] %v3626
        %3635 = vst [vmem:[#allocation3 + $0x40] sm:$0xf] %v3627
        %3636 = vst [vmem:[#allocation3 + $0x48] sm:$0xf] %v3628
        %3637 = vst [vmem:[#allocation3 + $0x50] sm:$0xf] %v3629
        %3638 = vst [vmem:[#allocation3 + $0x58] sm:$0xf] %v3630
        %v3639 = vld [vmem:[#allocation3 + $0x10] sm:$0xff]
        %v3640 = vld [vmem:[#allocation3 + $0x18] sm:$0xff]
        %v3641 = vld [vmem:[#allocation3 + $0x20] sm:$0xff]
        %v3642 = vld [vmem:[#allocation3 + $0x28] sm:$0xff]
        %v3643 = vld [vmem:[#allocation3 + $0x30] sm:$0xff]
        %v3644 = vld [vmem:[#allocation3 + $0x38] sm:$0xff]
        %v3645 = vld [vmem:[#allocation3 + $0x40] sm:$0xff]
        %v3646 = vld [vmem:[#allocation3 + $0x48] sm:$0xff]
        %v3647 = vld [vmem:[#allocation9] sm:$0xf]
        %v3648 = vld [vmem:[#allocation3 + $0x50] sm:$0xff]
        %v3649 = vld [vmem:[#allocation3 + $0x58] sm:$0xff]
        %s3650 = scalar_lea.vmem [#allocation9], 4
        %v3651 = vld [vmem:[%s3650] sm:$0xf]
        %v3653 = vsel %vm670, %v3651, 0
        %3655 = vmatprep.subr.bf16.mxu0 %v3642
        %3656 = vmatpush1.bf16.msra.mxu0 %v3641
        %3657 = vmatprep.subr.bf16.mxu0 0
        %3658 = vmatpush1.bf16.msra.mxu0 0
        %3659 = vmatprep.subr.bf16.mxu0 0
        %3660 = vmatpush1.bf16.msra.mxu0 0
        %3661 = vmatprep.subr.bf16.mxu0 0
        %3662 = vmatpush1.bf16.msra.mxu0 0
        %3663 = vmatprep.subr.bf16.mxu0 0
        %3664 = vmatpush1.bf16.msra.mxu0 0
        %3665 = vmatprep.subr.bf16.mxu0 0
        %3666 = vmatpush1.bf16.msra.mxu0 0
        %3667 = vmatprep.subr.bf16.mxu0 0
        %3668 = vmatpush1.bf16.msra.mxu0 0
        %3669 = vmatprep.subr.bf16.mxu0 0
        %3670 = vmatpush1.bf16.msra.mxu0 0
        %3671 = vmatprep.subr.bf16.mxu0 0
        %3672 = vmatpush1.bf16.msra.mxu0 0
        %3673 = vmatprep.subr.bf16.mxu0 0
        %3674 = vmatpush1.bf16.msra.mxu0 0
        %3675 = vmatprep.subr.bf16.mxu0 0
        %3676 = vmatpush1.bf16.msra.mxu0 0
        %3677 = vmatprep.subr.bf16.mxu0 0
        %3678 = vmatpush1.bf16.msra.mxu0 0
        %3679 = vmatprep.subr.bf16.mxu0 0
        %3680 = vmatpush1.bf16.msra.mxu0 0
        %3681 = vmatprep.subr.bf16.mxu0 0
        %3682 = vmatpush1.bf16.msra.mxu0 0
        %3683 = vmatprep.subr.bf16.mxu0 0
        %3684 = vmatpush1.bf16.msra.mxu0 0
        %3685 = vmatprep.subr.bf16.mxu0 0
        %3686 = vmatpush1.bf16.msra.mxu0 0
        %3687 = vmatprep.mubr.bf16.mxu0 0
        %3688 = vmatmul.mubr.bf16.gmra.mrb[0].mxu0 %v3653
        %v3689 = vpop.f32.mrb[0].mxu0
        %v3690 = vadd.f32 0.0, %v3689
        %v3691 = vpop.f32.mrb[0].mxu0
        %v3692 = vadd.f32 0.0, %v3691
        %v3693 = vpop.f32.mrb[0].mxu0
        %v3694 = vpop.f32.mrb[0].mxu0
        %3695 = vdwg.mxu0
        %3696 = vmatprep.subr.bf16.mxu0 %v3644
        %3697 = vmatpush1.bf16.msra.mxu0 %v3643
        %3698 = vmatprep.subr.bf16.mxu0 0
        %3699 = vmatpush1.bf16.msra.mxu0 0
        %3700 = vmatprep.subr.bf16.mxu0 0
        %3701 = vmatpush1.bf16.msra.mxu0 0
        %3702 = vmatprep.subr.bf16.mxu0 0
        %3703 = vmatpush1.bf16.msra.mxu0 0
        %3704 = vmatprep.subr.bf16.mxu0 0
        %3705 = vmatpush1.bf16.msra.mxu0 0
        %3706 = vmatprep.subr.bf16.mxu0 0
        %3707 = vmatpush1.bf16.msra.mxu0 0
        %3708 = vmatprep.subr.bf16.mxu0 0
        %3709 = vmatpush1.bf16.msra.mxu0 0
        %3710 = vmatprep.subr.bf16.mxu0 0
        %3711 = vmatpush1.bf16.msra.mxu0 0
        %3712 = vmatprep.subr.bf16.mxu0 0
        %3713 = vmatpush1.bf16.msra.mxu0 0
        %3714 = vmatprep.subr.bf16.mxu0 0
        %3715 = vmatpush1.bf16.msra.mxu0 0
        %3716 = vmatprep.subr.bf16.mxu0 0
        %3717 = vmatpush1.bf16.msra.mxu0 0
        %3718 = vmatprep.subr.bf16.mxu0 0
        %3719 = vmatpush1.bf16.msra.mxu0 0
        %3720 = vmatprep.subr.bf16.mxu0 0
        %3721 = vmatpush1.bf16.msra.mxu0 0
        %3722 = vmatprep.subr.bf16.mxu0 0
        %3723 = vmatpush1.bf16.msra.mxu0 0
        %3724 = vmatprep.subr.bf16.mxu0 0
        %3725 = vmatpush1.bf16.msra.mxu0 0
        %3726 = vmatprep.subr.bf16.mxu0 0
        %3727 = vmatpush1.bf16.msra.mxu0 0
        %3728 = vmatprep.mubr.bf16.mxu0 0
        %3729 = vmatmul.mubr.bf16.gmra.mrb[0].mxu0 %v3653
        %v3730 = vpop.f32.mrb[0].mxu0
        %v3731 = vadd.f32 0.0, %v3730
        %v3732 = vpop.f32.mrb[0].mxu0
        %v3733 = vadd.f32 0.0, %v3732
        %v3734 = vpop.f32.mrb[0].mxu0
        %v3735 = vpop.f32.mrb[0].mxu0
        %3736 = vdwg.mxu0
        %3737 = vmatprep.subr.bf16.mxu0 %v3646
        %3738 = vmatpush1.bf16.msra.mxu0 %v3645
        %3739 = vmatprep.subr.bf16.mxu0 0
        %3740 = vmatpush1.bf16.msra.mxu0 0
        %3741 = vmatprep.subr.bf16.mxu0 0
        %3742 = vmatpush1.bf16.msra.mxu0 0
        %3743 = vmatprep.subr.bf16.mxu0 0
        %3744 = vmatpush1.bf16.msra.mxu0 0
        %3745 = vmatprep.subr.bf16.mxu0 0
        %3746 = vmatpush1.bf16.msra.mxu0 0
        %3747 = vmatprep.subr.bf16.mxu0 0
        %3748 = vmatpush1.bf16.msra.mxu0 0
        %3749 = vmatprep.subr.bf16.mxu0 0
        %3750 = vmatpush1.bf16.msra.mxu0 0
        %3751 = vmatprep.subr.bf16.mxu0 0
        %3752 = vmatpush1.bf16.msra.mxu0 0
        %3753 = vmatprep.subr.bf16.mxu0 0
        %3754 = vmatpush1.bf16.msra.mxu0 0
        %3755 = vmatprep.subr.bf16.mxu0 0
        %3756 = vmatpush1.bf16.msra.mxu0 0
        %3757 = vmatprep.subr.bf16.mxu0 0
        %3758 = vmatpush1.bf16.msra.mxu0 0
        %3759 = vmatprep.subr.bf16.mxu0 0
        %3760 = vmatpush1.bf16.msra.mxu0 0
        %3761 = vmatprep.subr.bf16.mxu0 0
        %3762 = vmatpush1.bf16.msra.mxu0 0
        %3763 = vmatprep.subr.bf16.mxu0 0
        %3764 = vmatpush1.bf16.msra.mxu0 0
        %3765 = vmatprep.subr.bf16.mxu0 0
        %3766 = vmatpush1.bf16.msra.mxu0 0
        %3767 = vmatprep.subr.bf16.mxu0 0
        %3768 = vmatpush1.bf16.msra.mxu0 0
        %3769 = vmatprep.mubr.bf16.mxu0 0
        %3770 = vmatmul.mubr.bf16.gmra.mrb[0].mxu0 %v3653
        %v3771 = vpop.f32.mrb[0].mxu0
        %v3772 = vadd.f32 0.0, %v3771
        %v3773 = vpop.f32.mrb[0].mxu0
        %v3774 = vadd.f32 0.0, %v3773
        %v3775 = vpop.f32.mrb[0].mxu0
        %v3776 = vpop.f32.mrb[0].mxu0
        %3777 = vdwg.mxu0
        %3778 = vmatprep.subr.bf16.mxu0 %v3649
        %3779 = vmatpush1.bf16.msra.mxu0 %v3648
        %3780 = vmatprep.subr.bf16.mxu0 0
        %3781 = vmatpush1.bf16.msra.mxu0 0
        %3782 = vmatprep.subr.bf16.mxu0 0
        %3783 = vmatpush1.bf16.msra.mxu0 0
        %3784 = vmatprep.subr.bf16.mxu0 0
        %3785 = vmatpush1.bf16.msra.mxu0 0
        %3786 = vmatprep.subr.bf16.mxu0 0
        %3787 = vmatpush1.bf16.msra.mxu0 0
        %3788 = vmatprep.subr.bf16.mxu0 0
        %3789 = vmatpush1.bf16.msra.mxu0 0
        %3790 = vmatprep.subr.bf16.mxu0 0
        %3791 = vmatpush1.bf16.msra.mxu0 0
        %3792 = vmatprep.subr.bf16.mxu0 0
        %3793 = vmatpush1.bf16.msra.mxu0 0
        %3794 = vmatprep.subr.bf16.mxu0 0
        %3795 = vmatpush1.bf16.msra.mxu0 0
        %3796 = vmatprep.subr.bf16.mxu0 0
        %3797 = vmatpush1.bf16.msra.mxu0 0
        %3798 = vmatprep.subr.bf16.mxu0 0
        %3799 = vmatpush1.bf16.msra.mxu0 0
        %3800 = vmatprep.subr.bf16.mxu0 0
        %3801 = vmatpush1.bf16.msra.mxu0 0
        %3802 = vmatprep.subr.bf16.mxu0 0
        %3803 = vmatpush1.bf16.msra.mxu0 0
        %3804 = vmatprep.subr.bf16.mxu0 0
        %3805 = vmatpush1.bf16.msra.mxu0 0
        %3806 = vmatprep.subr.bf16.mxu0 0
        %3807 = vmatpush1.bf16.msra.mxu0 0
        %3808 = vmatprep.subr.bf16.mxu0 0
        %3809 = vmatpush1.bf16.msra.mxu0 0
        %3810 = vmatprep.mubr.bf16.mxu0 0
        %3811 = vmatmul.mubr.bf16.gmra.mrb[0].mxu0 %v3653
        %v3812 = vpop.f32.mrb[0].mxu0
        %v3813 = vadd.f32 0.0, %v3812
        %v3814 = vpop.f32.mrb[0].mxu0
        %v3815 = vadd.f32 0.0, %v3814
        %v3816 = vpop.f32.mrb[0].mxu0
        %v3817 = vpop.f32.mrb[0].mxu0
        %3818 = vdwg.mxu0
        %v3820 = vsel %vm670, %v3647, 0
        %3822 = vmatprep.subr.bf16.mxu0 %v3640
        %3823 = vmatpush1.bf16.msra.mxu0 %v3639
        %3824 = vmatprep.subr.bf16.mxu0 0
        %3825 = vmatpush1.bf16.msra.mxu0 0
        %3826 = vmatprep.subr.bf16.mxu0 0
        %3827 = vmatpush1.bf16.msra.mxu0 0
        %3828 = vmatprep.subr.bf16.mxu0 0
        %3829 = vmatpush1.bf16.msra.mxu0 0
        %3830 = vmatprep.subr.bf16.mxu0 0
        %3831 = vmatpush1.bf16.msra.mxu0 0
        %3832 = vmatprep.subr.bf16.mxu0 0
        %3833 = vmatpush1.bf16.msra.mxu0 0
        %3834 = vmatprep.subr.bf16.mxu0 0
        %3835 = vmatpush1.bf16.msra.mxu0 0
        %3836 = vmatprep.subr.bf16.mxu0 0
        %3837 = vmatpush1.bf16.msra.mxu0 0
        %3838 = vmatprep.subr.bf16.mxu0 0
        %3839 = vmatpush1.bf16.msra.mxu0 0
        %3840 = vmatprep.subr.bf16.mxu0 0
        %3841 = vmatpush1.bf16.msra.mxu0 0
        %3842 = vmatprep.subr.bf16.mxu0 0
        %3843 = vmatpush1.bf16.msra.mxu0 0
        %3844 = vmatprep.subr.bf16.mxu0 0
        %3845 = vmatpush1.bf16.msra.mxu0 0
        %3846 = vmatprep.subr.bf16.mxu0 0
        %3847 = vmatpush1.bf16.msra.mxu0 0
        %3848 = vmatprep.subr.bf16.mxu0 0
        %3849 = vmatpush1.bf16.msra.mxu0 0
        %3850 = vmatprep.subr.bf16.mxu0 0
        %3851 = vmatpush1.bf16.msra.mxu0 0
        %3852 = vmatprep.subr.bf16.mxu0 0
        %3853 = vmatpush1.bf16.msra.mxu0 0
        %3854 = vmatprep.mubr.bf16.mxu0 0
        %3855 = vmatmul.mubr.bf16.gmra.mrb[0].mxu0 %v3820
        %v3856 = vpop.f32.mrb[0].mxu0
        %v3857 = vadd.f32 %v3690, %v3856
        %v3858 = vpop.f32.mrb[0].mxu0
        %v3859 = vadd.f32 %v3692, %v3858
        %v3860 = vpop.f32.mrb[0].mxu0
        %v3861 = vpop.f32.mrb[0].mxu0
        %3862 = vdwg.mxu0
        %3863 = vmatprep.subr.bf16.mxu0 %v3642
        %3864 = vmatpush1.bf16.msra.mxu0 %v3641
        %3865 = vmatprep.subr.bf16.mxu0 0
        %3866 = vmatpush1.bf16.msra.mxu0 0
        %3867 = vmatprep.subr.bf16.mxu0 0
        %3868 = vmatpush1.bf16.msra.mxu0 0
        %3869 = vmatprep.subr.bf16.mxu0 0
        %3870 = vmatpush1.bf16.msra.mxu0 0
        %3871 = vmatprep.subr.bf16.mxu0 0
        %3872 = vmatpush1.bf16.msra.mxu0 0
        %3873 = vmatprep.subr.bf16.mxu0 0
        %3874 = vmatpush1.bf16.msra.mxu0 0
        %3875 = vmatprep.subr.bf16.mxu0 0
        %3876 = vmatpush1.bf16.msra.mxu0 0
        %3877 = vmatprep.subr.bf16.mxu0 0
        %3878 = vmatpush1.bf16.msra.mxu0 0
        %3879 = vmatprep.subr.bf16.mxu0 0
        %3880 = vmatpush1.bf16.msra.mxu0 0
        %3881 = vmatprep.subr.bf16.mxu0 0
        %3882 = vmatpush1.bf16.msra.mxu0 0
        %3883 = vmatprep.subr.bf16.mxu0 0
        %3884 = vmatpush1.bf16.msra.mxu0 0
        %3885 = vmatprep.subr.bf16.mxu0 0
        %3886 = vmatpush1.bf16.msra.mxu0 0
        %3887 = vmatprep.subr.bf16.mxu0 0
        %3888 = vmatpush1.bf16.msra.mxu0 0
        %3889 = vmatprep.subr.bf16.mxu0 0
        %3890 = vmatpush1.bf16.msra.mxu0 0
        %3891 = vmatprep.subr.bf16.mxu0 0
        %3892 = vmatpush1.bf16.msra.mxu0 0
        %3893 = vmatprep.subr.bf16.mxu0 0
        %3894 = vmatpush1.bf16.msra.mxu0 0
        %3895 = vmatprep.mubr.bf16.mxu0 0
        %3896 = vmatmul.mubr.bf16.gmra.mrb[0].mxu0 %v3820
        %v3897 = vpop.f32.mrb[0].mxu0
        %v3898 = vadd.f32 %v3731, %v3897
        %v3899 = vpop.f32.mrb[0].mxu0
        %v3900 = vadd.f32 %v3733, %v3899
        %v3901 = vpop.f32.mrb[0].mxu0
        %v3902 = vpop.f32.mrb[0].mxu0
        %3903 = vdwg.mxu0
        %3904 = vmatprep.subr.bf16.mxu0 %v3644
        %3905 = vmatpush1.bf16.msra.mxu0 %v3643
        %3906 = vmatprep.subr.bf16.mxu0 0
        %3907 = vmatpush1.bf16.msra.mxu0 0
        %3908 = vmatprep.subr.bf16.mxu0 0
        %3909 = vmatpush1.bf16.msra.mxu0 0
        %3910 = vmatprep.subr.bf16.mxu0 0
        %3911 = vmatpush1.bf16.msra.mxu0 0
        %3912 = vmatprep.subr.bf16.mxu0 0
        %3913 = vmatpush1.bf16.msra.mxu0 0
        %3914 = vmatprep.subr.bf16.mxu0 0
        %3915 = vmatpush1.bf16.msra.mxu0 0
        %3916 = vmatprep.subr.bf16.mxu0 0
        %3917 = vmatpush1.bf16.msra.mxu0 0
        %3918 = vmatprep.subr.bf16.mxu0 0
        %3919 = vmatpush1.bf16.msra.mxu0 0
        %3920 = vmatprep.subr.bf16.mxu0 0
        %3921 = vmatpush1.bf16.msra.mxu0 0
        %3922 = vmatprep.subr.bf16.mxu0 0
        %3923 = vmatpush1.bf16.msra.mxu0 0
        %3924 = vmatprep.subr.bf16.mxu0 0
        %3925 = vmatpush1.bf16.msra.mxu0 0
        %3926 = vmatprep.subr.bf16.mxu0 0
        %3927 = vmatpush1.bf16.msra.mxu0 0
        %3928 = vmatprep.subr.bf16.mxu0 0
        %3929 = vmatpush1.bf16.msra.mxu0 0
        %3930 = vmatprep.subr.bf16.mxu0 0
        %3931 = vmatpush1.bf16.msra.mxu0 0
        %3932 = vmatprep.subr.bf16.mxu0 0
        %3933 = vmatpush1.bf16.msra.mxu0 0
        %3934 = vmatprep.subr.bf16.mxu0 0
        %3935 = vmatpush1.bf16.msra.mxu0 0
        %3936 = vmatprep.mubr.bf16.mxu0 0
        %3937 = vmatmul.mubr.bf16.gmra.mrb[0].mxu0 %v3820
        %v3938 = vpop.f32.mrb[0].mxu0
        %v3939 = vadd.f32 %v3772, %v3938
        %v3940 = vpop.f32.mrb[0].mxu0
        %v3941 = vadd.f32 %v3774, %v3940
        %v3942 = vpop.f32.mrb[0].mxu0
        %v3943 = vpop.f32.mrb[0].mxu0
        %3944 = vdwg.mxu0
        %3945 = vmatprep.subr.bf16.mxu0 %v3646
        %3946 = vmatpush1.bf16.msra.mxu0 %v3645
        %3947 = vmatprep.subr.bf16.mxu0 0
        %3948 = vmatpush1.bf16.msra.mxu0 0
        %3949 = vmatprep.subr.bf16.mxu0 0
        %3950 = vmatpush1.bf16.msra.mxu0 0
        %3951 = vmatprep.subr.bf16.mxu0 0
        %3952 = vmatpush1.bf16.msra.mxu0 0
        %3953 = vmatprep.subr.bf16.mxu0 0
        %3954 = vmatpush1.bf16.msra.mxu0 0
        %3955 = vmatprep.subr.bf16.mxu0 0
        %3956 = vmatpush1.bf16.msra.mxu0 0
        %3957 = vmatprep.subr.bf16.mxu0 0
        %3958 = vmatpush1.bf16.msra.mxu0 0
        %3959 = vmatprep.subr.bf16.mxu0 0
        %3960 = vmatpush1.bf16.msra.mxu0 0
        %3961 = vmatprep.subr.bf16.mxu0 0
        %3962 = vmatpush1.bf16.msra.mxu0 0
        %3963 = vmatprep.subr.bf16.mxu0 0
        %3964 = vmatpush1.bf16.msra.mxu0 0
        %3965 = vmatprep.subr.bf16.mxu0 0
        %3966 = vmatpush1.bf16.msra.mxu0 0
        %3967 = vmatprep.subr.bf16.mxu0 0
        %3968 = vmatpush1.bf16.msra.mxu0 0
        %3969 = vmatprep.subr.bf16.mxu0 0
        %3970 = vmatpush1.bf16.msra.mxu0 0
        %3971 = vmatprep.subr.bf16.mxu0 0
        %3972 = vmatpush1.bf16.msra.mxu0 0
        %3973 = vmatprep.subr.bf16.mxu0 0
        %3974 = vmatpush1.bf16.msra.mxu0 0
        %3975 = vmatprep.subr.bf16.mxu0 0
        %3976 = vmatpush1.bf16.msra.mxu0 0
        %3977 = vmatprep.mubr.bf16.mxu0 0
        %3978 = vmatmul.mubr.bf16.gmra.mrb[0].mxu0 %v3820
        %v3979 = vpop.f32.mrb[0].mxu0
        %v3980 = vadd.f32 %v3813, %v3979
        %v3981 = vpop.f32.mrb[0].mxu0
        %v3982 = vadd.f32 %v3815, %v3981
        %v3983 = vpop.f32.mrb[0].mxu0
        %v3984 = vpop.f32.mrb[0].mxu0
        %3985 = vdwg.mxu0
        %v3986 = vld [vmem:[#allocation3 + $0x30] sm:$0xff]
        %v3987 = vld [vmem:[#allocation3 + $0x38] sm:$0xff]
        %v3988 = vld [vmem:[#allocation3 + $0x40] sm:$0xff]
        %v3989 = vld [vmem:[#allocation3 + $0x48] sm:$0xff]
        %v3990 = vld [vmem:[#allocation3 + $0x50] sm:$0xff]
        %v3991 = vld [vmem:[#allocation3 + $0x58] sm:$0xff]
        %v3992 = vld [vmem:[#allocation3 + $0x60] sm:$0xff]
        %v3993 = vld [vmem:[#allocation3 + $0x68] sm:$0xff]
        %s3994 = scalar_lea.vmem [#allocation9], 8
        %v3995 = vld [vmem:[%s3994] sm:$0xf]
        %v3997 = vsel %vm670, %v3995, 0
        %3999 = vmatprep.subr.bf16.mxu0 %v3987
        %4000 = vmatpush1.bf16.msra.mxu0 %v3986
        %4001 = vmatprep.subr.bf16.mxu0 0
        %4002 = vmatpush1.bf16.msra.mxu0 0
        %4003 = vmatprep.subr.bf16.mxu0 0
        %4004 = vmatpush1.bf16.msra.mxu0 0
        %4005 = vmatprep.subr.bf16.mxu0 0
        %4006 = vmatpush1.bf16.msra.mxu0 0
        %4007 = vmatprep.subr.bf16.mxu0 0
        %4008 = vmatpush1.bf16.msra.mxu0 0
        %4009 = vmatprep.subr.bf16.mxu0 0
        %4010 = vmatpush1.bf16.msra.mxu0 0
        %4011 = vmatprep.subr.bf16.mxu0 0
        %4012 = vmatpush1.bf16.msra.mxu0 0
        %4013 = vmatprep.subr.bf16.mxu0 0
        %4014 = vmatpush1.bf16.msra.mxu0 0
        %4015 = vmatprep.subr.bf16.mxu0 0
        %4016 = vmatpush1.bf16.msra.mxu0 0
        %4017 = vmatprep.subr.bf16.mxu0 0
        %4018 = vmatpush1.bf16.msra.mxu0 0
        %4019 = vmatprep.subr.bf16.mxu0 0
        %4020 = vmatpush1.bf16.msra.mxu0 0
        %4021 = vmatprep.subr.bf16.mxu0 0
        %4022 = vmatpush1.bf16.msra.mxu0 0
        %4023 = vmatprep.subr.bf16.mxu0 0
        %4024 = vmatpush1.bf16.msra.mxu0 0
        %4025 = vmatprep.subr.bf16.mxu0 0
        %4026 = vmatpush1.bf16.msra.mxu0 0
        %4027 = vmatprep.subr.bf16.mxu0 0
        %4028 = vmatpush1.bf16.msra.mxu0 0
        %4029 = vmatprep.subr.bf16.mxu0 0
        %4030 = vmatpush1.bf16.msra.mxu0 0
        %4031 = vmatprep.mubr.bf16.mxu0 0
        %4032 = vmatmul.mubr.bf16.gmra.mrb[0].mxu0 %v3997
        %v4033 = vpop.f32.mrb[0].mxu0
        %v4034 = vadd.f32 0.0, %v4033
        %v4035 = vpop.f32.mrb[0].mxu0
        %v4036 = vadd.f32 0.0, %v4035
        %v4037 = vpop.f32.mrb[0].mxu0
        %v4038 = vpop.f32.mrb[0].mxu0
        %4039 = vdwg.mxu0
        %4040 = vmatprep.subr.bf16.mxu0 %v3989
        %4041 = vmatpush1.bf16.msra.mxu0 %v3988
        %4042 = vmatprep.subr.bf16.mxu0 0
        %4043 = vmatpush1.bf16.msra.mxu0 0
        %4044 = vmatprep.subr.bf16.mxu0 0
        %4045 = vmatpush1.bf16.msra.mxu0 0
        %4046 = vmatprep.subr.bf16.mxu0 0
        %4047 = vmatpush1.bf16.msra.mxu0 0
        %4048 = vmatprep.subr.bf16.mxu0 0
        %4049 = vmatpush1.bf16.msra.mxu0 0
        %4050 = vmatprep.subr.bf16.mxu0 0
        %4051 = vmatpush1.bf16.msra.mxu0 0
        %4052 = vmatprep.subr.bf16.mxu0 0
        %4053 = vmatpush1.bf16.msra.mxu0 0
        %4054 = vmatprep.subr.bf16.mxu0 0
        %4055 = vmatpush1.bf16.msra.mxu0 0
        %4056 = vmatprep.subr.bf16.mxu0 0
        %4057 = vmatpush1.bf16.msra.mxu0 0
        %4058 = vmatprep.subr.bf16.mxu0 0
        %4059 = vmatpush1.bf16.msra.mxu0 0
        %4060 = vmatprep.subr.bf16.mxu0 0
        %4061 = vmatpush1.bf16.msra.mxu0 0
        %4062 = vmatprep.subr.bf16.mxu0 0
        %4063 = vmatpush1.bf16.msra.mxu0 0
        %4064 = vmatprep.subr.bf16.mxu0 0
        %4065 = vmatpush1.bf16.msra.mxu0 0
        %4066 = vmatprep.subr.bf16.mxu0 0
        %4067 = vmatpush1.bf16.msra.mxu0 0
        %4068 = vmatprep.subr.bf16.mxu0 0
        %4069 = vmatpush1.bf16.msra.mxu0 0
        %4070 = vmatprep.subr.bf16.mxu0 0
        %4071 = vmatpush1.bf16.msra.mxu0 0
        %4072 = vmatprep.mubr.bf16.mxu0 0
        %4073 = vmatmul.mubr.bf16.gmra.mrb[0].mxu0 %v3997
        %v4074 = vpop.f32.mrb[0].mxu0
        %v4075 = vadd.f32 0.0, %v4074
        %v4076 = vpop.f32.mrb[0].mxu0
        %v4077 = vadd.f32 0.0, %v4076
        %v4078 = vpop.f32.mrb[0].mxu0
        %v4079 = vpop.f32.mrb[0].mxu0
        %4080 = vdwg.mxu0
        %4081 = vmatprep.subr.bf16.mxu0 %v3991
        %4082 = vmatpush1.bf16.msra.mxu0 %v3990
        %4083 = vmatprep.subr.bf16.mxu0 0
        %4084 = vmatpush1.bf16.msra.mxu0 0
        %4085 = vmatprep.subr.bf16.mxu0 0
        %4086 = vmatpush1.bf16.msra.mxu0 0
        %4087 = vmatprep.subr.bf16.mxu0 0
        %4088 = vmatpush1.bf16.msra.mxu0 0
        %4089 = vmatprep.subr.bf16.mxu0 0
        %4090 = vmatpush1.bf16.msra.mxu0 0
        %4091 = vmatprep.subr.bf16.mxu0 0
        %4092 = vmatpush1.bf16.msra.mxu0 0
        %4093 = vmatprep.subr.bf16.mxu0 0
        %4094 = vmatpush1.bf16.msra.mxu0 0
        %4095 = vmatprep.subr.bf16.mxu0 0
        %4096 = vmatpush1.bf16.msra.mxu0 0
        %4097 = vmatprep.subr.bf16.mxu0 0
        %4098 = vmatpush1.bf16.msra.mxu0 0
        %4099 = vmatprep.subr.bf16.mxu0 0
        %4100 = vmatpush1.bf16.msra.mxu0 0
        %4101 = vmatprep.subr.bf16.mxu0 0
        %4102 = vmatpush1.bf16.msra.mxu0 0
        %4103 = vmatprep.subr.bf16.mxu0 0
        %4104 = vmatpush1.bf16.msra.mxu0 0
        %4105 = vmatprep.subr.bf16.mxu0 0
        %4106 = vmatpush1.bf16.msra.mxu0 0
        %4107 = vmatprep.subr.bf16.mxu0 0
        %4108 = vmatpush1.bf16.msra.mxu0 0
        %4109 = vmatprep.subr.bf16.mxu0 0
        %4110 = vmatpush1.bf16.msra.mxu0 0
        %4111 = vmatprep.subr.bf16.mxu0 0
        %4112 = vmatpush1.bf16.msra.mxu0 0
        %4113 = vmatprep.mubr.bf16.mxu0 0
        %4114 = vmatmul.mubr.bf16.gmra.mrb[0].mxu0 %v3997
        %v4115 = vpop.f32.mrb[0].mxu0
        %v4116 = vadd.f32 0.0, %v4115
        %v4117 = vpop.f32.mrb[0].mxu0
        %v4118 = vadd.f32 0.0, %v4117
        %v4119 = vpop.f32.mrb[0].mxu0
        %v4120 = vpop.f32.mrb[0].mxu0
        %4121 = vdwg.mxu0
        %4122 = vmatprep.subr.bf16.mxu0 %v3993
        %4123 = vmatpush1.bf16.msra.mxu0 %v3992
        %4124 = vmatprep.subr.bf16.mxu0 0
        %4125 = vmatpush1.bf16.msra.mxu0 0
        %4126 = vmatprep.subr.bf16.mxu0 0
        %4127 = vmatpush1.bf16.msra.mxu0 0
        %4128 = vmatprep.subr.bf16.mxu0 0
        %4129 = vmatpush1.bf16.msra.mxu0 0
        %4130 = vmatprep.subr.bf16.mxu0 0
        %4131 = vmatpush1.bf16.msra.mxu0 0
        %4132 = vmatprep.subr.bf16.mxu0 0
        %4133 = vmatpush1.bf16.msra.mxu0 0
        %4134 = vmatprep.subr.bf16.mxu0 0
        %4135 = vmatpush1.bf16.msra.mxu0 0
        %4136 = vmatprep.subr.bf16.mxu0 0
        %4137 = vmatpush1.bf16.msra.mxu0 0
        %4138 = vmatprep.subr.bf16.mxu0 0
        %4139 = vmatpush1.bf16.msra.mxu0 0
        %4140 = vmatprep.subr.bf16.mxu0 0
        %4141 = vmatpush1.bf16.msra.mxu0 0
        %4142 = vmatprep.subr.bf16.mxu0 0
        %4143 = vmatpush1.bf16.msra.mxu0 0
        %4144 = vmatprep.subr.bf16.mxu0 0
        %4145 = vmatpush1.bf16.msra.mxu0 0
        %4146 = vmatprep.subr.bf16.mxu0 0
        %4147 = vmatpush1.bf16.msra.mxu0 0
        %4148 = vmatprep.subr.bf16.mxu0 0
        %4149 = vmatpush1.bf16.msra.mxu0 0
        %4150 = vmatprep.subr.bf16.mxu0 0
        %4151 = vmatpush1.bf16.msra.mxu0 0
        %4152 = vmatprep.subr.bf16.mxu0 0
        %4153 = vmatpush1.bf16.msra.mxu0 0
        %4154 = vmatprep.mubr.bf16.mxu0 0
        %4155 = vmatmul.mubr.bf16.gmra.mrb[0].mxu0 %v3997
        %v4156 = vpop.f32.mrb[0].mxu0
        %v4157 = vadd.f32 0.0, %v4156
        %v4158 = vpop.f32.mrb[0].mxu0
        %v4159 = vadd.f32 0.0, %v4158
        %v4160 = vpop.f32.mrb[0].mxu0
        %v4161 = vpop.f32.mrb[0].mxu0
        %4162 = vdwg.mxu0
        %v4163 = vadd.f32 %v3857, %v4034
        %v4164 = vadd.f32 %v3859, %v4036
        %v4165 = vadd.f32 %v3898, %v4075
        %v4166 = vadd.f32 %v3900, %v4077
        %v4167 = vadd.f32 %v3939, %v4116
        %v4168 = vadd.f32 %v3941, %v4118
        %v4169 = vadd.f32 %v3980, %v4157
        %v4170 = vadd.f32 %v3982, %v4159
        %v4171 = vld [vmem:[%s10] sm:$0xff]
        %4173 = vset.pattern.permute.xlu0 0
        %4174 = vperm.xlu0 %4173, %v4171
        %v4175 = vpop.permute.xlu0 %4174
        %v4177 = vadd.f32 %v4163, %v4175
        %v4178 = vadd.f32 %v4164, %v4175
        %v4179 = vadd.f32 %v4165, %v4175
        %v4180 = vadd.f32 %v4166, %v4175
        %v4181 = vadd.f32 %v4167, %v4175
        %v4182 = vadd.f32 %v4168, %v4175
        %v4183 = vadd.f32 %v4169, %v4175
        %v4184 = vadd.f32 %v4170, %v4175
        %4185 = vst [vmem:[%s576] sm:$0xff] %v4177
        %4186 = vst [vmem:[%s576 + $0x8] sm:$0xff] %v4178
        %4187 = vst [vmem:[%s576 + $0x10] sm:$0xff] %v4179
        %4188 = vst [vmem:[%s576 + $0x18] sm:$0xff] %v4180
        %4189 = vst [vmem:[%s576 + $0x20] sm:$0xff] %v4181
        %4190 = vst [vmem:[%s576 + $0x28] sm:$0xff] %v4182
        %4191 = vst [vmem:[%s576 + $0x30] sm:$0xff] %v4183
        %4192 = vst [vmem:[%s576 + $0x38] sm:$0xff] %v4184
        %s4193 = sand.u32 %s284, 1
        %s4194 = scalar_lea.sflag [#allocation6], %s4193
        %s4195 = sand.u32 %s284, 1
        %s4196 = smul.addr %s4195, 128
        %s4197 = scalar_lea.vmem [#allocation10], %s4196
        %s4198 = sand.u32 %s40, 1
        %s4199 = scalar_lea.sflag [#allocation12], %s4198
        %s4200 = sand.u32 %s310, 1
        %s4201 = smul.addr %s4200, 128
        %s4202 = scalar_lea.vmem [#allocation11], %s4201
        %s4203 = sand.u32 %s40, 1
        %s4204 = scalar_lea.sflag [#allocation12], %s4203
        %s4205 = sand.u32 %s336, 1
        %s4206 = smul.addr %s4205, 64
        %s4207 = scalar_lea.vmem [#allocation13], %s4206
        %s4208 = sand.u32 %s40, 1
        %s4209 = scalar_lea.sflag [#allocation15], %s4208
        %s4210 = sand.u32 %s362, 1
        %s4211 = smul.addr %s4210, 64
        %s4212 = scalar_lea.vmem [#allocation14], %s4211
        %s4213 = sand.u32 %s40, 1
        %s4214 = scalar_lea.sflag [#allocation15], %s4213
        %s4215 = sand.u32 %s388, 1
        %s4216 = smul.addr %s4215, 64
        %s4217 = scalar_lea.vmem [#allocation16], %s4216
        // Predicated region
        $region77: #{tpu_custom_call.1} parent=63 // pred_check
          %p4218 = pneg %p294
        $region78: #{tpu_custom_call.1} parent=63 // pred_check_branch
          %4220 = sbr.rel (%p4218) target = $region80
        $region79: #{tpu_custom_call.1} parent=63 // pred_region
          %s4222 = ssub.s32 2048, 2048
          %4223 = vsyncadd %s4194, %s4222
          %s4224 = smul.addr %s40, 16
          %s4225 = smul.addr %s4224, 128
          %s4226 = scalar_lea.hbm %s11, %s4225
          %s4227 = sshll.u32 %s4197, 4
          %s4228 = int_to_ptr.vmem [resolvable:$true] %s4227
          %4233 = dma.vmem_to_hbm [thread:$0]  %s4228, 2048, %s4226, %s4194, 1024, 1024, 64
        $region80: #{tpu_custom_call.1} parent=63 // pred_fallthru
          _
        // Predicated region
        $region81: #{tpu_custom_call.1} parent=63 // pred_check
          %p4234 = pneg %p320
        $region82: #{tpu_custom_call.1} parent=63 // pred_check_branch
          %4236 = sbr.rel (%p4234) target = $region84
        $region83: #{tpu_custom_call.1} parent=63 // pred_region
          %s4238 = ssub.s32 2048, 2048
          %4239 = vsyncadd %s4199, %s4238
          %s4240 = smul.addr %s40, 16
          %s4241 = smul.addr %s4240, 128
          %s4242 = scalar_lea.hbm %s12, %s4241
          %s4243 = sshll.u32 %s4202, 4
          %s4244 = int_to_ptr.vmem [resolvable:$true] %s4243
          %4249 = dma.vmem_to_hbm [thread:$0]  %s4244, 2048, %s4242, %s4199, 1024, 1024, 64
        $region84: #{tpu_custom_call.1} parent=63 // pred_fallthru
          _
        // Predicated region
        $region85: #{tpu_custom_call.1} parent=63 // pred_check
          %p4250 = pneg %p346
        $region86: #{tpu_custom_call.1} parent=63 // pred_check_branch
          %4252 = sbr.rel (%p4250) target = $region88
        $region87: #{tpu_custom_call.1} parent=63 // pred_region
          %s4254 = ssub.s32 1024, 1024
          %4255 = vsyncadd %s4204, %s4254
          %s4256 = smul.addr %s40, 8
          %s4257 = smul.addr %s4256, 128
          %s4258 = scalar_lea.hbm %s13, %s4257
          %s4260 = sshll.u32 %s4207, 4
          %s4261 = int_to_ptr.vmem [resolvable:$true] %s4260
          %4263 = dma.vmem_to_hbm [thread:$0]  %s4261, 1024, %s4258, %s4204
        $region88: #{tpu_custom_call.1} parent=63 // pred_fallthru
          _
        // Predicated region
        $region89: #{tpu_custom_call.1} parent=63 // pred_check
          %p4264 = pneg %p372
        $region90: #{tpu_custom_call.1} parent=63 // pred_check_branch
          %4266 = sbr.rel (%p4264) target = $region92
        $region91: #{tpu_custom_call.1} parent=63 // pred_region
          %s4268 = ssub.s32 1024, 1024
          %4269 = vsyncadd %s4209, %s4268
          %s4270 = smul.addr %s40, 8
          %s4271 = smul.addr %s4270, 128
          %s4272 = scalar_lea.hbm %s14, %s4271
          %s4274 = sshll.u32 %s4212, 4
          %s4275 = int_to_ptr.vmem [resolvable:$true] %s4274
          %4277 = dma.vmem_to_hbm [thread:$0]  %s4275, 1024, %s4272, %s4209
        $region92: #{tpu_custom_call.1} parent=63 // pred_fallthru
          _
        // Predicated region
        $region93: #{tpu_custom_call.1} parent=63 // pred_check
          %p4278 = pneg %p398
        $region94: #{tpu_custom_call.1} parent=63 // pred_check_branch
          %4280 = sbr.rel (%p4278) target = $region96
        $region95: #{tpu_custom_call.1} parent=63 // pred_region
          %s4282 = ssub.s32 1024, 1024
          %4283 = vsyncadd %s4214, %s4282
          %s4284 = smul.addr %s40, 8
          %s4285 = smul.addr %s4284, 128
          %s4286 = scalar_lea.hbm %s15, %s4285
          %s4288 = sshll.u32 %s4217, 4
          %s4289 = int_to_ptr.vmem [resolvable:$true] %s4288
          %4291 = dma.vmem_to_hbm [thread:$0]  %s4289, 1024, %s4286, %s4214
        $region96: #{tpu_custom_call.1} parent=63 // pred_fallthru
          _
      $region64: #{tpu_custom_call.1} parent=5 // pred_fallthru
        _
      %p4292 = scmp.le.s32.totalorder 2, %s35
      // Predicated region
      $region97: #{tpu_custom_call.1} parent=5 // pred_check
        %p4293 = pneg %p4292
      $region98: #{tpu_custom_call.1} parent=5 // pred_check_branch
        %4295 = sbr.rel (%p4293) target = $region100
      $region99: #{tpu_custom_call.1} parent=5 // pred_region
        %s4296 = ssub.s32 %s35, 2
        // Predicated region
        $region101: #{tpu_custom_call.1} parent=99 // pred_check
          %p4297 = pneg %p300
        $region102: #{tpu_custom_call.1} parent=99 // pred_check_branch
          %4299 = sbr.rel (%p4297) target = $region104
        $region103: #{tpu_custom_call.1} parent=99 // pred_region
          %s4300 = sand.u32 %s285, 1
          %s4301 = scalar_lea.sflag [#allocation6], %s4300
          %s4302 = sand.u32 %s285, 1
          %s4303 = smul.addr %s4302, 128
          %s4304 = scalar_lea.vmem [#allocation10], %s4303
          %4305 = dma.done %s4301, 2048
        $region104: #{tpu_custom_call.1} parent=99 // pred_fallthru
          _
        // Predicated region
        $region105: #{tpu_custom_call.1} parent=99 // pred_check
          %p4306 = pneg %p326
        $region106: #{tpu_custom_call.1} parent=99 // pred_check_branch
          %4308 = sbr.rel (%p4306) target = $region108
        $region107: #{tpu_custom_call.1} parent=99 // pred_region
          %s4309 = sand.u32 %s41, 1
          %s4310 = scalar_lea.sflag [#allocation12], %s4309
          %s4311 = sand.u32 %s311, 1
          %s4312 = smul.addr %s4311, 128
          %s4313 = scalar_lea.vmem [#allocation11], %s4312
          %4314 = dma.done %s4310, 2048
        $region108: #{tpu_custom_call.1} parent=99 // pred_fallthru
          _
        // Predicated region
        $region109: #{tpu_custom_call.1} parent=99 // pred_check
          %p4315 = pneg %p352
        $region110: #{tpu_custom_call.1} parent=99 // pred_check_branch
          %4317 = sbr.rel (%p4315) target = $region112
        $region111: #{tpu_custom_call.1} parent=99 // pred_region
          %s4318 = sand.u32 %s41, 1
          %s4319 = scalar_lea.sflag [#allocation12], %s4318
          %s4320 = sand.u32 %s337, 1
          %s4321 = smul.addr %s4320, 64
          %s4322 = scalar_lea.vmem [#allocation13], %s4321
          %4323 = dma.done %s4319, 1024
        $region112: #{tpu_custom_call.1} parent=99 // pred_fallthru
          _
        // Predicated region
        $region113: #{tpu_custom_call.1} parent=99 // pred_check
          %p4324 = pneg %p378
        $region114: #{tpu_custom_call.1} parent=99 // pred_check_branch
          %4326 = sbr.rel (%p4324) target = $region116
        $region115: #{tpu_custom_call.1} parent=99 // pred_region
          %s4327 = sand.u32 %s41, 1
          %s4328 = scalar_lea.sflag [#allocation15], %s4327
          %s4329 = sand.u32 %s363, 1
          %s4330 = smul.addr %s4329, 64
          %s4331 = scalar_lea.vmem [#allocation14], %s4330
          %4332 = dma.done %s4328, 1024
        $region116: #{tpu_custom_call.1} parent=99 // pred_fallthru
          _
        // Predicated region
        $region117: #{tpu_custom_call.1} parent=99 // pred_check
          %p4333 = pneg %p404
        $region118: #{tpu_custom_call.1} parent=99 // pred_check_branch
          %4335 = sbr.rel (%p4333) target = $region120
        $region119: #{tpu_custom_call.1} parent=99 // pred_region
          %s4336 = sand.u32 %s41, 1
          %s4337 = scalar_lea.sflag [#allocation15], %s4336
          %s4338 = sand.u32 %s389, 1
          %s4339 = smul.addr %s4338, 64
          %s4340 = scalar_lea.vmem [#allocation16], %s4339
          %4341 = dma.done %s4337, 1024
        $region120: #{tpu_custom_call.1} parent=99 // pred_fallthru
          _
      $region100: #{tpu_custom_call.1} parent=5 // pred_fallthru
        _
    $region6: #{tpu_custom_call.1} parent=1 // loop_footer
      %s39 = sadd.s32 1, %s35
    $region7: #{tpu_custom_call.1} parent=1 // loop_footer_branch
      %34 = sbr.rel target = $region3
    $region8: #{tpu_custom_call.1} parent=1 // loop_exit
      _
    %4342 = vsyncpa [#allocation5], 1
    %s4343 = scalar_lea.sflag [#allocation5], 1
    %4344 = vsyncpa %s4343, 1
    %4345 = vsyncpa [#allocation8], 1
    %4346 = vsyncpa [#allocation6], 1
    %s4347 = scalar_lea.sflag [#allocation6], 1
    %4348 = vsyncpa %s4347, 1
    %4349 = vsyncpa [#allocation12], 1
    %s4350 = scalar_lea.sflag [#allocation12], 1
    %4351 = vsyncpa %s4350, 1
    %4352 = vsyncpa [#allocation15], 1
    %s4353 = scalar_lea.sflag [#allocation15], 1
    %4354 = vsyncpa %s4353, 1

</llo_original>
